<compile_context>
chip_gen: v7x
topology: tpu7x:2x2x1
jax: 0.10.0
libtpu: 0.0.40
codegen_flags: <defaults>
</compile_context>

<pallas_src>
import jax
import jax.numpy as jnp
from jax.experimental import pallas as pl
from jax.experimental.pallas import tpu as pltpu
import numpy as np

# ---- problem sizes --------------------------------------------------------
B = 256        # batch (fills the MXU M dimension; see header comment)
V = 32         # embedding vocab size
E = 16         # embedding dim
L = 8          # number of visit-category indices per example
NN = 10        # numeric ("n_feature") width
WIDE = 12      # wide_input_size
H1, H2, H3 = 256, 128, 32
EPS = 1e-5


# ============================ Pallas kernel =================================
def wdnet_kernel(c_ref, n_ref, visit_ref, target_ref,
                 wab_ref, w1c_ref, w2_ref, w3_ref,
                 bn1_ref, bn2_ref, bn3_ref, tail_ref,
                 out_ref):
    f32 = jnp.float32
    bf16 = jnp.bfloat16

    ones_row = jnp.ones((1, B), f32)          # for MXU-based batch reductions
    inv_b = 1.0 / B

    def bn_train(h, bn_slab):
        # BatchNorm1d, training mode (batch mean, biased variance).
        # Batch reductions run on the MXU (centered two-pass form -> stable).
        gamma, beta = bn_slab[0:1, :], bn_slab[1:2, :]
        mean = jnp.dot(ones_row, h, preferred_element_type=f32) * inv_b      # [1, H]
        centered = h - mean
        var = jnp.dot(ones_row, centered * centered,
                      preferred_element_type=f32) * inv_b                    # [1, H]
        return centered * jax.lax.rsqrt(var + EPS) * gamma + beta

    # ---- fused embedding bag + target lookup as one [B, 2V] one-hot/count ----
    # lanes [0, V): counts of visit indices;  lanes [V, 2V): target one-hot.
    lane2 = jax.lax.broadcasted_iota(jnp.int32, (B, 2 * V), 1)
    oh = jnp.zeros((B, 2 * V), f32)
    for l in range(L):                                   # static unroll, L small
        oh = oh + (lane2 == visit_ref[:, l:l + 1]).astype(f32)
    oh = oh + (lane2 == (target_ref[:, 0:1] + V)).astype(f32)

    # ---- deep_net -----------------------------------------------------------
    # Layer 1: one-hot/counts @ (emb@W) fused weight + numeric features.
    # b1/b2/b3 are omitted: they cancel exactly under training-mode BN.
    h = (jnp.dot(oh.astype(bf16), wab_ref[...], preferred_element_type=f32)
         + jnp.dot(n_ref[...].astype(bf16), w1c_ref[...], preferred_element_type=f32))
    h = jnp.maximum(bn_train(h, bn1_ref[...]), 0.0)                # BN + ReLU

    h = jnp.dot(h.astype(bf16), w2_ref[...], preferred_element_type=f32)
    h = bn_train(h, bn2_ref[...])                                  # BN (no ReLU)

    h = jnp.dot(h.astype(bf16), w3_ref[...], preferred_element_type=f32)
    h = jnp.maximum(bn_train(h, bn3_ref[...]), 0.0)                # BN + ReLU

    # ---- packed tail: [w4^T ; ww^T ; scalars(b4, bw, wf0, wf1, bf)] ----------
    tail = tail_ref[...]                                           # [3, 128]
    w4_row = tail[0:1, 0:H3]                                       # [1, 32]
    ww_row = tail[1:2, 0:WIDE]                                     # [1, 12]
    b4, bw = tail[2:3, 0:1], tail[2:3, 1:2]
    wf0, wf1, bf = tail[2:3, 2:3], tail[2:3, 3:4], tail[2:3, 4:5]

    deep_out = jnp.sum(h * w4_row, axis=-1, keepdims=True) + b4               # [B, 1]
    wide_out = jax.nn.sigmoid(
        jnp.sum(c_ref[...] * ww_row, axis=-1, keepdims=True) + bw)            # [B, 1]

    # final Linear(2, 1) on cat(deep, wide)
    out_ref[...] = deep_out * wf0 + wide_out * wf1 + bf


# ============================ host wrapper ==================================
def pack_params(p):
    """One-time host-side packing of PyTorch-style params into kernel slabs."""
    bf16 = jnp.bfloat16
    # fuse embedding table into the first deep layer: [emb@w1a ; emb@w1b]
    wab = jnp.concatenate([p["emb"] @ p["w1a"], p["emb"] @ p["w1b"]], axis=0)

    tail = jnp.zeros((3, 128), jnp.float32)
    tail = tail.at[0, :H3].set(p["w4"][:, 0])
    tail = tail.at[1, :WIDE].set(p["ww"][:, 0])
    tail = tail.at[2, 0].set(p["b4"][0, 0])
    tail = tail.at[2, 1].set(p["bw"][0, 0])
    tail = tail.at[2, 2].set(p["wf"][0, 0])
    tail = tail.at[2, 3].set(p["wf"][1, 0])
    tail = tail.at[2, 4].set(p["bf"][0, 0])

    return {
        "wab": wab.astype(bf16),                # [2V, H1]
        "w1c": p["w1c"].astype(bf16),           # [NN, H1]
        "w2": p["w2"].astype(bf16),             # [H1, H2]
        "w3": p["w3"].astype(bf16),             # [H2, H3]
        "bn1": jnp.concatenate([p["g1"], p["be1"]], axis=0),   # [2, H1]
        "bn2": jnp.concatenate([p["g2"], p["be2"]], axis=0),   # [2, H2]
        "bn3": jnp.concatenate([p["g3"], p["be3"]], axis=0),   # [2, H3]
        "tail": tail,                                          # [3, 128]
    }


def wdnet_forward(c_feat, n_feat, visit_idx, target_idx, kp):
    args = (c_feat, n_feat, visit_idx, target_idx,
            kp["wab"], kp["w1c"], kp["w2"], kp["w3"],
            kp["bn1"], kp["bn2"], kp["bn3"], kp["tail"])

    vmem = pl.BlockSpec(memory_space=pltpu.MemorySpace.VMEM)

    matmul_flops = 2 * B * (2 * V * H1 + NN * H1 + H1 * H2 + H2 * H3)
    bn_flops = 4 * B * (H1 + H2 + H3)                 # MXU mean/var reductions
    bytes_accessed = sum(int(a.size) * a.dtype.itemsize for a in args) + B * 4

    out = pl.pallas_call(
        wdnet_kernel,
        out_shape=jax.ShapeDtypeStruct((B, 1), jnp.float32),
        in_specs=[vmem] * len(args),
        out_specs=vmem,
        cost_estimate=pl.CostEstimate(
            flops=int(matmul_flops + bn_flops),
            transcendentals=int(B),               # sigmoid exp per row
            bytes_accessed=int(bytes_accessed)),
    )(*args)
    return out[:, 0]                              # .squeeze(1) -> [B]


# ======================= reference (pure JAX, f32) ==========================
def _bn_ref(h, gamma, beta):
    mean = jnp.mean(h, axis=0, keepdims=True)
    var = jnp.mean((h - mean) ** 2, axis=0, keepdims=True)
    return (h - mean) * jax.lax.rsqrt(var + EPS) * gamma + beta


def wdnet_reference(c_feat, n_feat, visit_idx, target_idx, p):
    cat_emb = p["emb"][visit_idx].sum(axis=1)
    tgt_emb = p["emb"][target_idx[:, 0]]
    h = cat_emb @ p["w1a"] + tgt_emb @ p["w1b"] + n_feat @ p["w1c"] + p["b1"]
    h = jnp.maximum(_bn_ref(h, p["g1"], p["be1"]), 0.0)
    h = _bn_ref(h @ p["w2"] + p["b2"], p["g2"], p["be2"])
    h = jnp.maximum(_bn_ref(h @ p["w3"] + p["b3"], p["g3"], p["be3"]), 0.0)
    deep_out = h @ p["w4"] + p["b4"]
    wide_out = jax.nn.sigmoid(c_feat @ p["ww"] + p["bw"])
    out = jnp.concatenate([deep_out, wide_out], axis=1)
    return (out @ p["wf"] + p["bf"])[:, 0]


# ------------------------- deterministic setup ------------------------------
def make_params(key):
    ks = jax.random.split(key, 24)
    n = lambda k, s, sc=0.1: sc * jax.random.normal(k, s, jnp.float32)
    p = {}
    p["emb"] = n(ks[0], (V, E), 1.0)
    # deep_net Linear(DEEP_IN, 256) split into [E | E | NN] chunks
    p["w1a"] = n(ks[1], (E, H1));  p["w1b"] = n(ks[2], (E, H1))
    p["w1c"] = n(ks[3], (NN, H1)); p["b1"] = n(ks[4], (1, H1))
    p["g1"] = 1.0 + n(ks[5], (1, H1)); p["be1"] = n(ks[6], (1, H1))
    p["w2"] = n(ks[7], (H1, H2));  p["b2"] = n(ks[8], (1, H2))
    p["g2"] = 1.0 + n(ks[9], (1, H2)); p["be2"] = n(ks[10], (1, H2))
    p["w3"] = n(ks[11], (H2, H3)); p["b3"] = n(ks[12], (1, H3))
    p["g3"] = 1.0 + n(ks[13], (1, H3)); p["be3"] = n(ks[14], (1, H3))
    p["w4"] = n(ks[15], (H3, 1));  p["b4"] = n(ks[16], (1, 1))
    # wide_net Linear(WIDE, 1)
    p["ww"] = n(ks[17], (WIDE, 1)); p["bw"] = n(ks[18], (1, 1))
    # final_net Linear(2, 1)
    p["wf"] = n(ks[19], (2, 1));    p["bf"] = n(ks[20], (1, 1))
    return p


if __name__ == "__main__":
    key = jax.random.PRNGKey(0)
    k_in, k_p = jax.random.split(key)
    ki = jax.random.split(k_in, 4)

    c_feat = jax.random.normal(ki[0], (B, WIDE), jnp.float32)
    n_feat = jax.random.normal(ki[1], (B, NN), jnp.float32)
    visit_idx = jax.random.randint(ki[2], (B, L), 0, V, jnp.int32)
    target_idx = jax.random.randint(ki[3], (B, 1), 0, V, jnp.int32)
    params = make_params(k_p)
    kparams = pack_params(params)

    out = wdnet_forward(c_feat, n_feat, visit_idx, target_idx, kparams)
    out = jax.block_until_ready(out)

    # f32 reference (includes b1/b2/b3, unfused embedding path); kernel uses
    # bf16 weight storage + fused emb@W, hence the mixed-precision tolerance.
    ref = wdnet_reference(c_feat, n_feat, visit_idx, target_idx, params)
    np.testing.assert_allclose(np.asarray(out), np.asarray(ref), rtol=2e-2, atol=2e-2)
    assert out.shape == (B,)
    print("KERNEL_OK")
</pallas_src>

<mosaic_0001>
module attributes {stable_mosaic.version = 11 : i64} {
  func.func @wdnet_kernel(%arg0: memref<256x12xf32, #tpu.memory_space<vmem>>, %arg1: memref<256x10xf32, #tpu.memory_space<vmem>>, %arg2: memref<256x8xi32, #tpu.memory_space<vmem>>, %arg3: memref<256x1xi32, #tpu.memory_space<vmem>>, %arg4: memref<64x256xbf16, #tpu.memory_space<vmem>>, %arg5: memref<10x256xbf16, #tpu.memory_space<vmem>>, %arg6: memref<256x128xbf16, #tpu.memory_space<vmem>>, %arg7: memref<128x32xbf16, #tpu.memory_space<vmem>>, %arg8: memref<2x256xf32, #tpu.memory_space<vmem>>, %arg9: memref<2x128xf32, #tpu.memory_space<vmem>>, %arg10: memref<2x32xf32, #tpu.memory_space<vmem>>, %arg11: memref<3x128xf32, #tpu.memory_space<vmem>>, %arg12: memref<256x1xf32, #tpu.memory_space<vmem>>) attributes {dimension_semantics = [], scalar_prefetch = 0 : i64, scratch_operands = 0 : i64, tpu.core_type = #tpu.core_type<tc>} {
    %cst = arith.constant 1.000000e+00 : f32
    %0 = vector.broadcast %cst : f32 to vector<1x256xf32>
    %1 = tpu.iota {dimensions = array<i32: 1>} : vector<256x64xi32>
    %cst_0 = arith.constant 0.000000e+00 : f32
    %2 = vector.broadcast %cst_0 : f32 to vector<256x64xf32>
    %c0 = arith.constant 0 : index
    %c0_1 = arith.constant 0 : index
    %3 = vector.load %arg2[%c0, %c0_1] : memref<256x8xi32, #tpu.memory_space<vmem>>, vector<256x1xi32>
    %4 = vector.broadcast %3 : vector<256x1xi32> to vector<256x64xi32>
    %5 = arith.cmpi eq, %1, %4 : vector<256x64xi32>
    %6 = arith.extui %5 : vector<256x64xi1> to vector<256x64xi32>
    %7 = arith.sitofp %6 : vector<256x64xi32> to vector<256x64xf32>
    %8 = arith.addf %2, %7 : vector<256x64xf32>
    %c0_2 = arith.constant 0 : index
    %c1 = arith.constant 1 : index
    %9 = vector.load %arg2[%c0_2, %c1] : memref<256x8xi32, #tpu.memory_space<vmem>>, vector<256x1xi32>
    %10 = vector.broadcast %9 : vector<256x1xi32> to vector<256x64xi32>
    %11 = arith.cmpi eq, %1, %10 : vector<256x64xi32>
    %12 = arith.extui %11 : vector<256x64xi1> to vector<256x64xi32>
    %13 = arith.sitofp %12 : vector<256x64xi32> to vector<256x64xf32>
    %14 = arith.addf %8, %13 : vector<256x64xf32>
    %c0_3 = arith.constant 0 : index
    %c2 = arith.constant 2 : index
    %15 = vector.load %arg2[%c0_3, %c2] : memref<256x8xi32, #tpu.memory_space<vmem>>, vector<256x1xi32>
    %16 = vector.broadcast %15 : vector<256x1xi32> to vector<256x64xi32>
    %17 = arith.cmpi eq, %1, %16 : vector<256x64xi32>
    %18 = arith.extui %17 : vector<256x64xi1> to vector<256x64xi32>
    %19 = arith.sitofp %18 : vector<256x64xi32> to vector<256x64xf32>
    %20 = arith.addf %14, %19 : vector<256x64xf32>
    %c0_4 = arith.constant 0 : index
    %c3 = arith.constant 3 : index
    %21 = vector.load %arg2[%c0_4, %c3] : memref<256x8xi32, #tpu.memory_space<vmem>>, vector<256x1xi32>
    %22 = vector.broadcast %21 : vector<256x1xi32> to vector<256x64xi32>
    %23 = arith.cmpi eq, %1, %22 : vector<256x64xi32>
    %24 = arith.extui %23 : vector<256x64xi1> to vector<256x64xi32>
    %25 = arith.sitofp %24 : vector<256x64xi32> to vector<256x64xf32>
    %26 = arith.addf %20, %25 : vector<256x64xf32>
    %c0_5 = arith.constant 0 : index
    %c4 = arith.constant 4 : index
    %27 = vector.load %arg2[%c0_5, %c4] : memref<256x8xi32, #tpu.memory_space<vmem>>, vector<256x1xi32>
    %28 = vector.broadcast %27 : vector<256x1xi32> to vector<256x64xi32>
    %29 = arith.cmpi eq, %1, %28 : vector<256x64xi32>
    %30 = arith.extui %29 : vector<256x64xi1> to vector<256x64xi32>
    %31 = arith.sitofp %30 : vector<256x64xi32> to vector<256x64xf32>
    %32 = arith.addf %26, %31 : vector<256x64xf32>
    %c0_6 = arith.constant 0 : index
    %c5 = arith.constant 5 : index
    %33 = vector.load %arg2[%c0_6, %c5] : memref<256x8xi32, #tpu.memory_space<vmem>>, vector<256x1xi32>
    %34 = vector.broadcast %33 : vector<256x1xi32> to vector<256x64xi32>
    %35 = arith.cmpi eq, %1, %34 : vector<256x64xi32>
    %36 = arith.extui %35 : vector<256x64xi1> to vector<256x64xi32>
    %37 = arith.sitofp %36 : vector<256x64xi32> to vector<256x64xf32>
    %38 = arith.addf %32, %37 : vector<256x64xf32>
    %c0_7 = arith.constant 0 : index
    %c6 = arith.constant 6 : index
    %39 = vector.load %arg2[%c0_7, %c6] : memref<256x8xi32, #tpu.memory_space<vmem>>, vector<256x1xi32>
    %40 = vector.broadcast %39 : vector<256x1xi32> to vector<256x64xi32>
    %41 = arith.cmpi eq, %1, %40 : vector<256x64xi32>
    %42 = arith.extui %41 : vector<256x64xi1> to vector<256x64xi32>
    %43 = arith.sitofp %42 : vector<256x64xi32> to vector<256x64xf32>
    %44 = arith.addf %38, %43 : vector<256x64xf32>
    %c0_8 = arith.constant 0 : index
    %c7 = arith.constant 7 : index
    %45 = vector.load %arg2[%c0_8, %c7] : memref<256x8xi32, #tpu.memory_space<vmem>>, vector<256x1xi32>
    %46 = vector.broadcast %45 : vector<256x1xi32> to vector<256x64xi32>
    %47 = arith.cmpi eq, %1, %46 : vector<256x64xi32>
    %48 = arith.extui %47 : vector<256x64xi1> to vector<256x64xi32>
    %49 = arith.sitofp %48 : vector<256x64xi32> to vector<256x64xf32>
    %50 = arith.addf %44, %49 : vector<256x64xf32>
    %c0_9 = arith.constant 0 : index
    %c0_10 = arith.constant 0 : index
    %51 = vector.load %arg3[%c0_9, %c0_10] : memref<256x1xi32, #tpu.memory_space<vmem>>, vector<256x1xi32>
    %c32_i32 = arith.constant 32 : i32
    %52 = vector.broadcast %c32_i32 : i32 to vector<256x1xi32>
    %53 = arith.addi %51, %52 : vector<256x1xi32>
    %54 = vector.broadcast %53 : vector<256x1xi32> to vector<256x64xi32>
    %55 = arith.cmpi eq, %1, %54 : vector<256x64xi32>
    %56 = arith.extui %55 : vector<256x64xi1> to vector<256x64xi32>
    %57 = arith.sitofp %56 : vector<256x64xi32> to vector<256x64xf32>
    %58 = arith.addf %50, %57 : vector<256x64xf32>
    %59 = arith.truncf %58 : vector<256x64xf32> to vector<256x64xbf16>
    %c0_11 = arith.constant 0 : index
    %c0_12 = arith.constant 0 : index
    %60 = vector.load %arg4[%c0_11, %c0_12] : memref<64x256xbf16, #tpu.memory_space<vmem>>, vector<64x256xbf16>
    %cst_13 = arith.constant dense<0.000000e+00> : vector<256x256xf32>
    %61 = tpu.matmul %59, %60, %cst_13 {dimension_numbers = #tpu.dot_dimension_numbers<[1], [0], [0], [1], [0, 0, 1, 1], [], []>} : vector<256x64xbf16>, vector<64x256xbf16>, vector<256x256xf32> -> vector<256x256xf32>
    %c0_14 = arith.constant 0 : index
    %c0_15 = arith.constant 0 : index
    %62 = vector.load %arg1[%c0_14, %c0_15] : memref<256x10xf32, #tpu.memory_space<vmem>>, vector<256x10xf32>
    %63 = arith.truncf %62 : vector<256x10xf32> to vector<256x10xbf16>
    %c0_16 = arith.constant 0 : index
    %c0_17 = arith.constant 0 : index
    %64 = vector.load %arg5[%c0_16, %c0_17] : memref<10x256xbf16, #tpu.memory_space<vmem>>, vector<10x256xbf16>
    %cst_18 = arith.constant dense<0.000000e+00> : vector<256x256xf32>
    %65 = tpu.matmul %63, %64, %cst_18 {dimension_numbers = #tpu.dot_dimension_numbers<[1], [0], [0], [1], [0, 0, 1, 1], [], []>} : vector<256x10xbf16>, vector<10x256xbf16>, vector<256x256xf32> -> vector<256x256xf32>
    %66 = arith.addf %61, %65 : vector<256x256xf32>
    %c0_19 = arith.constant 0 : index
    %c0_20 = arith.constant 0 : index
    %67 = vector.load %arg8[%c0_19, %c0_20] : memref<2x256xf32, #tpu.memory_space<vmem>>, vector<2x256xf32>
    %68 = vector.extract_strided_slice %67 {offsets = [0, 0], sizes = [1, 256], strides = [1, 1]} : vector<2x256xf32> to vector<1x256xf32>
    %69 = vector.extract_strided_slice %67 {offsets = [1, 0], sizes = [1, 256], strides = [1, 1]} : vector<2x256xf32> to vector<1x256xf32>
    %cst_21 = arith.constant dense<0.000000e+00> : vector<1x256xf32>
    %70 = tpu.matmul %0, %66, %cst_21 {dimension_numbers = #tpu.dot_dimension_numbers<[1], [0], [0], [1], [0, 0, 1, 1], [], []>} : vector<1x256xf32>, vector<256x256xf32>, vector<1x256xf32> -> vector<1x256xf32>
    %cst_22 = arith.constant 3.906250e-03 : f32
    %71 = vector.broadcast %cst_22 : f32 to vector<1x256xf32>
    %72 = arith.mulf %70, %71 : vector<1x256xf32>
    %73 = vector.broadcast %72 : vector<1x256xf32> to vector<256x256xf32>
    %74 = arith.subf %66, %73 : vector<256x256xf32>
    %75 = arith.mulf %74, %74 : vector<256x256xf32>
    %cst_23 = arith.constant dense<0.000000e+00> : vector<1x256xf32>
    %76 = tpu.matmul %0, %75, %cst_23 {dimension_numbers = #tpu.dot_dimension_numbers<[1], [0], [0], [1], [0, 0, 1, 1], [], []>} : vector<1x256xf32>, vector<256x256xf32>, vector<1x256xf32> -> vector<1x256xf32>
    %cst_24 = arith.constant 3.906250e-03 : f32
    %77 = vector.broadcast %cst_24 : f32 to vector<1x256xf32>
    %78 = arith.mulf %76, %77 : vector<1x256xf32>
    %cst_25 = arith.constant 9.99999974E-6 : f32
    %79 = vector.broadcast %cst_25 : f32 to vector<1x256xf32>
    %80 = arith.addf %78, %79 : vector<1x256xf32>
    %81 = math.rsqrt %80 : vector<1x256xf32>
    %82 = vector.broadcast %81 : vector<1x256xf32> to vector<256x256xf32>
    %83 = arith.mulf %74, %82 : vector<256x256xf32>
    %84 = vector.broadcast %68 : vector<1x256xf32> to vector<256x256xf32>
    %85 = arith.mulf %83, %84 : vector<256x256xf32>
    %86 = vector.broadcast %69 : vector<1x256xf32> to vector<256x256xf32>
    %87 = arith.addf %85, %86 : vector<256x256xf32>
    %cst_26 = arith.constant 0.000000e+00 : f32
    %88 = vector.broadcast %cst_26 : f32 to vector<256x256xf32>
    %89 = arith.maximumf %87, %88 : vector<256x256xf32>
    %90 = arith.truncf %89 : vector<256x256xf32> to vector<256x256xbf16>
    %c0_27 = arith.constant 0 : index
    %c0_28 = arith.constant 0 : index
    %91 = vector.load %arg6[%c0_27, %c0_28] : memref<256x128xbf16, #tpu.memory_space<vmem>>, vector<256x128xbf16>
    %cst_29 = arith.constant dense<0.000000e+00> : vector<256x128xf32>
    %92 = tpu.matmul %90, %91, %cst_29 {dimension_numbers = #tpu.dot_dimension_numbers<[1], [0], [0], [1], [0, 0, 1, 1], [], []>} : vector<256x256xbf16>, vector<256x128xbf16>, vector<256x128xf32> -> vector<256x128xf32>
    %c0_30 = arith.constant 0 : index
    %c0_31 = arith.constant 0 : index
    %93 = vector.load %arg9[%c0_30, %c0_31] : memref<2x128xf32, #tpu.memory_space<vmem>>, vector<2x128xf32>
    %94 = vector.extract_strided_slice %93 {offsets = [0, 0], sizes = [1, 128], strides = [1, 1]} : vector<2x128xf32> to vector<1x128xf32>
    %95 = vector.extract_strided_slice %93 {offsets = [1, 0], sizes = [1, 128], strides = [1, 1]} : vector<2x128xf32> to vector<1x128xf32>
    %cst_32 = arith.constant dense<0.000000e+00> : vector<1x128xf32>
    %96 = tpu.matmul %0, %92, %cst_32 {dimension_numbers = #tpu.dot_dimension_numbers<[1], [0], [0], [1], [0, 0, 1, 1], [], []>} : vector<1x256xf32>, vector<256x128xf32>, vector<1x128xf32> -> vector<1x128xf32>
    %cst_33 = arith.constant 3.906250e-03 : f32
    %97 = vector.broadcast %cst_33 : f32 to vector<1x128xf32>
    %98 = arith.mulf %96, %97 : vector<1x128xf32>
    %99 = vector.broadcast %98 : vector<1x128xf32> to vector<256x128xf32>
    %100 = arith.subf %92, %99 : vector<256x128xf32>
    %101 = arith.mulf %100, %100 : vector<256x128xf32>
    %cst_34 = arith.constant dense<0.000000e+00> : vector<1x128xf32>
    %102 = tpu.matmul %0, %101, %cst_34 {dimension_numbers = #tpu.dot_dimension_numbers<[1], [0], [0], [1], [0, 0, 1, 1], [], []>} : vector<1x256xf32>, vector<256x128xf32>, vector<1x128xf32> -> vector<1x128xf32>
    %cst_35 = arith.constant 3.906250e-03 : f32
    %103 = vector.broadcast %cst_35 : f32 to vector<1x128xf32>
    %104 = arith.mulf %102, %103 : vector<1x128xf32>
    %cst_36 = arith.constant 9.99999974E-6 : f32
    %105 = vector.broadcast %cst_36 : f32 to vector<1x128xf32>
    %106 = arith.addf %104, %105 : vector<1x128xf32>
    %107 = math.rsqrt %106 : vector<1x128xf32>
    %108 = vector.broadcast %107 : vector<1x128xf32> to vector<256x128xf32>
    %109 = arith.mulf %100, %108 : vector<256x128xf32>
    %110 = vector.broadcast %94 : vector<1x128xf32> to vector<256x128xf32>
    %111 = arith.mulf %109, %110 : vector<256x128xf32>
    %112 = vector.broadcast %95 : vector<1x128xf32> to vector<256x128xf32>
    %113 = arith.addf %111, %112 : vector<256x128xf32>
    %114 = arith.truncf %113 : vector<256x128xf32> to vector<256x128xbf16>
    %c0_37 = arith.constant 0 : index
    %c0_38 = arith.constant 0 : index
    %115 = vector.load %arg7[%c0_37, %c0_38] : memref<128x32xbf16, #tpu.memory_space<vmem>>, vector<128x32xbf16>
    %cst_39 = arith.constant dense<0.000000e+00> : vector<256x32xf32>
    %116 = tpu.matmul %114, %115, %cst_39 {dimension_numbers = #tpu.dot_dimension_numbers<[1], [0], [0], [1], [0, 0, 1, 1], [], []>} : vector<256x128xbf16>, vector<128x32xbf16>, vector<256x32xf32> -> vector<256x32xf32>
    %c0_40 = arith.constant 0 : index
    %c0_41 = arith.constant 0 : index
    %117 = vector.load %arg10[%c0_40, %c0_41] : memref<2x32xf32, #tpu.memory_space<vmem>>, vector<2x32xf32>
    %118 = vector.extract_strided_slice %117 {offsets = [0, 0], sizes = [1, 32], strides = [1, 1]} : vector<2x32xf32> to vector<1x32xf32>
    %119 = vector.extract_strided_slice %117 {offsets = [1, 0], sizes = [1, 32], strides = [1, 1]} : vector<2x32xf32> to vector<1x32xf32>
    %cst_42 = arith.constant dense<0.000000e+00> : vector<1x32xf32>
    %120 = tpu.matmul %0, %116, %cst_42 {dimension_numbers = #tpu.dot_dimension_numbers<[1], [0], [0], [1], [0, 0, 1, 1], [], []>} : vector<1x256xf32>, vector<256x32xf32>, vector<1x32xf32> -> vector<1x32xf32>
    %cst_43 = arith.constant 3.906250e-03 : f32
    %121 = vector.broadcast %cst_43 : f32 to vector<1x32xf32>
    %122 = arith.mulf %120, %121 : vector<1x32xf32>
    %123 = vector.broadcast %122 : vector<1x32xf32> to vector<256x32xf32>
    %124 = arith.subf %116, %123 : vector<256x32xf32>
    %125 = arith.mulf %124, %124 : vector<256x32xf32>
    %cst_44 = arith.constant dense<0.000000e+00> : vector<1x32xf32>
    %126 = tpu.matmul %0, %125, %cst_44 {dimension_numbers = #tpu.dot_dimension_numbers<[1], [0], [0], [1], [0, 0, 1, 1], [], []>} : vector<1x256xf32>, vector<256x32xf32>, vector<1x32xf32> -> vector<1x32xf32>
    %cst_45 = arith.constant 3.906250e-03 : f32
    %127 = vector.broadcast %cst_45 : f32 to vector<1x32xf32>
    %128 = arith.mulf %126, %127 : vector<1x32xf32>
    %cst_46 = arith.constant 9.99999974E-6 : f32
    %129 = vector.broadcast %cst_46 : f32 to vector<1x32xf32>
    %130 = arith.addf %128, %129 : vector<1x32xf32>
    %131 = math.rsqrt %130 : vector<1x32xf32>
    %132 = vector.broadcast %131 : vector<1x32xf32> to vector<256x32xf32>
    %133 = arith.mulf %124, %132 : vector<256x32xf32>
    %134 = vector.broadcast %118 : vector<1x32xf32> to vector<256x32xf32>
    %135 = arith.mulf %133, %134 : vector<256x32xf32>
    %136 = vector.broadcast %119 : vector<1x32xf32> to vector<256x32xf32>
    %137 = arith.addf %135, %136 : vector<256x32xf32>
    %cst_47 = arith.constant 0.000000e+00 : f32
    %138 = vector.broadcast %cst_47 : f32 to vector<256x32xf32>
    %139 = arith.maximumf %137, %138 : vector<256x32xf32>
    %c0_48 = arith.constant 0 : index
    %c0_49 = arith.constant 0 : index
    %140 = vector.load %arg11[%c0_48, %c0_49] : memref<3x128xf32, #tpu.memory_space<vmem>>, vector<3x128xf32>
    %141 = vector.extract_strided_slice %140 {offsets = [0, 0], sizes = [1, 32], strides = [1, 1]} : vector<3x128xf32> to vector<1x32xf32>
    %142 = vector.extract_strided_slice %140 {offsets = [1, 0], sizes = [1, 12], strides = [1, 1]} : vector<3x128xf32> to vector<1x12xf32>
    %143 = vector.extract_strided_slice %140 {offsets = [2, 0], sizes = [1, 1], strides = [1, 1]} : vector<3x128xf32> to vector<1x1xf32>
    %144 = vector.extract_strided_slice %140 {offsets = [2, 1], sizes = [1, 1], strides = [1, 1]} : vector<3x128xf32> to vector<1x1xf32>
    %145 = vector.extract_strided_slice %140 {offsets = [2, 2], sizes = [1, 1], strides = [1, 1]} : vector<3x128xf32> to vector<1x1xf32>
    %146 = vector.extract_strided_slice %140 {offsets = [2, 3], sizes = [1, 1], strides = [1, 1]} : vector<3x128xf32> to vector<1x1xf32>
    %147 = vector.extract_strided_slice %140 {offsets = [2, 4], sizes = [1, 1], strides = [1, 1]} : vector<3x128xf32> to vector<1x1xf32>
    %148 = vector.broadcast %141 : vector<1x32xf32> to vector<256x32xf32>
    %149 = arith.mulf %139, %148 : vector<256x32xf32>
    %cst_50 = arith.constant dense<0.000000e+00> : vector<256xf32>
    %150 = vector.multi_reduction <add>, %149, %cst_50 [1] : vector<256x32xf32> to vector<256xf32>
    %151 = vector.shape_cast %150 : vector<256xf32> to vector<256x1xf32>
    %152 = vector.broadcast %143 : vector<1x1xf32> to vector<256x1xf32>
    %153 = arith.addf %151, %152 : vector<256x1xf32>
    %c0_51 = arith.constant 0 : index
    %c0_52 = arith.constant 0 : index
    %154 = vector.load %arg0[%c0_51, %c0_52] : memref<256x12xf32, #tpu.memory_space<vmem>>, vector<256x12xf32>
    %155 = vector.broadcast %142 : vector<1x12xf32> to vector<256x12xf32>
    %156 = arith.mulf %154, %155 : vector<256x12xf32>
    %cst_53 = arith.constant dense<0.000000e+00> : vector<256xf32>
    %157 = vector.multi_reduction <add>, %156, %cst_53 [1] : vector<256x12xf32> to vector<256xf32>
    %158 = vector.shape_cast %157 : vector<256xf32> to vector<256x1xf32>
    %159 = vector.broadcast %144 : vector<1x1xf32> to vector<256x1xf32>
    %160 = arith.addf %158, %159 : vector<256x1xf32>
    %161 = arith.negf %160 : vector<256x1xf32>
    %162 = math.exp %161 : vector<256x1xf32>
    %cst_54 = arith.constant 1.000000e+00 : f32
    %163 = vector.broadcast %cst_54 : f32 to vector<256x1xf32>
    %164 = arith.addf %163, %162 : vector<256x1xf32>
    %165 = arith.divf %163, %164 : vector<256x1xf32>
    %166 = vector.broadcast %145 : vector<1x1xf32> to vector<256x1xf32>
    %167 = arith.mulf %153, %166 : vector<256x1xf32>
    %168 = vector.broadcast %146 : vector<1x1xf32> to vector<256x1xf32>
    %169 = arith.mulf %165, %168 : vector<256x1xf32>
    %170 = arith.addf %167, %169 : vector<256x1xf32>
    %171 = vector.broadcast %147 : vector<1x1xf32> to vector<256x1xf32>
    %172 = arith.addf %170, %171 : vector<256x1xf32>
    %c0_55 = arith.constant 0 : index
    %c0_56 = arith.constant 0 : index
    %173 = vector.load %arg12[%c0_55, %c0_56] : memref<256x1xf32, #tpu.memory_space<vmem>>, vector<256x1xf32>
    tpu.vector_store %arg12[%c0_55, %c0_56], %172 {strides = array<i32>} : memref<256x1xf32, #tpu.memory_space<vmem>>, vector<256x1xf32>,
    return
  }
}

</mosaic_0001>

<llo_original>
// kernel: tpu_custom_call.1
$region0: #{tpu_custom_call.1}
  #allocation0 [shape = 'u32[]', space=smem, size = 0x4, offset = 0x4, fixed_abs, tag = 'smem constant byte address 0x4 - core index']
  #allocation1 [shape = 'u32[144,128]{1,0:T(1,128)}', space=vmem, size = 0x12000, scoped, tag = 'internal scratch']
  %s0 = inlined_call_operand.vmem [shape: f32[256,12], index: 0, kind: input, shape index: {}]
  %s1 = inlined_call_operand.vmem [shape: f32[256,10], index: 1, kind: input, shape index: {}]
  %s2 = inlined_call_operand.vmem [shape: s32[256,8], index: 2, kind: input, shape index: {}]
  %s3 = inlined_call_operand.vmem [shape: s32[256,1], index: 3, kind: input, shape index: {}]
  %s4 = inlined_call_operand.vmem [shape: bf16[64,256], index: 4, kind: input, shape index: {}]
  %s5 = inlined_call_operand.vmem [shape: bf16[10,256], index: 5, kind: input, shape index: {}]
  %s6 = inlined_call_operand.vmem [shape: bf16[256,128], index: 6, kind: input, shape index: {}]
  %s7 = inlined_call_operand.vmem [shape: bf16[128,32], index: 7, kind: input, shape index: {}]
  %s8 = inlined_call_operand.vmem [shape: f32[2,256], index: 8, kind: input, shape index: {}]
  %s9 = inlined_call_operand.vmem [shape: f32[2,128], index: 9, kind: input, shape index: {}]
  %s10 = inlined_call_operand.vmem [shape: f32[2,32], index: 10, kind: input, shape index: {}]
  %s11 = inlined_call_operand.vmem [shape: f32[3,128], index: 11, kind: input, shape index: {}]
  %s12 = inlined_call_operand.vmem [shape: f32[256,1], index: 12, kind: output, shape index: {}]
  %s13 = sld [smem:[#allocation0]]
  $region58: #{tpu_custom_call.1} parent=0
    _
  %s15 = ssub.s32 1, %s13
  %s16 = scalar_select 0, %s15, %s13
  // Predicated region
  $region2: #{tpu_custom_call.1} parent=0 // pred_check
    _
  $region3: #{tpu_custom_call.1} parent=0 // pred_check_branch
    %18 = sbr.rel (0) target = $region5
  $region4: #{tpu_custom_call.1} parent=0 // pred_region
    _
  $region5: #{tpu_custom_call.1} parent=0 // pred_fallthru
    _
  // Predicated region
  $region6: #{tpu_custom_call.1} parent=0 // pred_check
    _
  $region7: #{tpu_custom_call.1} parent=0 // pred_check_branch
    %20 = sbr.rel (0) target = $region9
  $region8: #{tpu_custom_call.1} parent=0 // pred_region
    _
  $region9: #{tpu_custom_call.1} parent=0 // pred_fallthru
    _
  // Predicated region
  $region10: #{tpu_custom_call.1} parent=0 // pred_check
    _
  $region11: #{tpu_custom_call.1} parent=0 // pred_check_branch
    %22 = sbr.rel (0) target = $region13
  $region12: #{tpu_custom_call.1} parent=0 // pred_region
    _
  $region13: #{tpu_custom_call.1} parent=0 // pred_fallthru
    _
  // Predicated region
  $region14: #{tpu_custom_call.1} parent=0 // pred_check
    _
  $region15: #{tpu_custom_call.1} parent=0 // pred_check_branch
    %24 = sbr.rel (0) target = $region17
  $region16: #{tpu_custom_call.1} parent=0 // pred_region
    _
  $region17: #{tpu_custom_call.1} parent=0 // pred_fallthru
    _
  // Predicated region
  $region18: #{tpu_custom_call.1} parent=0 // pred_check
    _
  $region19: #{tpu_custom_call.1} parent=0 // pred_check_branch
    %26 = sbr.rel (0) target = $region21
  $region20: #{tpu_custom_call.1} parent=0 // pred_region
    _
  $region21: #{tpu_custom_call.1} parent=0 // pred_fallthru
    _
  // Predicated region
  $region22: #{tpu_custom_call.1} parent=0 // pred_check
    _
  $region23: #{tpu_custom_call.1} parent=0 // pred_check_branch
    %28 = sbr.rel (0) target = $region25
  $region24: #{tpu_custom_call.1} parent=0 // pred_region
    _
  $region25: #{tpu_custom_call.1} parent=0 // pred_fallthru
    _
  // Predicated region
  $region26: #{tpu_custom_call.1} parent=0 // pred_check
    _
  $region27: #{tpu_custom_call.1} parent=0 // pred_check_branch
    %30 = sbr.rel (0) target = $region29
  $region28: #{tpu_custom_call.1} parent=0 // pred_region
    _
  $region29: #{tpu_custom_call.1} parent=0 // pred_fallthru
    _
  // Predicated region
  $region30: #{tpu_custom_call.1} parent=0 // pred_check
    _
  $region31: #{tpu_custom_call.1} parent=0 // pred_check_branch
    %32 = sbr.rel (0) target = $region33
  $region32: #{tpu_custom_call.1} parent=0 // pred_region
    _
  $region33: #{tpu_custom_call.1} parent=0 // pred_fallthru
    _
  // Predicated region
  $region34: #{tpu_custom_call.1} parent=0 // pred_check
    _
  $region35: #{tpu_custom_call.1} parent=0 // pred_check_branch
    %34 = sbr.rel (0) target = $region37
  $region36: #{tpu_custom_call.1} parent=0 // pred_region
    _
  $region37: #{tpu_custom_call.1} parent=0 // pred_fallthru
    _
  // Predicated region
  $region38: #{tpu_custom_call.1} parent=0 // pred_check
    _
  $region39: #{tpu_custom_call.1} parent=0 // pred_check_branch
    %36 = sbr.rel (0) target = $region41
  $region40: #{tpu_custom_call.1} parent=0 // pred_region
    _
  $region41: #{tpu_custom_call.1} parent=0 // pred_fallthru
    _
  // Predicated region
  $region42: #{tpu_custom_call.1} parent=0 // pred_check
    _
  $region43: #{tpu_custom_call.1} parent=0 // pred_check_branch
    %38 = sbr.rel (0) target = $region45
  $region44: #{tpu_custom_call.1} parent=0 // pred_region
    _
  $region45: #{tpu_custom_call.1} parent=0 // pred_fallthru
    _
  // Predicated region
  $region46: #{tpu_custom_call.1} parent=0 // pred_check
    _
  $region47: #{tpu_custom_call.1} parent=0 // pred_check_branch
    %40 = sbr.rel (0) target = $region49
  $region48: #{tpu_custom_call.1} parent=0 // pred_region
    _
  $region49: #{tpu_custom_call.1} parent=0 // pred_fallthru
    _
  %v42 = vlaneseq
  %v43 = vand.u32 %v42, 127
  %v44 = vld [vmem:[%s2] sm:$0xff]
  %v45 = vld [vmem:[%s2 + $0x8] sm:$0xff]
  %v46 = vld [vmem:[%s2 + $0x10] sm:$0xff]
  %v47 = vld [vmem:[%s2 + $0x18] sm:$0xff]
  %v48 = vld [vmem:[%s2 + $0x20] sm:$0xff]
  %v49 = vld [vmem:[%s2 + $0x28] sm:$0xff]
  %v50 = vld [vmem:[%s2 + $0x30] sm:$0xff]
  %v51 = vld [vmem:[%s2 + $0x38] sm:$0xff]
  %v52 = vld [vmem:[%s2 + $0x40] sm:$0xff]
  %v53 = vld [vmem:[%s2 + $0x48] sm:$0xff]
  %v54 = vld [vmem:[%s2 + $0x50] sm:$0xff]
  %v55 = vld [vmem:[%s2 + $0x58] sm:$0xff]
  %v56 = vld [vmem:[%s2 + $0x60] sm:$0xff]
  %v57 = vld [vmem:[%s2 + $0x68] sm:$0xff]
  %v58 = vld [vmem:[%s2 + $0x70] sm:$0xff]
  %v59 = vld [vmem:[%s2 + $0x78] sm:$0xff]
  %v60 = vld [vmem:[%s2 + $0x80] sm:$0xff]
  %v61 = vld [vmem:[%s2 + $0x88] sm:$0xff]
  %v62 = vld [vmem:[%s2 + $0x90] sm:$0xff]
  %v63 = vld [vmem:[%s2 + $0x98] sm:$0xff]
  %v64 = vld [vmem:[%s2 + $0xa0] sm:$0xff]
  %v65 = vld [vmem:[%s2 + $0xa8] sm:$0xff]
  %v66 = vld [vmem:[%s2 + $0xb0] sm:$0xff]
  %v67 = vld [vmem:[%s2 + $0xb8] sm:$0xff]
  %v68 = vld [vmem:[%s2 + $0xc0] sm:$0xff]
  %v69 = vld [vmem:[%s2 + $0xc8] sm:$0xff]
  %v70 = vld [vmem:[%s2 + $0xd0] sm:$0xff]
  %v71 = vld [vmem:[%s2 + $0xd8] sm:$0xff]
  %v72 = vld [vmem:[%s2 + $0xe0] sm:$0xff]
  %v73 = vld [vmem:[%s2 + $0xe8] sm:$0xff]
  %v74 = vld [vmem:[%s2 + $0xf0] sm:$0xff]
  %v75 = vld [vmem:[%s2 + $0xf8] sm:$0xff]
  %76 = vset.pattern.permute.xlu0 0
  %77 = vperm.xlu0 %76, %v44
  %v78 = vpop.permute.xlu0 %77
  %79 = vset.pattern.permute.xlu0 0
  %80 = vperm.xlu0 %79, %v45
  %v81 = vpop.permute.xlu0 %80
  %82 = vset.pattern.permute.xlu0 0
  %83 = vperm.xlu0 %82, %v46
  %v84 = vpop.permute.xlu0 %83
  %85 = vset.pattern.permute.xlu0 0
  %86 = vperm.xlu0 %85, %v47
  %v87 = vpop.permute.xlu0 %86
  %88 = vset.pattern.permute.xlu0 0
  %89 = vperm.xlu0 %88, %v48
  %v90 = vpop.permute.xlu0 %89
  %91 = vset.pattern.permute.xlu0 0
  %92 = vperm.xlu0 %91, %v49
  %v93 = vpop.permute.xlu0 %92
  %94 = vset.pattern.permute.xlu0 0
  %95 = vperm.xlu0 %94, %v50
  %v96 = vpop.permute.xlu0 %95
  %97 = vset.pattern.permute.xlu0 0
  %98 = vperm.xlu0 %97, %v51
  %v99 = vpop.permute.xlu0 %98
  %100 = vset.pattern.permute.xlu0 0
  %101 = vperm.xlu0 %100, %v52
  %v102 = vpop.permute.xlu0 %101
  %103 = vset.pattern.permute.xlu0 0
  %104 = vperm.xlu0 %103, %v53
  %v105 = vpop.permute.xlu0 %104
  %106 = vset.pattern.permute.xlu0 0
  %107 = vperm.xlu0 %106, %v54
  %v108 = vpop.permute.xlu0 %107
  %109 = vset.pattern.permute.xlu0 0
  %110 = vperm.xlu0 %109, %v55
  %v111 = vpop.permute.xlu0 %110
  %112 = vset.pattern.permute.xlu0 0
  %113 = vperm.xlu0 %112, %v56
  %v114 = vpop.permute.xlu0 %113
  %115 = vset.pattern.permute.xlu0 0
  %116 = vperm.xlu0 %115, %v57
  %v117 = vpop.permute.xlu0 %116
  %118 = vset.pattern.permute.xlu0 0
  %119 = vperm.xlu0 %118, %v58
  %v120 = vpop.permute.xlu0 %119
  %121 = vset.pattern.permute.xlu0 0
  %122 = vperm.xlu0 %121, %v59
  %v123 = vpop.permute.xlu0 %122
  %124 = vset.pattern.permute.xlu0 0
  %125 = vperm.xlu0 %124, %v60
  %v126 = vpop.permute.xlu0 %125
  %127 = vset.pattern.permute.xlu0 0
  %128 = vperm.xlu0 %127, %v61
  %v129 = vpop.permute.xlu0 %128
  %130 = vset.pattern.permute.xlu0 0
  %131 = vperm.xlu0 %130, %v62
  %v132 = vpop.permute.xlu0 %131
  %133 = vset.pattern.permute.xlu0 0
  %134 = vperm.xlu0 %133, %v63
  %v135 = vpop.permute.xlu0 %134
  %136 = vset.pattern.permute.xlu0 0
  %137 = vperm.xlu0 %136, %v64
  %v138 = vpop.permute.xlu0 %137
  %139 = vset.pattern.permute.xlu0 0
  %140 = vperm.xlu0 %139, %v65
  %v141 = vpop.permute.xlu0 %140
  %142 = vset.pattern.permute.xlu0 0
  %143 = vperm.xlu0 %142, %v66
  %v144 = vpop.permute.xlu0 %143
  %145 = vset.pattern.permute.xlu0 0
  %146 = vperm.xlu0 %145, %v67
  %v147 = vpop.permute.xlu0 %146
  %148 = vset.pattern.permute.xlu0 0
  %149 = vperm.xlu0 %148, %v68
  %v150 = vpop.permute.xlu0 %149
  %151 = vset.pattern.permute.xlu0 0
  %152 = vperm.xlu0 %151, %v69
  %v153 = vpop.permute.xlu0 %152
  %154 = vset.pattern.permute.xlu0 0
  %155 = vperm.xlu0 %154, %v70
  %v156 = vpop.permute.xlu0 %155
  %157 = vset.pattern.permute.xlu0 0
  %158 = vperm.xlu0 %157, %v71
  %v159 = vpop.permute.xlu0 %158
  %160 = vset.pattern.permute.xlu0 0
  %161 = vperm.xlu0 %160, %v72
  %v162 = vpop.permute.xlu0 %161
  %163 = vset.pattern.permute.xlu0 0
  %164 = vperm.xlu0 %163, %v73
  %v165 = vpop.permute.xlu0 %164
  %166 = vset.pattern.permute.xlu0 0
  %167 = vperm.xlu0 %166, %v74
  %v168 = vpop.permute.xlu0 %167
  %169 = vset.pattern.permute.xlu0 0
  %170 = vperm.xlu0 %169, %v75
  %v171 = vpop.permute.xlu0 %170
  %vm172 = vcmp.eq.s32.totalorder %v43, %v78
  %vm173 = vcmp.eq.s32.totalorder %v43, %v81
  %vm174 = vcmp.eq.s32.totalorder %v43, %v84
  %vm175 = vcmp.eq.s32.totalorder %v43, %v87
  %vm176 = vcmp.eq.s32.totalorder %v43, %v90
  %vm177 = vcmp.eq.s32.totalorder %v43, %v93
  %vm178 = vcmp.eq.s32.totalorder %v43, %v96
  %vm179 = vcmp.eq.s32.totalorder %v43, %v99
  %vm180 = vcmp.eq.s32.totalorder %v43, %v102
  %vm181 = vcmp.eq.s32.totalorder %v43, %v105
  %vm182 = vcmp.eq.s32.totalorder %v43, %v108
  %vm183 = vcmp.eq.s32.totalorder %v43, %v111
  %vm184 = vcmp.eq.s32.totalorder %v43, %v114
  %vm185 = vcmp.eq.s32.totalorder %v43, %v117
  %vm186 = vcmp.eq.s32.totalorder %v43, %v120
  %vm187 = vcmp.eq.s32.totalorder %v43, %v123
  %vm188 = vcmp.eq.s32.totalorder %v43, %v126
  %vm189 = vcmp.eq.s32.totalorder %v43, %v129
  %vm190 = vcmp.eq.s32.totalorder %v43, %v132
  %vm191 = vcmp.eq.s32.totalorder %v43, %v135
  %vm192 = vcmp.eq.s32.totalorder %v43, %v138
  %vm193 = vcmp.eq.s32.totalorder %v43, %v141
  %vm194 = vcmp.eq.s32.totalorder %v43, %v144
  %vm195 = vcmp.eq.s32.totalorder %v43, %v147
  %vm196 = vcmp.eq.s32.totalorder %v43, %v150
  %vm197 = vcmp.eq.s32.totalorder %v43, %v153
  %vm198 = vcmp.eq.s32.totalorder %v43, %v156
  %vm199 = vcmp.eq.s32.totalorder %v43, %v159
  %vm200 = vcmp.eq.s32.totalorder %v43, %v162
  %vm201 = vcmp.eq.s32.totalorder %v43, %v165
  %vm202 = vcmp.eq.s32.totalorder %v43, %v168
  %vm203 = vcmp.eq.s32.totalorder %v43, %v171
  %v204 = vsel %vm172, 1, 0
  %v205 = vsel %vm173, 1, 0
  %v206 = vsel %vm174, 1, 0
  %v207 = vsel %vm175, 1, 0
  %v208 = vsel %vm176, 1, 0
  %v209 = vsel %vm177, 1, 0
  %v210 = vsel %vm178, 1, 0
  %v211 = vsel %vm179, 1, 0
  %v212 = vsel %vm180, 1, 0
  %v213 = vsel %vm181, 1, 0
  %v214 = vsel %vm182, 1, 0
  %v215 = vsel %vm183, 1, 0
  %v216 = vsel %vm184, 1, 0
  %v217 = vsel %vm185, 1, 0
  %v218 = vsel %vm186, 1, 0
  %v219 = vsel %vm187, 1, 0
  %v220 = vsel %vm188, 1, 0
  %v221 = vsel %vm189, 1, 0
  %v222 = vsel %vm190, 1, 0
  %v223 = vsel %vm191, 1, 0
  %v224 = vsel %vm192, 1, 0
  %v225 = vsel %vm193, 1, 0
  %v226 = vsel %vm194, 1, 0
  %v227 = vsel %vm195, 1, 0
  %v228 = vsel %vm196, 1, 0
  %v229 = vsel %vm197, 1, 0
  %v230 = vsel %vm198, 1, 0
  %v231 = vsel %vm199, 1, 0
  %v232 = vsel %vm200, 1, 0
  %v233 = vsel %vm201, 1, 0
  %v234 = vsel %vm202, 1, 0
  %v235 = vsel %vm203, 1, 0
  %v236 = vcvt.s32.f32 %v204
  %v237 = vcvt.s32.f32 %v205
  %v238 = vcvt.s32.f32 %v206
  %v239 = vcvt.s32.f32 %v207
  %v240 = vcvt.s32.f32 %v208
  %v241 = vcvt.s32.f32 %v209
  %v242 = vcvt.s32.f32 %v210
  %v243 = vcvt.s32.f32 %v211
  %v244 = vcvt.s32.f32 %v212
  %v245 = vcvt.s32.f32 %v213
  %v246 = vcvt.s32.f32 %v214
  %v247 = vcvt.s32.f32 %v215
  %v248 = vcvt.s32.f32 %v216
  %v249 = vcvt.s32.f32 %v217
  %v250 = vcvt.s32.f32 %v218
  %v251 = vcvt.s32.f32 %v219
  %v252 = vcvt.s32.f32 %v220
  %v253 = vcvt.s32.f32 %v221
  %v254 = vcvt.s32.f32 %v222
  %v255 = vcvt.s32.f32 %v223
  %v256 = vcvt.s32.f32 %v224
  %v257 = vcvt.s32.f32 %v225
  %v258 = vcvt.s32.f32 %v226
  %v259 = vcvt.s32.f32 %v227
  %v260 = vcvt.s32.f32 %v228
  %v261 = vcvt.s32.f32 %v229
  %v262 = vcvt.s32.f32 %v230
  %v263 = vcvt.s32.f32 %v231
  %v264 = vcvt.s32.f32 %v232
  %v265 = vcvt.s32.f32 %v233
  %v266 = vcvt.s32.f32 %v234
  %v267 = vcvt.s32.f32 %v235
  %v268 = vadd.f32 %v236, 0.0
  %v269 = vadd.f32 %v237, 0.0
  %v270 = vadd.f32 %v238, 0.0
  %v271 = vadd.f32 %v239, 0.0
  %v272 = vadd.f32 %v240, 0.0
  %v273 = vadd.f32 %v241, 0.0
  %v274 = vadd.f32 %v242, 0.0
  %v275 = vadd.f32 %v243, 0.0
  %v276 = vadd.f32 %v244, 0.0
  %v277 = vadd.f32 %v245, 0.0
  %v278 = vadd.f32 %v246, 0.0
  %v279 = vadd.f32 %v247, 0.0
  %v280 = vadd.f32 %v248, 0.0
  %v281 = vadd.f32 %v249, 0.0
  %v282 = vadd.f32 %v250, 0.0
  %v283 = vadd.f32 %v251, 0.0
  %v284 = vadd.f32 %v252, 0.0
  %v285 = vadd.f32 %v253, 0.0
  %v286 = vadd.f32 %v254, 0.0
  %v287 = vadd.f32 %v255, 0.0
  %v288 = vadd.f32 %v256, 0.0
  %v289 = vadd.f32 %v257, 0.0
  %v290 = vadd.f32 %v258, 0.0
  %v291 = vadd.f32 %v259, 0.0
  %v292 = vadd.f32 %v260, 0.0
  %v293 = vadd.f32 %v261, 0.0
  %v294 = vadd.f32 %v262, 0.0
  %v295 = vadd.f32 %v263, 0.0
  %v296 = vadd.f32 %v264, 0.0
  %v297 = vadd.f32 %v265, 0.0
  %v298 = vadd.f32 %v266, 0.0
  %v299 = vadd.f32 %v267, 0.0
  %300 = vset.pattern.permute.xlu0 1
  %301 = vperm.xlu0 %300, %v44
  %v302 = vpop.permute.xlu0 %301
  %303 = vset.pattern.permute.xlu0 1
  %304 = vperm.xlu0 %303, %v45
  %v305 = vpop.permute.xlu0 %304
  %306 = vset.pattern.permute.xlu0 1
  %307 = vperm.xlu0 %306, %v46
  %v308 = vpop.permute.xlu0 %307
  %309 = vset.pattern.permute.xlu0 1
  %310 = vperm.xlu0 %309, %v47
  %v311 = vpop.permute.xlu0 %310
  %312 = vset.pattern.permute.xlu0 1
  %313 = vperm.xlu0 %312, %v48
  %v314 = vpop.permute.xlu0 %313
  %315 = vset.pattern.permute.xlu0 1
  %316 = vperm.xlu0 %315, %v49
  %v317 = vpop.permute.xlu0 %316
  %318 = vset.pattern.permute.xlu0 1
  %319 = vperm.xlu0 %318, %v50
  %v320 = vpop.permute.xlu0 %319
  %321 = vset.pattern.permute.xlu0 1
  %322 = vperm.xlu0 %321, %v51
  %v323 = vpop.permute.xlu0 %322
  %324 = vset.pattern.permute.xlu0 1
  %325 = vperm.xlu0 %324, %v52
  %v326 = vpop.permute.xlu0 %325
  %327 = vset.pattern.permute.xlu0 1
  %328 = vperm.xlu0 %327, %v53
  %v329 = vpop.permute.xlu0 %328
  %330 = vset.pattern.permute.xlu0 1
  %331 = vperm.xlu0 %330, %v54
  %v332 = vpop.permute.xlu0 %331
  %333 = vset.pattern.permute.xlu0 1
  %334 = vperm.xlu0 %333, %v55
  %v335 = vpop.permute.xlu0 %334
  %336 = vset.pattern.permute.xlu0 1
  %337 = vperm.xlu0 %336, %v56
  %v338 = vpop.permute.xlu0 %337
  %339 = vset.pattern.permute.xlu0 1
  %340 = vperm.xlu0 %339, %v57
  %v341 = vpop.permute.xlu0 %340
  %342 = vset.pattern.permute.xlu0 1
  %343 = vperm.xlu0 %342, %v58
  %v344 = vpop.permute.xlu0 %343
  %345 = vset.pattern.permute.xlu0 1
  %346 = vperm.xlu0 %345, %v59
  %v347 = vpop.permute.xlu0 %346
  %348 = vset.pattern.permute.xlu0 1
  %349 = vperm.xlu0 %348, %v60
  %v350 = vpop.permute.xlu0 %349
  %351 = vset.pattern.permute.xlu0 1
  %352 = vperm.xlu0 %351, %v61
  %v353 = vpop.permute.xlu0 %352
  %354 = vset.pattern.permute.xlu0 1
  %355 = vperm.xlu0 %354, %v62
  %v356 = vpop.permute.xlu0 %355
  %357 = vset.pattern.permute.xlu0 1
  %358 = vperm.xlu0 %357, %v63
  %v359 = vpop.permute.xlu0 %358
  %360 = vset.pattern.permute.xlu0 1
  %361 = vperm.xlu0 %360, %v64
  %v362 = vpop.permute.xlu0 %361
  %363 = vset.pattern.permute.xlu0 1
  %364 = vperm.xlu0 %363, %v65
  %v365 = vpop.permute.xlu0 %364
  %366 = vset.pattern.permute.xlu0 1
  %367 = vperm.xlu0 %366, %v66
  %v368 = vpop.permute.xlu0 %367
  %369 = vset.pattern.permute.xlu0 1
  %370 = vperm.xlu0 %369, %v67
  %v371 = vpop.permute.xlu0 %370
  %372 = vset.pattern.permute.xlu0 1
  %373 = vperm.xlu0 %372, %v68
  %v374 = vpop.permute.xlu0 %373
  %375 = vset.pattern.permute.xlu0 1
  %376 = vperm.xlu0 %375, %v69
  %v377 = vpop.permute.xlu0 %376
  %378 = vset.pattern.permute.xlu0 1
  %379 = vperm.xlu0 %378, %v70
  %v380 = vpop.permute.xlu0 %379
  %381 = vset.pattern.permute.xlu0 1
  %382 = vperm.xlu0 %381, %v71
  %v383 = vpop.permute.xlu0 %382
  %384 = vset.pattern.permute.xlu0 1
  %385 = vperm.xlu0 %384, %v72
  %v386 = vpop.permute.xlu0 %385
  %387 = vset.pattern.permute.xlu0 1
  %388 = vperm.xlu0 %387, %v73
  %v389 = vpop.permute.xlu0 %388
  %390 = vset.pattern.permute.xlu0 1
  %391 = vperm.xlu0 %390, %v74
  %v392 = vpop.permute.xlu0 %391
  %393 = vset.pattern.permute.xlu0 1
  %394 = vperm.xlu0 %393, %v75
  %v395 = vpop.permute.xlu0 %394
  %vm396 = vcmp.eq.s32.totalorder %v43, %v302
  %vm397 = vcmp.eq.s32.totalorder %v43, %v305
  %vm398 = vcmp.eq.s32.totalorder %v43, %v308
  %vm399 = vcmp.eq.s32.totalorder %v43, %v311
  %vm400 = vcmp.eq.s32.totalorder %v43, %v314
  %vm401 = vcmp.eq.s32.totalorder %v43, %v317
  %vm402 = vcmp.eq.s32.totalorder %v43, %v320
  %vm403 = vcmp.eq.s32.totalorder %v43, %v323
  %vm404 = vcmp.eq.s32.totalorder %v43, %v326
  %vm405 = vcmp.eq.s32.totalorder %v43, %v329
  %vm406 = vcmp.eq.s32.totalorder %v43, %v332
  %vm407 = vcmp.eq.s32.totalorder %v43, %v335
  %vm408 = vcmp.eq.s32.totalorder %v43, %v338
  %vm409 = vcmp.eq.s32.totalorder %v43, %v341
  %vm410 = vcmp.eq.s32.totalorder %v43, %v344
  %vm411 = vcmp.eq.s32.totalorder %v43, %v347
  %vm412 = vcmp.eq.s32.totalorder %v43, %v350
  %vm413 = vcmp.eq.s32.totalorder %v43, %v353
  %vm414 = vcmp.eq.s32.totalorder %v43, %v356
  %vm415 = vcmp.eq.s32.totalorder %v43, %v359
  %vm416 = vcmp.eq.s32.totalorder %v43, %v362
  %vm417 = vcmp.eq.s32.totalorder %v43, %v365
  %vm418 = vcmp.eq.s32.totalorder %v43, %v368
  %vm419 = vcmp.eq.s32.totalorder %v43, %v371
  %vm420 = vcmp.eq.s32.totalorder %v43, %v374
  %vm421 = vcmp.eq.s32.totalorder %v43, %v377
  %vm422 = vcmp.eq.s32.totalorder %v43, %v380
  %vm423 = vcmp.eq.s32.totalorder %v43, %v383
  %vm424 = vcmp.eq.s32.totalorder %v43, %v386
  %vm425 = vcmp.eq.s32.totalorder %v43, %v389
  %vm426 = vcmp.eq.s32.totalorder %v43, %v392
  %vm427 = vcmp.eq.s32.totalorder %v43, %v395
  %v428 = vsel %vm396, 1, 0
  %v429 = vsel %vm397, 1, 0
  %v430 = vsel %vm398, 1, 0
  %v431 = vsel %vm399, 1, 0
  %v432 = vsel %vm400, 1, 0
  %v433 = vsel %vm401, 1, 0
  %v434 = vsel %vm402, 1, 0
  %v435 = vsel %vm403, 1, 0
  %v436 = vsel %vm404, 1, 0
  %v437 = vsel %vm405, 1, 0
  %v438 = vsel %vm406, 1, 0
  %v439 = vsel %vm407, 1, 0
  %v440 = vsel %vm408, 1, 0
  %v441 = vsel %vm409, 1, 0
  %v442 = vsel %vm410, 1, 0
  %v443 = vsel %vm411, 1, 0
  %v444 = vsel %vm412, 1, 0
  %v445 = vsel %vm413, 1, 0
  %v446 = vsel %vm414, 1, 0
  %v447 = vsel %vm415, 1, 0
  %v448 = vsel %vm416, 1, 0
  %v449 = vsel %vm417, 1, 0
  %v450 = vsel %vm418, 1, 0
  %v451 = vsel %vm419, 1, 0
  %v452 = vsel %vm420, 1, 0
  %v453 = vsel %vm421, 1, 0
  %v454 = vsel %vm422, 1, 0
  %v455 = vsel %vm423, 1, 0
  %v456 = vsel %vm424, 1, 0
  %v457 = vsel %vm425, 1, 0
  %v458 = vsel %vm426, 1, 0
  %v459 = vsel %vm427, 1, 0
  %v460 = vcvt.s32.f32 %v428
  %v461 = vcvt.s32.f32 %v429
  %v462 = vcvt.s32.f32 %v430
  %v463 = vcvt.s32.f32 %v431
  %v464 = vcvt.s32.f32 %v432
  %v465 = vcvt.s32.f32 %v433
  %v466 = vcvt.s32.f32 %v434
  %v467 = vcvt.s32.f32 %v435
  %v468 = vcvt.s32.f32 %v436
  %v469 = vcvt.s32.f32 %v437
  %v470 = vcvt.s32.f32 %v438
  %v471 = vcvt.s32.f32 %v439
  %v472 = vcvt.s32.f32 %v440
  %v473 = vcvt.s32.f32 %v441
  %v474 = vcvt.s32.f32 %v442
  %v475 = vcvt.s32.f32 %v443
  %v476 = vcvt.s32.f32 %v444
  %v477 = vcvt.s32.f32 %v445
  %v478 = vcvt.s32.f32 %v446
  %v479 = vcvt.s32.f32 %v447
  %v480 = vcvt.s32.f32 %v448
  %v481 = vcvt.s32.f32 %v449
  %v482 = vcvt.s32.f32 %v450
  %v483 = vcvt.s32.f32 %v451
  %v484 = vcvt.s32.f32 %v452
  %v485 = vcvt.s32.f32 %v453
  %v486 = vcvt.s32.f32 %v454
  %v487 = vcvt.s32.f32 %v455
  %v488 = vcvt.s32.f32 %v456
  %v489 = vcvt.s32.f32 %v457
  %v490 = vcvt.s32.f32 %v458
  %v491 = vcvt.s32.f32 %v459
  %v492 = vadd.f32 %v268, %v460
  %v493 = vadd.f32 %v269, %v461
  %v494 = vadd.f32 %v270, %v462
  %v495 = vadd.f32 %v271, %v463
  %v496 = vadd.f32 %v272, %v464
  %v497 = vadd.f32 %v273, %v465
  %v498 = vadd.f32 %v274, %v466
  %v499 = vadd.f32 %v275, %v467
  %v500 = vadd.f32 %v276, %v468
  %v501 = vadd.f32 %v277, %v469
  %v502 = vadd.f32 %v278, %v470
  %v503 = vadd.f32 %v279, %v471
  %v504 = vadd.f32 %v280, %v472
  %v505 = vadd.f32 %v281, %v473
  %v506 = vadd.f32 %v282, %v474
  %v507 = vadd.f32 %v283, %v475
  %v508 = vadd.f32 %v284, %v476
  %v509 = vadd.f32 %v285, %v477
  %v510 = vadd.f32 %v286, %v478
  %v511 = vadd.f32 %v287, %v479
  %v512 = vadd.f32 %v288, %v480
  %v513 = vadd.f32 %v289, %v481
  %v514 = vadd.f32 %v290, %v482
  %v515 = vadd.f32 %v291, %v483
  %v516 = vadd.f32 %v292, %v484
  %v517 = vadd.f32 %v293, %v485
  %v518 = vadd.f32 %v294, %v486
  %v519 = vadd.f32 %v295, %v487
  %v520 = vadd.f32 %v296, %v488
  %v521 = vadd.f32 %v297, %v489
  %v522 = vadd.f32 %v298, %v490
  %v523 = vadd.f32 %v299, %v491
  %524 = vset.pattern.permute.xlu0 2
  %525 = vperm.xlu0 %524, %v44
  %v526 = vpop.permute.xlu0 %525
  %527 = vset.pattern.permute.xlu0 2
  %528 = vperm.xlu0 %527, %v45
  %v529 = vpop.permute.xlu0 %528
  %530 = vset.pattern.permute.xlu0 2
  %531 = vperm.xlu0 %530, %v46
  %v532 = vpop.permute.xlu0 %531
  %533 = vset.pattern.permute.xlu0 2
  %534 = vperm.xlu0 %533, %v47
  %v535 = vpop.permute.xlu0 %534
  %536 = vset.pattern.permute.xlu0 2
  %537 = vperm.xlu0 %536, %v48
  %v538 = vpop.permute.xlu0 %537
  %539 = vset.pattern.permute.xlu0 2
  %540 = vperm.xlu0 %539, %v49
  %v541 = vpop.permute.xlu0 %540
  %542 = vset.pattern.permute.xlu0 2
  %543 = vperm.xlu0 %542, %v50
  %v544 = vpop.permute.xlu0 %543
  %545 = vset.pattern.permute.xlu0 2
  %546 = vperm.xlu0 %545, %v51
  %v547 = vpop.permute.xlu0 %546
  %548 = vset.pattern.permute.xlu0 2
  %549 = vperm.xlu0 %548, %v52
  %v550 = vpop.permute.xlu0 %549
  %551 = vset.pattern.permute.xlu0 2
  %552 = vperm.xlu0 %551, %v53
  %v553 = vpop.permute.xlu0 %552
  %554 = vset.pattern.permute.xlu0 2
  %555 = vperm.xlu0 %554, %v54
  %v556 = vpop.permute.xlu0 %555
  %557 = vset.pattern.permute.xlu0 2
  %558 = vperm.xlu0 %557, %v55
  %v559 = vpop.permute.xlu0 %558
  %560 = vset.pattern.permute.xlu0 2
  %561 = vperm.xlu0 %560, %v56
  %v562 = vpop.permute.xlu0 %561
  %563 = vset.pattern.permute.xlu0 2
  %564 = vperm.xlu0 %563, %v57
  %v565 = vpop.permute.xlu0 %564
  %566 = vset.pattern.permute.xlu0 2
  %567 = vperm.xlu0 %566, %v58
  %v568 = vpop.permute.xlu0 %567
  %569 = vset.pattern.permute.xlu0 2
  %570 = vperm.xlu0 %569, %v59
  %v571 = vpop.permute.xlu0 %570
  %572 = vset.pattern.permute.xlu0 2
  %573 = vperm.xlu0 %572, %v60
  %v574 = vpop.permute.xlu0 %573
  %575 = vset.pattern.permute.xlu0 2
  %576 = vperm.xlu0 %575, %v61
  %v577 = vpop.permute.xlu0 %576
  %578 = vset.pattern.permute.xlu0 2
  %579 = vperm.xlu0 %578, %v62
  %v580 = vpop.permute.xlu0 %579
  %581 = vset.pattern.permute.xlu0 2
  %582 = vperm.xlu0 %581, %v63
  %v583 = vpop.permute.xlu0 %582
  %584 = vset.pattern.permute.xlu0 2
  %585 = vperm.xlu0 %584, %v64
  %v586 = vpop.permute.xlu0 %585
  %587 = vset.pattern.permute.xlu0 2
  %588 = vperm.xlu0 %587, %v65
  %v589 = vpop.permute.xlu0 %588
  %590 = vset.pattern.permute.xlu0 2
  %591 = vperm.xlu0 %590, %v66
  %v592 = vpop.permute.xlu0 %591
  %593 = vset.pattern.permute.xlu0 2
  %594 = vperm.xlu0 %593, %v67
  %v595 = vpop.permute.xlu0 %594
  %596 = vset.pattern.permute.xlu0 2
  %597 = vperm.xlu0 %596, %v68
  %v598 = vpop.permute.xlu0 %597
  %599 = vset.pattern.permute.xlu0 2
  %600 = vperm.xlu0 %599, %v69
  %v601 = vpop.permute.xlu0 %600
  %602 = vset.pattern.permute.xlu0 2
  %603 = vperm.xlu0 %602, %v70
  %v604 = vpop.permute.xlu0 %603
  %605 = vset.pattern.permute.xlu0 2
  %606 = vperm.xlu0 %605, %v71
  %v607 = vpop.permute.xlu0 %606
  %608 = vset.pattern.permute.xlu0 2
  %609 = vperm.xlu0 %608, %v72
  %v610 = vpop.permute.xlu0 %609
  %611 = vset.pattern.permute.xlu0 2
  %612 = vperm.xlu0 %611, %v73
  %v613 = vpop.permute.xlu0 %612
  %614 = vset.pattern.permute.xlu0 2
  %615 = vperm.xlu0 %614, %v74
  %v616 = vpop.permute.xlu0 %615
  %617 = vset.pattern.permute.xlu0 2
  %618 = vperm.xlu0 %617, %v75
  %v619 = vpop.permute.xlu0 %618
  %vm620 = vcmp.eq.s32.totalorder %v43, %v526
  %vm621 = vcmp.eq.s32.totalorder %v43, %v529
  %vm622 = vcmp.eq.s32.totalorder %v43, %v532
  %vm623 = vcmp.eq.s32.totalorder %v43, %v535
  %vm624 = vcmp.eq.s32.totalorder %v43, %v538
  %vm625 = vcmp.eq.s32.totalorder %v43, %v541
  %vm626 = vcmp.eq.s32.totalorder %v43, %v544
  %vm627 = vcmp.eq.s32.totalorder %v43, %v547
  %vm628 = vcmp.eq.s32.totalorder %v43, %v550
  %vm629 = vcmp.eq.s32.totalorder %v43, %v553
  %vm630 = vcmp.eq.s32.totalorder %v43, %v556
  %vm631 = vcmp.eq.s32.totalorder %v43, %v559
  %vm632 = vcmp.eq.s32.totalorder %v43, %v562
  %vm633 = vcmp.eq.s32.totalorder %v43, %v565
  %vm634 = vcmp.eq.s32.totalorder %v43, %v568
  %vm635 = vcmp.eq.s32.totalorder %v43, %v571
  %vm636 = vcmp.eq.s32.totalorder %v43, %v574
  %vm637 = vcmp.eq.s32.totalorder %v43, %v577
  %vm638 = vcmp.eq.s32.totalorder %v43, %v580
  %vm639 = vcmp.eq.s32.totalorder %v43, %v583
  %vm640 = vcmp.eq.s32.totalorder %v43, %v586
  %vm641 = vcmp.eq.s32.totalorder %v43, %v589
  %vm642 = vcmp.eq.s32.totalorder %v43, %v592
  %vm643 = vcmp.eq.s32.totalorder %v43, %v595
  %vm644 = vcmp.eq.s32.totalorder %v43, %v598
  %vm645 = vcmp.eq.s32.totalorder %v43, %v601
  %vm646 = vcmp.eq.s32.totalorder %v43, %v604
  %vm647 = vcmp.eq.s32.totalorder %v43, %v607
  %vm648 = vcmp.eq.s32.totalorder %v43, %v610
  %vm649 = vcmp.eq.s32.totalorder %v43, %v613
  %vm650 = vcmp.eq.s32.totalorder %v43, %v616
  %vm651 = vcmp.eq.s32.totalorder %v43, %v619
  %v652 = vsel %vm620, 1, 0
  %v653 = vsel %vm621, 1, 0
  %v654 = vsel %vm622, 1, 0
  %v655 = vsel %vm623, 1, 0
  %v656 = vsel %vm624, 1, 0
  %v657 = vsel %vm625, 1, 0
  %v658 = vsel %vm626, 1, 0
  %v659 = vsel %vm627, 1, 0
  %v660 = vsel %vm628, 1, 0
  %v661 = vsel %vm629, 1, 0
  %v662 = vsel %vm630, 1, 0
  %v663 = vsel %vm631, 1, 0
  %v664 = vsel %vm632, 1, 0
  %v665 = vsel %vm633, 1, 0
  %v666 = vsel %vm634, 1, 0
  %v667 = vsel %vm635, 1, 0
  %v668 = vsel %vm636, 1, 0
  %v669 = vsel %vm637, 1, 0
  %v670 = vsel %vm638, 1, 0
  %v671 = vsel %vm639, 1, 0
  %v672 = vsel %vm640, 1, 0
  %v673 = vsel %vm641, 1, 0
  %v674 = vsel %vm642, 1, 0
  %v675 = vsel %vm643, 1, 0
  %v676 = vsel %vm644, 1, 0
  %v677 = vsel %vm645, 1, 0
  %v678 = vsel %vm646, 1, 0
  %v679 = vsel %vm647, 1, 0
  %v680 = vsel %vm648, 1, 0
  %v681 = vsel %vm649, 1, 0
  %v682 = vsel %vm650, 1, 0
  %v683 = vsel %vm651, 1, 0
  %v684 = vcvt.s32.f32 %v652
  %v685 = vcvt.s32.f32 %v653
  %v686 = vcvt.s32.f32 %v654
  %v687 = vcvt.s32.f32 %v655
  %v688 = vcvt.s32.f32 %v656
  %v689 = vcvt.s32.f32 %v657
  %v690 = vcvt.s32.f32 %v658
  %v691 = vcvt.s32.f32 %v659
  %v692 = vcvt.s32.f32 %v660
  %v693 = vcvt.s32.f32 %v661
  %v694 = vcvt.s32.f32 %v662
  %v695 = vcvt.s32.f32 %v663
  %v696 = vcvt.s32.f32 %v664
  %v697 = vcvt.s32.f32 %v665
  %v698 = vcvt.s32.f32 %v666
  %v699 = vcvt.s32.f32 %v667
  %v700 = vcvt.s32.f32 %v668
  %v701 = vcvt.s32.f32 %v669
  %v702 = vcvt.s32.f32 %v670
  %v703 = vcvt.s32.f32 %v671
  %v704 = vcvt.s32.f32 %v672
  %v705 = vcvt.s32.f32 %v673
  %v706 = vcvt.s32.f32 %v674
  %v707 = vcvt.s32.f32 %v675
  %v708 = vcvt.s32.f32 %v676
  %v709 = vcvt.s32.f32 %v677
  %v710 = vcvt.s32.f32 %v678
  %v711 = vcvt.s32.f32 %v679
  %v712 = vcvt.s32.f32 %v680
  %v713 = vcvt.s32.f32 %v681
  %v714 = vcvt.s32.f32 %v682
  %v715 = vcvt.s32.f32 %v683
  %v716 = vadd.f32 %v492, %v684
  %v717 = vadd.f32 %v493, %v685
  %v718 = vadd.f32 %v494, %v686
  %v719 = vadd.f32 %v495, %v687
  %v720 = vadd.f32 %v496, %v688
  %v721 = vadd.f32 %v497, %v689
  %v722 = vadd.f32 %v498, %v690
  %v723 = vadd.f32 %v499, %v691
  %v724 = vadd.f32 %v500, %v692
  %v725 = vadd.f32 %v501, %v693
  %v726 = vadd.f32 %v502, %v694
  %v727 = vadd.f32 %v503, %v695
  %v728 = vadd.f32 %v504, %v696
  %v729 = vadd.f32 %v505, %v697
  %v730 = vadd.f32 %v506, %v698
  %v731 = vadd.f32 %v507, %v699
  %v732 = vadd.f32 %v508, %v700
  %v733 = vadd.f32 %v509, %v701
  %v734 = vadd.f32 %v510, %v702
  %v735 = vadd.f32 %v511, %v703
  %v736 = vadd.f32 %v512, %v704
  %v737 = vadd.f32 %v513, %v705
  %v738 = vadd.f32 %v514, %v706
  %v739 = vadd.f32 %v515, %v707
  %v740 = vadd.f32 %v516, %v708
  %v741 = vadd.f32 %v517, %v709
  %v742 = vadd.f32 %v518, %v710
  %v743 = vadd.f32 %v519, %v711
  %v744 = vadd.f32 %v520, %v712
  %v745 = vadd.f32 %v521, %v713
  %v746 = vadd.f32 %v522, %v714
  %v747 = vadd.f32 %v523, %v715
  %748 = vset.pattern.permute.xlu0 3
  %749 = vperm.xlu0 %748, %v44
  %v750 = vpop.permute.xlu0 %749
  %751 = vset.pattern.permute.xlu0 3
  %752 = vperm.xlu0 %751, %v45
  %v753 = vpop.permute.xlu0 %752
  %754 = vset.pattern.permute.xlu0 3
  %755 = vperm.xlu0 %754, %v46
  %v756 = vpop.permute.xlu0 %755
  %757 = vset.pattern.permute.xlu0 3
  %758 = vperm.xlu0 %757, %v47
  %v759 = vpop.permute.xlu0 %758
  %760 = vset.pattern.permute.xlu0 3
  %761 = vperm.xlu0 %760, %v48
  %v762 = vpop.permute.xlu0 %761
  %763 = vset.pattern.permute.xlu0 3
  %764 = vperm.xlu0 %763, %v49
  %v765 = vpop.permute.xlu0 %764
  %766 = vset.pattern.permute.xlu0 3
  %767 = vperm.xlu0 %766, %v50
  %v768 = vpop.permute.xlu0 %767
  %769 = vset.pattern.permute.xlu0 3
  %770 = vperm.xlu0 %769, %v51
  %v771 = vpop.permute.xlu0 %770
  %772 = vset.pattern.permute.xlu0 3
  %773 = vperm.xlu0 %772, %v52
  %v774 = vpop.permute.xlu0 %773
  %775 = vset.pattern.permute.xlu0 3
  %776 = vperm.xlu0 %775, %v53
  %v777 = vpop.permute.xlu0 %776
  %778 = vset.pattern.permute.xlu0 3
  %779 = vperm.xlu0 %778, %v54
  %v780 = vpop.permute.xlu0 %779
  %781 = vset.pattern.permute.xlu0 3
  %782 = vperm.xlu0 %781, %v55
  %v783 = vpop.permute.xlu0 %782
  %784 = vset.pattern.permute.xlu0 3
  %785 = vperm.xlu0 %784, %v56
  %v786 = vpop.permute.xlu0 %785
  %787 = vset.pattern.permute.xlu0 3
  %788 = vperm.xlu0 %787, %v57
  %v789 = vpop.permute.xlu0 %788
  %790 = vset.pattern.permute.xlu0 3
  %791 = vperm.xlu0 %790, %v58
  %v792 = vpop.permute.xlu0 %791
  %793 = vset.pattern.permute.xlu0 3
  %794 = vperm.xlu0 %793, %v59
  %v795 = vpop.permute.xlu0 %794
  %796 = vset.pattern.permute.xlu0 3
  %797 = vperm.xlu0 %796, %v60
  %v798 = vpop.permute.xlu0 %797
  %799 = vset.pattern.permute.xlu0 3
  %800 = vperm.xlu0 %799, %v61
  %v801 = vpop.permute.xlu0 %800
  %802 = vset.pattern.permute.xlu0 3
  %803 = vperm.xlu0 %802, %v62
  %v804 = vpop.permute.xlu0 %803
  %805 = vset.pattern.permute.xlu0 3
  %806 = vperm.xlu0 %805, %v63
  %v807 = vpop.permute.xlu0 %806
  %808 = vset.pattern.permute.xlu0 3
  %809 = vperm.xlu0 %808, %v64
  %v810 = vpop.permute.xlu0 %809
  %811 = vset.pattern.permute.xlu0 3
  %812 = vperm.xlu0 %811, %v65
  %v813 = vpop.permute.xlu0 %812
  %814 = vset.pattern.permute.xlu0 3
  %815 = vperm.xlu0 %814, %v66
  %v816 = vpop.permute.xlu0 %815
  %817 = vset.pattern.permute.xlu0 3
  %818 = vperm.xlu0 %817, %v67
  %v819 = vpop.permute.xlu0 %818
  %820 = vset.pattern.permute.xlu0 3
  %821 = vperm.xlu0 %820, %v68
  %v822 = vpop.permute.xlu0 %821
  %823 = vset.pattern.permute.xlu0 3
  %824 = vperm.xlu0 %823, %v69
  %v825 = vpop.permute.xlu0 %824
  %826 = vset.pattern.permute.xlu0 3
  %827 = vperm.xlu0 %826, %v70
  %v828 = vpop.permute.xlu0 %827
  %829 = vset.pattern.permute.xlu0 3
  %830 = vperm.xlu0 %829, %v71
  %v831 = vpop.permute.xlu0 %830
  %832 = vset.pattern.permute.xlu0 3
  %833 = vperm.xlu0 %832, %v72
  %v834 = vpop.permute.xlu0 %833
  %835 = vset.pattern.permute.xlu0 3
  %836 = vperm.xlu0 %835, %v73
  %v837 = vpop.permute.xlu0 %836
  %838 = vset.pattern.permute.xlu0 3
  %839 = vperm.xlu0 %838, %v74
  %v840 = vpop.permute.xlu0 %839
  %841 = vset.pattern.permute.xlu0 3
  %842 = vperm.xlu0 %841, %v75
  %v843 = vpop.permute.xlu0 %842
  %vm844 = vcmp.eq.s32.totalorder %v43, %v750
  %vm845 = vcmp.eq.s32.totalorder %v43, %v753
  %vm846 = vcmp.eq.s32.totalorder %v43, %v756
  %vm847 = vcmp.eq.s32.totalorder %v43, %v759
  %vm848 = vcmp.eq.s32.totalorder %v43, %v762
  %vm849 = vcmp.eq.s32.totalorder %v43, %v765
  %vm850 = vcmp.eq.s32.totalorder %v43, %v768
  %vm851 = vcmp.eq.s32.totalorder %v43, %v771
  %vm852 = vcmp.eq.s32.totalorder %v43, %v774
  %vm853 = vcmp.eq.s32.totalorder %v43, %v777
  %vm854 = vcmp.eq.s32.totalorder %v43, %v780
  %vm855 = vcmp.eq.s32.totalorder %v43, %v783
  %vm856 = vcmp.eq.s32.totalorder %v43, %v786
  %vm857 = vcmp.eq.s32.totalorder %v43, %v789
  %vm858 = vcmp.eq.s32.totalorder %v43, %v792
  %vm859 = vcmp.eq.s32.totalorder %v43, %v795
  %vm860 = vcmp.eq.s32.totalorder %v43, %v798
  %vm861 = vcmp.eq.s32.totalorder %v43, %v801
  %vm862 = vcmp.eq.s32.totalorder %v43, %v804
  %vm863 = vcmp.eq.s32.totalorder %v43, %v807
  %vm864 = vcmp.eq.s32.totalorder %v43, %v810
  %vm865 = vcmp.eq.s32.totalorder %v43, %v813
  %vm866 = vcmp.eq.s32.totalorder %v43, %v816
  %vm867 = vcmp.eq.s32.totalorder %v43, %v819
  %vm868 = vcmp.eq.s32.totalorder %v43, %v822
  %vm869 = vcmp.eq.s32.totalorder %v43, %v825
  %vm870 = vcmp.eq.s32.totalorder %v43, %v828
  %vm871 = vcmp.eq.s32.totalorder %v43, %v831
  %vm872 = vcmp.eq.s32.totalorder %v43, %v834
  %vm873 = vcmp.eq.s32.totalorder %v43, %v837
  %vm874 = vcmp.eq.s32.totalorder %v43, %v840
  %vm875 = vcmp.eq.s32.totalorder %v43, %v843
  %v876 = vsel %vm844, 1, 0
  %v877 = vsel %vm845, 1, 0
  %v878 = vsel %vm846, 1, 0
  %v879 = vsel %vm847, 1, 0
  %v880 = vsel %vm848, 1, 0
  %v881 = vsel %vm849, 1, 0
  %v882 = vsel %vm850, 1, 0
  %v883 = vsel %vm851, 1, 0
  %v884 = vsel %vm852, 1, 0
  %v885 = vsel %vm853, 1, 0
  %v886 = vsel %vm854, 1, 0
  %v887 = vsel %vm855, 1, 0
  %v888 = vsel %vm856, 1, 0
  %v889 = vsel %vm857, 1, 0
  %v890 = vsel %vm858, 1, 0
  %v891 = vsel %vm859, 1, 0
  %v892 = vsel %vm860, 1, 0
  %v893 = vsel %vm861, 1, 0
  %v894 = vsel %vm862, 1, 0
  %v895 = vsel %vm863, 1, 0
  %v896 = vsel %vm864, 1, 0
  %v897 = vsel %vm865, 1, 0
  %v898 = vsel %vm866, 1, 0
  %v899 = vsel %vm867, 1, 0
  %v900 = vsel %vm868, 1, 0
  %v901 = vsel %vm869, 1, 0
  %v902 = vsel %vm870, 1, 0
  %v903 = vsel %vm871, 1, 0
  %v904 = vsel %vm872, 1, 0
  %v905 = vsel %vm873, 1, 0
  %v906 = vsel %vm874, 1, 0
  %v907 = vsel %vm875, 1, 0
  %v908 = vcvt.s32.f32 %v876
  %v909 = vcvt.s32.f32 %v877
  %v910 = vcvt.s32.f32 %v878
  %v911 = vcvt.s32.f32 %v879
  %v912 = vcvt.s32.f32 %v880
  %v913 = vcvt.s32.f32 %v881
  %v914 = vcvt.s32.f32 %v882
  %v915 = vcvt.s32.f32 %v883
  %v916 = vcvt.s32.f32 %v884
  %v917 = vcvt.s32.f32 %v885
  %v918 = vcvt.s32.f32 %v886
  %v919 = vcvt.s32.f32 %v887
  %v920 = vcvt.s32.f32 %v888
  %v921 = vcvt.s32.f32 %v889
  %v922 = vcvt.s32.f32 %v890
  %v923 = vcvt.s32.f32 %v891
  %v924 = vcvt.s32.f32 %v892
  %v925 = vcvt.s32.f32 %v893
  %v926 = vcvt.s32.f32 %v894
  %v927 = vcvt.s32.f32 %v895
  %v928 = vcvt.s32.f32 %v896
  %v929 = vcvt.s32.f32 %v897
  %v930 = vcvt.s32.f32 %v898
  %v931 = vcvt.s32.f32 %v899
  %v932 = vcvt.s32.f32 %v900
  %v933 = vcvt.s32.f32 %v901
  %v934 = vcvt.s32.f32 %v902
  %v935 = vcvt.s32.f32 %v903
  %v936 = vcvt.s32.f32 %v904
  %v937 = vcvt.s32.f32 %v905
  %v938 = vcvt.s32.f32 %v906
  %v939 = vcvt.s32.f32 %v907
  %v940 = vadd.f32 %v716, %v908
  %v941 = vadd.f32 %v717, %v909
  %v942 = vadd.f32 %v718, %v910
  %v943 = vadd.f32 %v719, %v911
  %v944 = vadd.f32 %v720, %v912
  %v945 = vadd.f32 %v721, %v913
  %v946 = vadd.f32 %v722, %v914
  %v947 = vadd.f32 %v723, %v915
  %v948 = vadd.f32 %v724, %v916
  %v949 = vadd.f32 %v725, %v917
  %v950 = vadd.f32 %v726, %v918
  %v951 = vadd.f32 %v727, %v919
  %v952 = vadd.f32 %v728, %v920
  %v953 = vadd.f32 %v729, %v921
  %v954 = vadd.f32 %v730, %v922
  %v955 = vadd.f32 %v731, %v923
  %v956 = vadd.f32 %v732, %v924
  %v957 = vadd.f32 %v733, %v925
  %v958 = vadd.f32 %v734, %v926
  %v959 = vadd.f32 %v735, %v927
  %v960 = vadd.f32 %v736, %v928
  %v961 = vadd.f32 %v737, %v929
  %v962 = vadd.f32 %v738, %v930
  %v963 = vadd.f32 %v739, %v931
  %v964 = vadd.f32 %v740, %v932
  %v965 = vadd.f32 %v741, %v933
  %v966 = vadd.f32 %v742, %v934
  %v967 = vadd.f32 %v743, %v935
  %v968 = vadd.f32 %v744, %v936
  %v969 = vadd.f32 %v745, %v937
  %v970 = vadd.f32 %v746, %v938
  %v971 = vadd.f32 %v747, %v939
  %972 = vset.pattern.permute.xlu0 4
  %973 = vperm.xlu0 %972, %v44
  %v974 = vpop.permute.xlu0 %973
  %975 = vset.pattern.permute.xlu0 4
  %976 = vperm.xlu0 %975, %v45
  %v977 = vpop.permute.xlu0 %976
  %978 = vset.pattern.permute.xlu0 4
  %979 = vperm.xlu0 %978, %v46
  %v980 = vpop.permute.xlu0 %979
  %981 = vset.pattern.permute.xlu0 4
  %982 = vperm.xlu0 %981, %v47
  %v983 = vpop.permute.xlu0 %982
  %984 = vset.pattern.permute.xlu0 4
  %985 = vperm.xlu0 %984, %v48
  %v986 = vpop.permute.xlu0 %985
  %987 = vset.pattern.permute.xlu0 4
  %988 = vperm.xlu0 %987, %v49
  %v989 = vpop.permute.xlu0 %988
  %990 = vset.pattern.permute.xlu0 4
  %991 = vperm.xlu0 %990, %v50
  %v992 = vpop.permute.xlu0 %991
  %993 = vset.pattern.permute.xlu0 4
  %994 = vperm.xlu0 %993, %v51
  %v995 = vpop.permute.xlu0 %994
  %996 = vset.pattern.permute.xlu0 4
  %997 = vperm.xlu0 %996, %v52
  %v998 = vpop.permute.xlu0 %997
  %999 = vset.pattern.permute.xlu0 4
  %1000 = vperm.xlu0 %999, %v53
  %v1001 = vpop.permute.xlu0 %1000
  %1002 = vset.pattern.permute.xlu0 4
  %1003 = vperm.xlu0 %1002, %v54
  %v1004 = vpop.permute.xlu0 %1003
  %1005 = vset.pattern.permute.xlu0 4
  %1006 = vperm.xlu0 %1005, %v55
  %v1007 = vpop.permute.xlu0 %1006
  %1008 = vset.pattern.permute.xlu0 4
  %1009 = vperm.xlu0 %1008, %v56
  %v1010 = vpop.permute.xlu0 %1009
  %1011 = vset.pattern.permute.xlu0 4
  %1012 = vperm.xlu0 %1011, %v57
  %v1013 = vpop.permute.xlu0 %1012
  %1014 = vset.pattern.permute.xlu0 4
  %1015 = vperm.xlu0 %1014, %v58
  %v1016 = vpop.permute.xlu0 %1015
  %1017 = vset.pattern.permute.xlu0 4
  %1018 = vperm.xlu0 %1017, %v59
  %v1019 = vpop.permute.xlu0 %1018
  %1020 = vset.pattern.permute.xlu0 4
  %1021 = vperm.xlu0 %1020, %v60
  %v1022 = vpop.permute.xlu0 %1021
  %1023 = vset.pattern.permute.xlu0 4
  %1024 = vperm.xlu0 %1023, %v61
  %v1025 = vpop.permute.xlu0 %1024
  %1026 = vset.pattern.permute.xlu0 4
  %1027 = vperm.xlu0 %1026, %v62
  %v1028 = vpop.permute.xlu0 %1027
  %1029 = vset.pattern.permute.xlu0 4
  %1030 = vperm.xlu0 %1029, %v63
  %v1031 = vpop.permute.xlu0 %1030
  %1032 = vset.pattern.permute.xlu0 4
  %1033 = vperm.xlu0 %1032, %v64
  %v1034 = vpop.permute.xlu0 %1033
  %1035 = vset.pattern.permute.xlu0 4
  %1036 = vperm.xlu0 %1035, %v65
  %v1037 = vpop.permute.xlu0 %1036
  %1038 = vset.pattern.permute.xlu0 4
  %1039 = vperm.xlu0 %1038, %v66
  %v1040 = vpop.permute.xlu0 %1039
  %1041 = vset.pattern.permute.xlu0 4
  %1042 = vperm.xlu0 %1041, %v67
  %v1043 = vpop.permute.xlu0 %1042
  %1044 = vset.pattern.permute.xlu0 4
  %1045 = vperm.xlu0 %1044, %v68
  %v1046 = vpop.permute.xlu0 %1045
  %1047 = vset.pattern.permute.xlu0 4
  %1048 = vperm.xlu0 %1047, %v69
  %v1049 = vpop.permute.xlu0 %1048
  %1050 = vset.pattern.permute.xlu0 4
  %1051 = vperm.xlu0 %1050, %v70
  %v1052 = vpop.permute.xlu0 %1051
  %1053 = vset.pattern.permute.xlu0 4
  %1054 = vperm.xlu0 %1053, %v71
  %v1055 = vpop.permute.xlu0 %1054
  %1056 = vset.pattern.permute.xlu0 4
  %1057 = vperm.xlu0 %1056, %v72
  %v1058 = vpop.permute.xlu0 %1057
  %1059 = vset.pattern.permute.xlu0 4
  %1060 = vperm.xlu0 %1059, %v73
  %v1061 = vpop.permute.xlu0 %1060
  %1062 = vset.pattern.permute.xlu0 4
  %1063 = vperm.xlu0 %1062, %v74
  %v1064 = vpop.permute.xlu0 %1063
  %1065 = vset.pattern.permute.xlu0 4
  %1066 = vperm.xlu0 %1065, %v75
  %v1067 = vpop.permute.xlu0 %1066
  %vm1068 = vcmp.eq.s32.totalorder %v43, %v974
  %vm1069 = vcmp.eq.s32.totalorder %v43, %v977
  %vm1070 = vcmp.eq.s32.totalorder %v43, %v980
  %vm1071 = vcmp.eq.s32.totalorder %v43, %v983
  %vm1072 = vcmp.eq.s32.totalorder %v43, %v986
  %vm1073 = vcmp.eq.s32.totalorder %v43, %v989
  %vm1074 = vcmp.eq.s32.totalorder %v43, %v992
  %vm1075 = vcmp.eq.s32.totalorder %v43, %v995
  %vm1076 = vcmp.eq.s32.totalorder %v43, %v998
  %vm1077 = vcmp.eq.s32.totalorder %v43, %v1001
  %vm1078 = vcmp.eq.s32.totalorder %v43, %v1004
  %vm1079 = vcmp.eq.s32.totalorder %v43, %v1007
  %vm1080 = vcmp.eq.s32.totalorder %v43, %v1010
  %vm1081 = vcmp.eq.s32.totalorder %v43, %v1013
  %vm1082 = vcmp.eq.s32.totalorder %v43, %v1016
  %vm1083 = vcmp.eq.s32.totalorder %v43, %v1019
  %vm1084 = vcmp.eq.s32.totalorder %v43, %v1022
  %vm1085 = vcmp.eq.s32.totalorder %v43, %v1025
  %vm1086 = vcmp.eq.s32.totalorder %v43, %v1028
  %vm1087 = vcmp.eq.s32.totalorder %v43, %v1031
  %vm1088 = vcmp.eq.s32.totalorder %v43, %v1034
  %vm1089 = vcmp.eq.s32.totalorder %v43, %v1037
  %vm1090 = vcmp.eq.s32.totalorder %v43, %v1040
  %vm1091 = vcmp.eq.s32.totalorder %v43, %v1043
  %vm1092 = vcmp.eq.s32.totalorder %v43, %v1046
  %vm1093 = vcmp.eq.s32.totalorder %v43, %v1049
  %vm1094 = vcmp.eq.s32.totalorder %v43, %v1052
  %vm1095 = vcmp.eq.s32.totalorder %v43, %v1055
  %vm1096 = vcmp.eq.s32.totalorder %v43, %v1058
  %vm1097 = vcmp.eq.s32.totalorder %v43, %v1061
  %vm1098 = vcmp.eq.s32.totalorder %v43, %v1064
  %vm1099 = vcmp.eq.s32.totalorder %v43, %v1067
  %v1100 = vsel %vm1068, 1, 0
  %v1101 = vsel %vm1069, 1, 0
  %v1102 = vsel %vm1070, 1, 0
  %v1103 = vsel %vm1071, 1, 0
  %v1104 = vsel %vm1072, 1, 0
  %v1105 = vsel %vm1073, 1, 0
  %v1106 = vsel %vm1074, 1, 0
  %v1107 = vsel %vm1075, 1, 0
  %v1108 = vsel %vm1076, 1, 0
  %v1109 = vsel %vm1077, 1, 0
  %v1110 = vsel %vm1078, 1, 0
  %v1111 = vsel %vm1079, 1, 0
  %v1112 = vsel %vm1080, 1, 0
  %v1113 = vsel %vm1081, 1, 0
  %v1114 = vsel %vm1082, 1, 0
  %v1115 = vsel %vm1083, 1, 0
  %v1116 = vsel %vm1084, 1, 0
  %v1117 = vsel %vm1085, 1, 0
  %v1118 = vsel %vm1086, 1, 0
  %v1119 = vsel %vm1087, 1, 0
  %v1120 = vsel %vm1088, 1, 0
  %v1121 = vsel %vm1089, 1, 0
  %v1122 = vsel %vm1090, 1, 0
  %v1123 = vsel %vm1091, 1, 0
  %v1124 = vsel %vm1092, 1, 0
  %v1125 = vsel %vm1093, 1, 0
  %v1126 = vsel %vm1094, 1, 0
  %v1127 = vsel %vm1095, 1, 0
  %v1128 = vsel %vm1096, 1, 0
  %v1129 = vsel %vm1097, 1, 0
  %v1130 = vsel %vm1098, 1, 0
  %v1131 = vsel %vm1099, 1, 0
  %v1132 = vcvt.s32.f32 %v1100
  %v1133 = vcvt.s32.f32 %v1101
  %v1134 = vcvt.s32.f32 %v1102
  %v1135 = vcvt.s32.f32 %v1103
  %v1136 = vcvt.s32.f32 %v1104
  %v1137 = vcvt.s32.f32 %v1105
  %v1138 = vcvt.s32.f32 %v1106
  %v1139 = vcvt.s32.f32 %v1107
  %v1140 = vcvt.s32.f32 %v1108
  %v1141 = vcvt.s32.f32 %v1109
  %v1142 = vcvt.s32.f32 %v1110
  %v1143 = vcvt.s32.f32 %v1111
  %v1144 = vcvt.s32.f32 %v1112
  %v1145 = vcvt.s32.f32 %v1113
  %v1146 = vcvt.s32.f32 %v1114
  %v1147 = vcvt.s32.f32 %v1115
  %v1148 = vcvt.s32.f32 %v1116
  %v1149 = vcvt.s32.f32 %v1117
  %v1150 = vcvt.s32.f32 %v1118
  %v1151 = vcvt.s32.f32 %v1119
  %v1152 = vcvt.s32.f32 %v1120
  %v1153 = vcvt.s32.f32 %v1121
  %v1154 = vcvt.s32.f32 %v1122
  %v1155 = vcvt.s32.f32 %v1123
  %v1156 = vcvt.s32.f32 %v1124
  %v1157 = vcvt.s32.f32 %v1125
  %v1158 = vcvt.s32.f32 %v1126
  %v1159 = vcvt.s32.f32 %v1127
  %v1160 = vcvt.s32.f32 %v1128
  %v1161 = vcvt.s32.f32 %v1129
  %v1162 = vcvt.s32.f32 %v1130
  %v1163 = vcvt.s32.f32 %v1131
  %v1164 = vadd.f32 %v940, %v1132
  %v1165 = vadd.f32 %v941, %v1133
  %v1166 = vadd.f32 %v942, %v1134
  %v1167 = vadd.f32 %v943, %v1135
  %v1168 = vadd.f32 %v944, %v1136
  %v1169 = vadd.f32 %v945, %v1137
  %v1170 = vadd.f32 %v946, %v1138
  %v1171 = vadd.f32 %v947, %v1139
  %v1172 = vadd.f32 %v948, %v1140
  %v1173 = vadd.f32 %v949, %v1141
  %v1174 = vadd.f32 %v950, %v1142
  %v1175 = vadd.f32 %v951, %v1143
  %v1176 = vadd.f32 %v952, %v1144
  %v1177 = vadd.f32 %v953, %v1145
  %v1178 = vadd.f32 %v954, %v1146
  %v1179 = vadd.f32 %v955, %v1147
  %v1180 = vadd.f32 %v956, %v1148
  %v1181 = vadd.f32 %v957, %v1149
  %v1182 = vadd.f32 %v958, %v1150
  %v1183 = vadd.f32 %v959, %v1151
  %v1184 = vadd.f32 %v960, %v1152
  %v1185 = vadd.f32 %v961, %v1153
  %v1186 = vadd.f32 %v962, %v1154
  %v1187 = vadd.f32 %v963, %v1155
  %v1188 = vadd.f32 %v964, %v1156
  %v1189 = vadd.f32 %v965, %v1157
  %v1190 = vadd.f32 %v966, %v1158
  %v1191 = vadd.f32 %v967, %v1159
  %v1192 = vadd.f32 %v968, %v1160
  %v1193 = vadd.f32 %v969, %v1161
  %v1194 = vadd.f32 %v970, %v1162
  %v1195 = vadd.f32 %v971, %v1163
  %1196 = vset.pattern.permute.xlu0 5
  %1197 = vperm.xlu0 %1196, %v44
  %v1198 = vpop.permute.xlu0 %1197
  %1199 = vset.pattern.permute.xlu0 5
  %1200 = vperm.xlu0 %1199, %v45
  %v1201 = vpop.permute.xlu0 %1200
  %1202 = vset.pattern.permute.xlu0 5
  %1203 = vperm.xlu0 %1202, %v46
  %v1204 = vpop.permute.xlu0 %1203
  %1205 = vset.pattern.permute.xlu0 5
  %1206 = vperm.xlu0 %1205, %v47
  %v1207 = vpop.permute.xlu0 %1206
  %1208 = vset.pattern.permute.xlu0 5
  %1209 = vperm.xlu0 %1208, %v48
  %v1210 = vpop.permute.xlu0 %1209
  %1211 = vset.pattern.permute.xlu0 5
  %1212 = vperm.xlu0 %1211, %v49
  %v1213 = vpop.permute.xlu0 %1212
  %1214 = vset.pattern.permute.xlu0 5
  %1215 = vperm.xlu0 %1214, %v50
  %v1216 = vpop.permute.xlu0 %1215
  %1217 = vset.pattern.permute.xlu0 5
  %1218 = vperm.xlu0 %1217, %v51
  %v1219 = vpop.permute.xlu0 %1218
  %1220 = vset.pattern.permute.xlu0 5
  %1221 = vperm.xlu0 %1220, %v52
  %v1222 = vpop.permute.xlu0 %1221
  %1223 = vset.pattern.permute.xlu0 5
  %1224 = vperm.xlu0 %1223, %v53
  %v1225 = vpop.permute.xlu0 %1224
  %1226 = vset.pattern.permute.xlu0 5
  %1227 = vperm.xlu0 %1226, %v54
  %v1228 = vpop.permute.xlu0 %1227
  %1229 = vset.pattern.permute.xlu0 5
  %1230 = vperm.xlu0 %1229, %v55
  %v1231 = vpop.permute.xlu0 %1230
  %1232 = vset.pattern.permute.xlu0 5
  %1233 = vperm.xlu0 %1232, %v56
  %v1234 = vpop.permute.xlu0 %1233
  %1235 = vset.pattern.permute.xlu0 5
  %1236 = vperm.xlu0 %1235, %v57
  %v1237 = vpop.permute.xlu0 %1236
  %1238 = vset.pattern.permute.xlu0 5
  %1239 = vperm.xlu0 %1238, %v58
  %v1240 = vpop.permute.xlu0 %1239
  %1241 = vset.pattern.permute.xlu0 5
  %1242 = vperm.xlu0 %1241, %v59
  %v1243 = vpop.permute.xlu0 %1242
  %1244 = vset.pattern.permute.xlu0 5
  %1245 = vperm.xlu0 %1244, %v60
  %v1246 = vpop.permute.xlu0 %1245
  %1247 = vset.pattern.permute.xlu0 5
  %1248 = vperm.xlu0 %1247, %v61
  %v1249 = vpop.permute.xlu0 %1248
  %1250 = vset.pattern.permute.xlu0 5
  %1251 = vperm.xlu0 %1250, %v62
  %v1252 = vpop.permute.xlu0 %1251
  %1253 = vset.pattern.permute.xlu0 5
  %1254 = vperm.xlu0 %1253, %v63
  %v1255 = vpop.permute.xlu0 %1254
  %1256 = vset.pattern.permute.xlu0 5
  %1257 = vperm.xlu0 %1256, %v64
  %v1258 = vpop.permute.xlu0 %1257
  %1259 = vset.pattern.permute.xlu0 5
  %1260 = vperm.xlu0 %1259, %v65
  %v1261 = vpop.permute.xlu0 %1260
  %1262 = vset.pattern.permute.xlu0 5
  %1263 = vperm.xlu0 %1262, %v66
  %v1264 = vpop.permute.xlu0 %1263
  %1265 = vset.pattern.permute.xlu0 5
  %1266 = vperm.xlu0 %1265, %v67
  %v1267 = vpop.permute.xlu0 %1266
  %1268 = vset.pattern.permute.xlu0 5
  %1269 = vperm.xlu0 %1268, %v68
  %v1270 = vpop.permute.xlu0 %1269
  %1271 = vset.pattern.permute.xlu0 5
  %1272 = vperm.xlu0 %1271, %v69
  %v1273 = vpop.permute.xlu0 %1272
  %1274 = vset.pattern.permute.xlu0 5
  %1275 = vperm.xlu0 %1274, %v70
  %v1276 = vpop.permute.xlu0 %1275
  %1277 = vset.pattern.permute.xlu0 5
  %1278 = vperm.xlu0 %1277, %v71
  %v1279 = vpop.permute.xlu0 %1278
  %1280 = vset.pattern.permute.xlu0 5
  %1281 = vperm.xlu0 %1280, %v72
  %v1282 = vpop.permute.xlu0 %1281
  %1283 = vset.pattern.permute.xlu0 5
  %1284 = vperm.xlu0 %1283, %v73
  %v1285 = vpop.permute.xlu0 %1284
  %1286 = vset.pattern.permute.xlu0 5
  %1287 = vperm.xlu0 %1286, %v74
  %v1288 = vpop.permute.xlu0 %1287
  %1289 = vset.pattern.permute.xlu0 5
  %1290 = vperm.xlu0 %1289, %v75
  %v1291 = vpop.permute.xlu0 %1290
  %vm1292 = vcmp.eq.s32.totalorder %v43, %v1198
  %vm1293 = vcmp.eq.s32.totalorder %v43, %v1201
  %vm1294 = vcmp.eq.s32.totalorder %v43, %v1204
  %vm1295 = vcmp.eq.s32.totalorder %v43, %v1207
  %vm1296 = vcmp.eq.s32.totalorder %v43, %v1210
  %vm1297 = vcmp.eq.s32.totalorder %v43, %v1213
  %vm1298 = vcmp.eq.s32.totalorder %v43, %v1216
  %vm1299 = vcmp.eq.s32.totalorder %v43, %v1219
  %vm1300 = vcmp.eq.s32.totalorder %v43, %v1222
  %vm1301 = vcmp.eq.s32.totalorder %v43, %v1225
  %vm1302 = vcmp.eq.s32.totalorder %v43, %v1228
  %vm1303 = vcmp.eq.s32.totalorder %v43, %v1231
  %vm1304 = vcmp.eq.s32.totalorder %v43, %v1234
  %vm1305 = vcmp.eq.s32.totalorder %v43, %v1237
  %vm1306 = vcmp.eq.s32.totalorder %v43, %v1240
  %vm1307 = vcmp.eq.s32.totalorder %v43, %v1243
  %vm1308 = vcmp.eq.s32.totalorder %v43, %v1246
  %vm1309 = vcmp.eq.s32.totalorder %v43, %v1249
  %vm1310 = vcmp.eq.s32.totalorder %v43, %v1252
  %vm1311 = vcmp.eq.s32.totalorder %v43, %v1255
  %vm1312 = vcmp.eq.s32.totalorder %v43, %v1258
  %vm1313 = vcmp.eq.s32.totalorder %v43, %v1261
  %vm1314 = vcmp.eq.s32.totalorder %v43, %v1264
  %vm1315 = vcmp.eq.s32.totalorder %v43, %v1267
  %vm1316 = vcmp.eq.s32.totalorder %v43, %v1270
  %vm1317 = vcmp.eq.s32.totalorder %v43, %v1273
  %vm1318 = vcmp.eq.s32.totalorder %v43, %v1276
  %vm1319 = vcmp.eq.s32.totalorder %v43, %v1279
  %vm1320 = vcmp.eq.s32.totalorder %v43, %v1282
  %vm1321 = vcmp.eq.s32.totalorder %v43, %v1285
  %vm1322 = vcmp.eq.s32.totalorder %v43, %v1288
  %vm1323 = vcmp.eq.s32.totalorder %v43, %v1291
  %v1324 = vsel %vm1292, 1, 0
  %v1325 = vsel %vm1293, 1, 0
  %v1326 = vsel %vm1294, 1, 0
  %v1327 = vsel %vm1295, 1, 0
  %v1328 = vsel %vm1296, 1, 0
  %v1329 = vsel %vm1297, 1, 0
  %v1330 = vsel %vm1298, 1, 0
  %v1331 = vsel %vm1299, 1, 0
  %v1332 = vsel %vm1300, 1, 0
  %v1333 = vsel %vm1301, 1, 0
  %v1334 = vsel %vm1302, 1, 0
  %v1335 = vsel %vm1303, 1, 0
  %v1336 = vsel %vm1304, 1, 0
  %v1337 = vsel %vm1305, 1, 0
  %v1338 = vsel %vm1306, 1, 0
  %v1339 = vsel %vm1307, 1, 0
  %v1340 = vsel %vm1308, 1, 0
  %v1341 = vsel %vm1309, 1, 0
  %v1342 = vsel %vm1310, 1, 0
  %v1343 = vsel %vm1311, 1, 0
  %v1344 = vsel %vm1312, 1, 0
  %v1345 = vsel %vm1313, 1, 0
  %v1346 = vsel %vm1314, 1, 0
  %v1347 = vsel %vm1315, 1, 0
  %v1348 = vsel %vm1316, 1, 0
  %v1349 = vsel %vm1317, 1, 0
  %v1350 = vsel %vm1318, 1, 0
  %v1351 = vsel %vm1319, 1, 0
  %v1352 = vsel %vm1320, 1, 0
  %v1353 = vsel %vm1321, 1, 0
  %v1354 = vsel %vm1322, 1, 0
  %v1355 = vsel %vm1323, 1, 0
  %v1356 = vcvt.s32.f32 %v1324
  %v1357 = vcvt.s32.f32 %v1325
  %v1358 = vcvt.s32.f32 %v1326
  %v1359 = vcvt.s32.f32 %v1327
  %v1360 = vcvt.s32.f32 %v1328
  %v1361 = vcvt.s32.f32 %v1329
  %v1362 = vcvt.s32.f32 %v1330
  %v1363 = vcvt.s32.f32 %v1331
  %v1364 = vcvt.s32.f32 %v1332
  %v1365 = vcvt.s32.f32 %v1333
  %v1366 = vcvt.s32.f32 %v1334
  %v1367 = vcvt.s32.f32 %v1335
  %v1368 = vcvt.s32.f32 %v1336
  %v1369 = vcvt.s32.f32 %v1337
  %v1370 = vcvt.s32.f32 %v1338
  %v1371 = vcvt.s32.f32 %v1339
  %v1372 = vcvt.s32.f32 %v1340
  %v1373 = vcvt.s32.f32 %v1341
  %v1374 = vcvt.s32.f32 %v1342
  %v1375 = vcvt.s32.f32 %v1343
  %v1376 = vcvt.s32.f32 %v1344
  %v1377 = vcvt.s32.f32 %v1345
  %v1378 = vcvt.s32.f32 %v1346
  %v1379 = vcvt.s32.f32 %v1347
  %v1380 = vcvt.s32.f32 %v1348
  %v1381 = vcvt.s32.f32 %v1349
  %v1382 = vcvt.s32.f32 %v1350
  %v1383 = vcvt.s32.f32 %v1351
  %v1384 = vcvt.s32.f32 %v1352
  %v1385 = vcvt.s32.f32 %v1353
  %v1386 = vcvt.s32.f32 %v1354
  %v1387 = vcvt.s32.f32 %v1355
  %v1388 = vadd.f32 %v1164, %v1356
  %v1389 = vadd.f32 %v1165, %v1357
  %v1390 = vadd.f32 %v1166, %v1358
  %v1391 = vadd.f32 %v1167, %v1359
  %v1392 = vadd.f32 %v1168, %v1360
  %v1393 = vadd.f32 %v1169, %v1361
  %v1394 = vadd.f32 %v1170, %v1362
  %v1395 = vadd.f32 %v1171, %v1363
  %v1396 = vadd.f32 %v1172, %v1364
  %v1397 = vadd.f32 %v1173, %v1365
  %v1398 = vadd.f32 %v1174, %v1366
  %v1399 = vadd.f32 %v1175, %v1367
  %v1400 = vadd.f32 %v1176, %v1368
  %v1401 = vadd.f32 %v1177, %v1369
  %v1402 = vadd.f32 %v1178, %v1370
  %v1403 = vadd.f32 %v1179, %v1371
  %v1404 = vadd.f32 %v1180, %v1372
  %v1405 = vadd.f32 %v1181, %v1373
  %v1406 = vadd.f32 %v1182, %v1374
  %v1407 = vadd.f32 %v1183, %v1375
  %v1408 = vadd.f32 %v1184, %v1376
  %v1409 = vadd.f32 %v1185, %v1377
  %v1410 = vadd.f32 %v1186, %v1378
  %v1411 = vadd.f32 %v1187, %v1379
  %v1412 = vadd.f32 %v1188, %v1380
  %v1413 = vadd.f32 %v1189, %v1381
  %v1414 = vadd.f32 %v1190, %v1382
  %v1415 = vadd.f32 %v1191, %v1383
  %v1416 = vadd.f32 %v1192, %v1384
  %v1417 = vadd.f32 %v1193, %v1385
  %v1418 = vadd.f32 %v1194, %v1386
  %v1419 = vadd.f32 %v1195, %v1387
  %1420 = vset.pattern.permute.xlu0 6
  %1421 = vperm.xlu0 %1420, %v44
  %v1422 = vpop.permute.xlu0 %1421
  %1423 = vset.pattern.permute.xlu0 6
  %1424 = vperm.xlu0 %1423, %v45
  %v1425 = vpop.permute.xlu0 %1424
  %1426 = vset.pattern.permute.xlu0 6
  %1427 = vperm.xlu0 %1426, %v46
  %v1428 = vpop.permute.xlu0 %1427
  %1429 = vset.pattern.permute.xlu0 6
  %1430 = vperm.xlu0 %1429, %v47
  %v1431 = vpop.permute.xlu0 %1430
  %1432 = vset.pattern.permute.xlu0 6
  %1433 = vperm.xlu0 %1432, %v48
  %v1434 = vpop.permute.xlu0 %1433
  %1435 = vset.pattern.permute.xlu0 6
  %1436 = vperm.xlu0 %1435, %v49
  %v1437 = vpop.permute.xlu0 %1436
  %1438 = vset.pattern.permute.xlu0 6
  %1439 = vperm.xlu0 %1438, %v50
  %v1440 = vpop.permute.xlu0 %1439
  %1441 = vset.pattern.permute.xlu0 6
  %1442 = vperm.xlu0 %1441, %v51
  %v1443 = vpop.permute.xlu0 %1442
  %1444 = vset.pattern.permute.xlu0 6
  %1445 = vperm.xlu0 %1444, %v52
  %v1446 = vpop.permute.xlu0 %1445
  %1447 = vset.pattern.permute.xlu0 6
  %1448 = vperm.xlu0 %1447, %v53
  %v1449 = vpop.permute.xlu0 %1448
  %1450 = vset.pattern.permute.xlu0 6
  %1451 = vperm.xlu0 %1450, %v54
  %v1452 = vpop.permute.xlu0 %1451
  %1453 = vset.pattern.permute.xlu0 6
  %1454 = vperm.xlu0 %1453, %v55
  %v1455 = vpop.permute.xlu0 %1454
  %1456 = vset.pattern.permute.xlu0 6
  %1457 = vperm.xlu0 %1456, %v56
  %v1458 = vpop.permute.xlu0 %1457
  %1459 = vset.pattern.permute.xlu0 6
  %1460 = vperm.xlu0 %1459, %v57
  %v1461 = vpop.permute.xlu0 %1460
  %1462 = vset.pattern.permute.xlu0 6
  %1463 = vperm.xlu0 %1462, %v58
  %v1464 = vpop.permute.xlu0 %1463
  %1465 = vset.pattern.permute.xlu0 6
  %1466 = vperm.xlu0 %1465, %v59
  %v1467 = vpop.permute.xlu0 %1466
  %1468 = vset.pattern.permute.xlu0 6
  %1469 = vperm.xlu0 %1468, %v60
  %v1470 = vpop.permute.xlu0 %1469
  %1471 = vset.pattern.permute.xlu0 6
  %1472 = vperm.xlu0 %1471, %v61
  %v1473 = vpop.permute.xlu0 %1472
  %1474 = vset.pattern.permute.xlu0 6
  %1475 = vperm.xlu0 %1474, %v62
  %v1476 = vpop.permute.xlu0 %1475
  %1477 = vset.pattern.permute.xlu0 6
  %1478 = vperm.xlu0 %1477, %v63
  %v1479 = vpop.permute.xlu0 %1478
  %1480 = vset.pattern.permute.xlu0 6
  %1481 = vperm.xlu0 %1480, %v64
  %v1482 = vpop.permute.xlu0 %1481
  %1483 = vset.pattern.permute.xlu0 6
  %1484 = vperm.xlu0 %1483, %v65
  %v1485 = vpop.permute.xlu0 %1484
  %1486 = vset.pattern.permute.xlu0 6
  %1487 = vperm.xlu0 %1486, %v66
  %v1488 = vpop.permute.xlu0 %1487
  %1489 = vset.pattern.permute.xlu0 6
  %1490 = vperm.xlu0 %1489, %v67
  %v1491 = vpop.permute.xlu0 %1490
  %1492 = vset.pattern.permute.xlu0 6
  %1493 = vperm.xlu0 %1492, %v68
  %v1494 = vpop.permute.xlu0 %1493
  %1495 = vset.pattern.permute.xlu0 6
  %1496 = vperm.xlu0 %1495, %v69
  %v1497 = vpop.permute.xlu0 %1496
  %1498 = vset.pattern.permute.xlu0 6
  %1499 = vperm.xlu0 %1498, %v70
  %v1500 = vpop.permute.xlu0 %1499
  %1501 = vset.pattern.permute.xlu0 6
  %1502 = vperm.xlu0 %1501, %v71
  %v1503 = vpop.permute.xlu0 %1502
  %1504 = vset.pattern.permute.xlu0 6
  %1505 = vperm.xlu0 %1504, %v72
  %v1506 = vpop.permute.xlu0 %1505
  %1507 = vset.pattern.permute.xlu0 6
  %1508 = vperm.xlu0 %1507, %v73
  %v1509 = vpop.permute.xlu0 %1508
  %1510 = vset.pattern.permute.xlu0 6
  %1511 = vperm.xlu0 %1510, %v74
  %v1512 = vpop.permute.xlu0 %1511
  %1513 = vset.pattern.permute.xlu0 6
  %1514 = vperm.xlu0 %1513, %v75
  %v1515 = vpop.permute.xlu0 %1514
  %vm1516 = vcmp.eq.s32.totalorder %v43, %v1422
  %vm1517 = vcmp.eq.s32.totalorder %v43, %v1425
  %vm1518 = vcmp.eq.s32.totalorder %v43, %v1428
  %vm1519 = vcmp.eq.s32.totalorder %v43, %v1431
  %vm1520 = vcmp.eq.s32.totalorder %v43, %v1434
  %vm1521 = vcmp.eq.s32.totalorder %v43, %v1437
  %vm1522 = vcmp.eq.s32.totalorder %v43, %v1440
  %vm1523 = vcmp.eq.s32.totalorder %v43, %v1443
  %vm1524 = vcmp.eq.s32.totalorder %v43, %v1446
  %vm1525 = vcmp.eq.s32.totalorder %v43, %v1449
  %vm1526 = vcmp.eq.s32.totalorder %v43, %v1452
  %vm1527 = vcmp.eq.s32.totalorder %v43, %v1455
  %vm1528 = vcmp.eq.s32.totalorder %v43, %v1458
  %vm1529 = vcmp.eq.s32.totalorder %v43, %v1461
  %vm1530 = vcmp.eq.s32.totalorder %v43, %v1464
  %vm1531 = vcmp.eq.s32.totalorder %v43, %v1467
  %vm1532 = vcmp.eq.s32.totalorder %v43, %v1470
  %vm1533 = vcmp.eq.s32.totalorder %v43, %v1473
  %vm1534 = vcmp.eq.s32.totalorder %v43, %v1476
  %vm1535 = vcmp.eq.s32.totalorder %v43, %v1479
  %vm1536 = vcmp.eq.s32.totalorder %v43, %v1482
  %vm1537 = vcmp.eq.s32.totalorder %v43, %v1485
  %vm1538 = vcmp.eq.s32.totalorder %v43, %v1488
  %vm1539 = vcmp.eq.s32.totalorder %v43, %v1491
  %vm1540 = vcmp.eq.s32.totalorder %v43, %v1494
  %vm1541 = vcmp.eq.s32.totalorder %v43, %v1497
  %vm1542 = vcmp.eq.s32.totalorder %v43, %v1500
  %vm1543 = vcmp.eq.s32.totalorder %v43, %v1503
  %vm1544 = vcmp.eq.s32.totalorder %v43, %v1506
  %vm1545 = vcmp.eq.s32.totalorder %v43, %v1509
  %vm1546 = vcmp.eq.s32.totalorder %v43, %v1512
  %vm1547 = vcmp.eq.s32.totalorder %v43, %v1515
  %v1548 = vsel %vm1516, 1, 0
  %v1549 = vsel %vm1517, 1, 0
  %v1550 = vsel %vm1518, 1, 0
  %v1551 = vsel %vm1519, 1, 0
  %v1552 = vsel %vm1520, 1, 0
  %v1553 = vsel %vm1521, 1, 0
  %v1554 = vsel %vm1522, 1, 0
  %v1555 = vsel %vm1523, 1, 0
  %v1556 = vsel %vm1524, 1, 0
  %v1557 = vsel %vm1525, 1, 0
  %v1558 = vsel %vm1526, 1, 0
  %v1559 = vsel %vm1527, 1, 0
  %v1560 = vsel %vm1528, 1, 0
  %v1561 = vsel %vm1529, 1, 0
  %v1562 = vsel %vm1530, 1, 0
  %v1563 = vsel %vm1531, 1, 0
  %v1564 = vsel %vm1532, 1, 0
  %v1565 = vsel %vm1533, 1, 0
  %v1566 = vsel %vm1534, 1, 0
  %v1567 = vsel %vm1535, 1, 0
  %v1568 = vsel %vm1536, 1, 0
  %v1569 = vsel %vm1537, 1, 0
  %v1570 = vsel %vm1538, 1, 0
  %v1571 = vsel %vm1539, 1, 0
  %v1572 = vsel %vm1540, 1, 0
  %v1573 = vsel %vm1541, 1, 0
  %v1574 = vsel %vm1542, 1, 0
  %v1575 = vsel %vm1543, 1, 0
  %v1576 = vsel %vm1544, 1, 0
  %v1577 = vsel %vm1545, 1, 0
  %v1578 = vsel %vm1546, 1, 0
  %v1579 = vsel %vm1547, 1, 0
  %v1580 = vcvt.s32.f32 %v1548
  %v1581 = vcvt.s32.f32 %v1549
  %v1582 = vcvt.s32.f32 %v1550
  %v1583 = vcvt.s32.f32 %v1551
  %v1584 = vcvt.s32.f32 %v1552
  %v1585 = vcvt.s32.f32 %v1553
  %v1586 = vcvt.s32.f32 %v1554
  %v1587 = vcvt.s32.f32 %v1555
  %v1588 = vcvt.s32.f32 %v1556
  %v1589 = vcvt.s32.f32 %v1557
  %v1590 = vcvt.s32.f32 %v1558
  %v1591 = vcvt.s32.f32 %v1559
  %v1592 = vcvt.s32.f32 %v1560
  %v1593 = vcvt.s32.f32 %v1561
  %v1594 = vcvt.s32.f32 %v1562
  %v1595 = vcvt.s32.f32 %v1563
  %v1596 = vcvt.s32.f32 %v1564
  %v1597 = vcvt.s32.f32 %v1565
  %v1598 = vcvt.s32.f32 %v1566
  %v1599 = vcvt.s32.f32 %v1567
  %v1600 = vcvt.s32.f32 %v1568
  %v1601 = vcvt.s32.f32 %v1569
  %v1602 = vcvt.s32.f32 %v1570
  %v1603 = vcvt.s32.f32 %v1571
  %v1604 = vcvt.s32.f32 %v1572
  %v1605 = vcvt.s32.f32 %v1573
  %v1606 = vcvt.s32.f32 %v1574
  %v1607 = vcvt.s32.f32 %v1575
  %v1608 = vcvt.s32.f32 %v1576
  %v1609 = vcvt.s32.f32 %v1577
  %v1610 = vcvt.s32.f32 %v1578
  %v1611 = vcvt.s32.f32 %v1579
  %v1612 = vadd.f32 %v1388, %v1580
  %v1613 = vadd.f32 %v1389, %v1581
  %v1614 = vadd.f32 %v1390, %v1582
  %v1615 = vadd.f32 %v1391, %v1583
  %v1616 = vadd.f32 %v1392, %v1584
  %v1617 = vadd.f32 %v1393, %v1585
  %v1618 = vadd.f32 %v1394, %v1586
  %v1619 = vadd.f32 %v1395, %v1587
  %v1620 = vadd.f32 %v1396, %v1588
  %v1621 = vadd.f32 %v1397, %v1589
  %v1622 = vadd.f32 %v1398, %v1590
  %v1623 = vadd.f32 %v1399, %v1591
  %v1624 = vadd.f32 %v1400, %v1592
  %v1625 = vadd.f32 %v1401, %v1593
  %v1626 = vadd.f32 %v1402, %v1594
  %v1627 = vadd.f32 %v1403, %v1595
  %v1628 = vadd.f32 %v1404, %v1596
  %v1629 = vadd.f32 %v1405, %v1597
  %v1630 = vadd.f32 %v1406, %v1598
  %v1631 = vadd.f32 %v1407, %v1599
  %v1632 = vadd.f32 %v1408, %v1600
  %v1633 = vadd.f32 %v1409, %v1601
  %v1634 = vadd.f32 %v1410, %v1602
  %v1635 = vadd.f32 %v1411, %v1603
  %v1636 = vadd.f32 %v1412, %v1604
  %v1637 = vadd.f32 %v1413, %v1605
  %v1638 = vadd.f32 %v1414, %v1606
  %v1639 = vadd.f32 %v1415, %v1607
  %v1640 = vadd.f32 %v1416, %v1608
  %v1641 = vadd.f32 %v1417, %v1609
  %v1642 = vadd.f32 %v1418, %v1610
  %v1643 = vadd.f32 %v1419, %v1611
  %1644 = vset.pattern.permute.xlu0 7
  %1645 = vperm.xlu0 %1644, %v44
  %v1646 = vpop.permute.xlu0 %1645
  %1647 = vset.pattern.permute.xlu0 7
  %1648 = vperm.xlu0 %1647, %v45
  %v1649 = vpop.permute.xlu0 %1648
  %1650 = vset.pattern.permute.xlu0 7
  %1651 = vperm.xlu0 %1650, %v46
  %v1652 = vpop.permute.xlu0 %1651
  %1653 = vset.pattern.permute.xlu0 7
  %1654 = vperm.xlu0 %1653, %v47
  %v1655 = vpop.permute.xlu0 %1654
  %1656 = vset.pattern.permute.xlu0 7
  %1657 = vperm.xlu0 %1656, %v48
  %v1658 = vpop.permute.xlu0 %1657
  %1659 = vset.pattern.permute.xlu0 7
  %1660 = vperm.xlu0 %1659, %v49
  %v1661 = vpop.permute.xlu0 %1660
  %1662 = vset.pattern.permute.xlu0 7
  %1663 = vperm.xlu0 %1662, %v50
  %v1664 = vpop.permute.xlu0 %1663
  %1665 = vset.pattern.permute.xlu0 7
  %1666 = vperm.xlu0 %1665, %v51
  %v1667 = vpop.permute.xlu0 %1666
  %1668 = vset.pattern.permute.xlu0 7
  %1669 = vperm.xlu0 %1668, %v52
  %v1670 = vpop.permute.xlu0 %1669
  %1671 = vset.pattern.permute.xlu0 7
  %1672 = vperm.xlu0 %1671, %v53
  %v1673 = vpop.permute.xlu0 %1672
  %1674 = vset.pattern.permute.xlu0 7
  %1675 = vperm.xlu0 %1674, %v54
  %v1676 = vpop.permute.xlu0 %1675
  %1677 = vset.pattern.permute.xlu0 7
  %1678 = vperm.xlu0 %1677, %v55
  %v1679 = vpop.permute.xlu0 %1678
  %1680 = vset.pattern.permute.xlu0 7
  %1681 = vperm.xlu0 %1680, %v56
  %v1682 = vpop.permute.xlu0 %1681
  %1683 = vset.pattern.permute.xlu0 7
  %1684 = vperm.xlu0 %1683, %v57
  %v1685 = vpop.permute.xlu0 %1684
  %1686 = vset.pattern.permute.xlu0 7
  %1687 = vperm.xlu0 %1686, %v58
  %v1688 = vpop.permute.xlu0 %1687
  %1689 = vset.pattern.permute.xlu0 7
  %1690 = vperm.xlu0 %1689, %v59
  %v1691 = vpop.permute.xlu0 %1690
  %1692 = vset.pattern.permute.xlu0 7
  %1693 = vperm.xlu0 %1692, %v60
  %v1694 = vpop.permute.xlu0 %1693
  %1695 = vset.pattern.permute.xlu0 7
  %1696 = vperm.xlu0 %1695, %v61
  %v1697 = vpop.permute.xlu0 %1696
  %1698 = vset.pattern.permute.xlu0 7
  %1699 = vperm.xlu0 %1698, %v62
  %v1700 = vpop.permute.xlu0 %1699
  %1701 = vset.pattern.permute.xlu0 7
  %1702 = vperm.xlu0 %1701, %v63
  %v1703 = vpop.permute.xlu0 %1702
  %1704 = vset.pattern.permute.xlu0 7
  %1705 = vperm.xlu0 %1704, %v64
  %v1706 = vpop.permute.xlu0 %1705
  %1707 = vset.pattern.permute.xlu0 7
  %1708 = vperm.xlu0 %1707, %v65
  %v1709 = vpop.permute.xlu0 %1708
  %1710 = vset.pattern.permute.xlu0 7
  %1711 = vperm.xlu0 %1710, %v66
  %v1712 = vpop.permute.xlu0 %1711
  %1713 = vset.pattern.permute.xlu0 7
  %1714 = vperm.xlu0 %1713, %v67
  %v1715 = vpop.permute.xlu0 %1714
  %1716 = vset.pattern.permute.xlu0 7
  %1717 = vperm.xlu0 %1716, %v68
  %v1718 = vpop.permute.xlu0 %1717
  %1719 = vset.pattern.permute.xlu0 7
  %1720 = vperm.xlu0 %1719, %v69
  %v1721 = vpop.permute.xlu0 %1720
  %1722 = vset.pattern.permute.xlu0 7
  %1723 = vperm.xlu0 %1722, %v70
  %v1724 = vpop.permute.xlu0 %1723
  %1725 = vset.pattern.permute.xlu0 7
  %1726 = vperm.xlu0 %1725, %v71
  %v1727 = vpop.permute.xlu0 %1726
  %1728 = vset.pattern.permute.xlu0 7
  %1729 = vperm.xlu0 %1728, %v72
  %v1730 = vpop.permute.xlu0 %1729
  %1731 = vset.pattern.permute.xlu0 7
  %1732 = vperm.xlu0 %1731, %v73
  %v1733 = vpop.permute.xlu0 %1732
  %1734 = vset.pattern.permute.xlu0 7
  %1735 = vperm.xlu0 %1734, %v74
  %v1736 = vpop.permute.xlu0 %1735
  %1737 = vset.pattern.permute.xlu0 7
  %1738 = vperm.xlu0 %1737, %v75
  %v1739 = vpop.permute.xlu0 %1738
  %vm1740 = vcmp.eq.s32.totalorder %v43, %v1646
  %vm1741 = vcmp.eq.s32.totalorder %v43, %v1649
  %vm1742 = vcmp.eq.s32.totalorder %v43, %v1652
  %vm1743 = vcmp.eq.s32.totalorder %v43, %v1655
  %vm1744 = vcmp.eq.s32.totalorder %v43, %v1658
  %vm1745 = vcmp.eq.s32.totalorder %v43, %v1661
  %vm1746 = vcmp.eq.s32.totalorder %v43, %v1664
  %vm1747 = vcmp.eq.s32.totalorder %v43, %v1667
  %vm1748 = vcmp.eq.s32.totalorder %v43, %v1670
  %vm1749 = vcmp.eq.s32.totalorder %v43, %v1673
  %vm1750 = vcmp.eq.s32.totalorder %v43, %v1676
  %vm1751 = vcmp.eq.s32.totalorder %v43, %v1679
  %vm1752 = vcmp.eq.s32.totalorder %v43, %v1682
  %vm1753 = vcmp.eq.s32.totalorder %v43, %v1685
  %vm1754 = vcmp.eq.s32.totalorder %v43, %v1688
  %vm1755 = vcmp.eq.s32.totalorder %v43, %v1691
  %vm1756 = vcmp.eq.s32.totalorder %v43, %v1694
  %vm1757 = vcmp.eq.s32.totalorder %v43, %v1697
  %vm1758 = vcmp.eq.s32.totalorder %v43, %v1700
  %vm1759 = vcmp.eq.s32.totalorder %v43, %v1703
  %vm1760 = vcmp.eq.s32.totalorder %v43, %v1706
  %vm1761 = vcmp.eq.s32.totalorder %v43, %v1709
  %vm1762 = vcmp.eq.s32.totalorder %v43, %v1712
  %vm1763 = vcmp.eq.s32.totalorder %v43, %v1715
  %vm1764 = vcmp.eq.s32.totalorder %v43, %v1718
  %vm1765 = vcmp.eq.s32.totalorder %v43, %v1721
  %vm1766 = vcmp.eq.s32.totalorder %v43, %v1724
  %vm1767 = vcmp.eq.s32.totalorder %v43, %v1727
  %vm1768 = vcmp.eq.s32.totalorder %v43, %v1730
  %vm1769 = vcmp.eq.s32.totalorder %v43, %v1733
  %vm1770 = vcmp.eq.s32.totalorder %v43, %v1736
  %vm1771 = vcmp.eq.s32.totalorder %v43, %v1739
  %v1772 = vsel %vm1740, 1, 0
  %v1773 = vsel %vm1741, 1, 0
  %v1774 = vsel %vm1742, 1, 0
  %v1775 = vsel %vm1743, 1, 0
  %v1776 = vsel %vm1744, 1, 0
  %v1777 = vsel %vm1745, 1, 0
  %v1778 = vsel %vm1746, 1, 0
  %v1779 = vsel %vm1747, 1, 0
  %v1780 = vsel %vm1748, 1, 0
  %v1781 = vsel %vm1749, 1, 0
  %v1782 = vsel %vm1750, 1, 0
  %v1783 = vsel %vm1751, 1, 0
  %v1784 = vsel %vm1752, 1, 0
  %v1785 = vsel %vm1753, 1, 0
  %v1786 = vsel %vm1754, 1, 0
  %v1787 = vsel %vm1755, 1, 0
  %v1788 = vsel %vm1756, 1, 0
  %v1789 = vsel %vm1757, 1, 0
  %v1790 = vsel %vm1758, 1, 0
  %v1791 = vsel %vm1759, 1, 0
  %v1792 = vsel %vm1760, 1, 0
  %v1793 = vsel %vm1761, 1, 0
  %v1794 = vsel %vm1762, 1, 0
  %v1795 = vsel %vm1763, 1, 0
  %v1796 = vsel %vm1764, 1, 0
  %v1797 = vsel %vm1765, 1, 0
  %v1798 = vsel %vm1766, 1, 0
  %v1799 = vsel %vm1767, 1, 0
  %v1800 = vsel %vm1768, 1, 0
  %v1801 = vsel %vm1769, 1, 0
  %v1802 = vsel %vm1770, 1, 0
  %v1803 = vsel %vm1771, 1, 0
  %v1804 = vcvt.s32.f32 %v1772
  %v1805 = vcvt.s32.f32 %v1773
  %v1806 = vcvt.s32.f32 %v1774
  %v1807 = vcvt.s32.f32 %v1775
  %v1808 = vcvt.s32.f32 %v1776
  %v1809 = vcvt.s32.f32 %v1777
  %v1810 = vcvt.s32.f32 %v1778
  %v1811 = vcvt.s32.f32 %v1779
  %v1812 = vcvt.s32.f32 %v1780
  %v1813 = vcvt.s32.f32 %v1781
  %v1814 = vcvt.s32.f32 %v1782
  %v1815 = vcvt.s32.f32 %v1783
  %v1816 = vcvt.s32.f32 %v1784
  %v1817 = vcvt.s32.f32 %v1785
  %v1818 = vcvt.s32.f32 %v1786
  %v1819 = vcvt.s32.f32 %v1787
  %v1820 = vcvt.s32.f32 %v1788
  %v1821 = vcvt.s32.f32 %v1789
  %v1822 = vcvt.s32.f32 %v1790
  %v1823 = vcvt.s32.f32 %v1791
  %v1824 = vcvt.s32.f32 %v1792
  %v1825 = vcvt.s32.f32 %v1793
  %v1826 = vcvt.s32.f32 %v1794
  %v1827 = vcvt.s32.f32 %v1795
  %v1828 = vcvt.s32.f32 %v1796
  %v1829 = vcvt.s32.f32 %v1797
  %v1830 = vcvt.s32.f32 %v1798
  %v1831 = vcvt.s32.f32 %v1799
  %v1832 = vcvt.s32.f32 %v1800
  %v1833 = vcvt.s32.f32 %v1801
  %v1834 = vcvt.s32.f32 %v1802
  %v1835 = vcvt.s32.f32 %v1803
  %v1836 = vadd.f32 %v1612, %v1804
  %v1837 = vadd.f32 %v1613, %v1805
  %v1838 = vadd.f32 %v1614, %v1806
  %v1839 = vadd.f32 %v1615, %v1807
  %v1840 = vadd.f32 %v1616, %v1808
  %v1841 = vadd.f32 %v1617, %v1809
  %v1842 = vadd.f32 %v1618, %v1810
  %v1843 = vadd.f32 %v1619, %v1811
  %v1844 = vadd.f32 %v1620, %v1812
  %v1845 = vadd.f32 %v1621, %v1813
  %v1846 = vadd.f32 %v1622, %v1814
  %v1847 = vadd.f32 %v1623, %v1815
  %v1848 = vadd.f32 %v1624, %v1816
  %v1849 = vadd.f32 %v1625, %v1817
  %v1850 = vadd.f32 %v1626, %v1818
  %v1851 = vadd.f32 %v1627, %v1819
  %v1852 = vadd.f32 %v1628, %v1820
  %v1853 = vadd.f32 %v1629, %v1821
  %v1854 = vadd.f32 %v1630, %v1822
  %v1855 = vadd.f32 %v1631, %v1823
  %v1856 = vadd.f32 %v1632, %v1824
  %v1857 = vadd.f32 %v1633, %v1825
  %v1858 = vadd.f32 %v1634, %v1826
  %v1859 = vadd.f32 %v1635, %v1827
  %v1860 = vadd.f32 %v1636, %v1828
  %v1861 = vadd.f32 %v1637, %v1829
  %v1862 = vadd.f32 %v1638, %v1830
  %v1863 = vadd.f32 %v1639, %v1831
  %v1864 = vadd.f32 %v1640, %v1832
  %v1865 = vadd.f32 %v1641, %v1833
  %v1866 = vadd.f32 %v1642, %v1834
  %v1867 = vadd.f32 %v1643, %v1835
  %v1868 = vld [vmem:[%s3] sm:$0xff]
  %v1869 = vld [vmem:[%s3 + $0x8] sm:$0xff]
  %v1870 = vld [vmem:[%s3 + $0x10] sm:$0xff]
  %v1871 = vld [vmem:[%s3 + $0x18] sm:$0xff]
  %v1872 = vld [vmem:[%s3 + $0x20] sm:$0xff]
  %v1873 = vld [vmem:[%s3 + $0x28] sm:$0xff]
  %v1874 = vld [vmem:[%s3 + $0x30] sm:$0xff]
  %v1875 = vld [vmem:[%s3 + $0x38] sm:$0xff]
  %v1876 = vld [vmem:[%s3 + $0x40] sm:$0xff]
  %v1877 = vld [vmem:[%s3 + $0x48] sm:$0xff]
  %v1878 = vld [vmem:[%s3 + $0x50] sm:$0xff]
  %v1879 = vld [vmem:[%s3 + $0x58] sm:$0xff]
  %v1880 = vld [vmem:[%s3 + $0x60] sm:$0xff]
  %v1881 = vld [vmem:[%s3 + $0x68] sm:$0xff]
  %v1882 = vld [vmem:[%s3 + $0x70] sm:$0xff]
  %v1883 = vld [vmem:[%s3 + $0x78] sm:$0xff]
  %v1884 = vld [vmem:[%s3 + $0x80] sm:$0xff]
  %v1885 = vld [vmem:[%s3 + $0x88] sm:$0xff]
  %v1886 = vld [vmem:[%s3 + $0x90] sm:$0xff]
  %v1887 = vld [vmem:[%s3 + $0x98] sm:$0xff]
  %v1888 = vld [vmem:[%s3 + $0xa0] sm:$0xff]
  %v1889 = vld [vmem:[%s3 + $0xa8] sm:$0xff]
  %v1890 = vld [vmem:[%s3 + $0xb0] sm:$0xff]
  %v1891 = vld [vmem:[%s3 + $0xb8] sm:$0xff]
  %v1892 = vld [vmem:[%s3 + $0xc0] sm:$0xff]
  %v1893 = vld [vmem:[%s3 + $0xc8] sm:$0xff]
  %v1894 = vld [vmem:[%s3 + $0xd0] sm:$0xff]
  %v1895 = vld [vmem:[%s3 + $0xd8] sm:$0xff]
  %v1896 = vld [vmem:[%s3 + $0xe0] sm:$0xff]
  %v1897 = vld [vmem:[%s3 + $0xe8] sm:$0xff]
  %v1898 = vld [vmem:[%s3 + $0xf0] sm:$0xff]
  %v1899 = vld [vmem:[%s3 + $0xf8] sm:$0xff]
  %v1900 = vadd.s32 %v1868, 32
  %v1901 = vadd.s32 %v1869, 32
  %v1902 = vadd.s32 %v1870, 32
  %v1903 = vadd.s32 %v1871, 32
  %v1904 = vadd.s32 %v1872, 32
  %v1905 = vadd.s32 %v1873, 32
  %v1906 = vadd.s32 %v1874, 32
  %v1907 = vadd.s32 %v1875, 32
  %v1908 = vadd.s32 %v1876, 32
  %v1909 = vadd.s32 %v1877, 32
  %v1910 = vadd.s32 %v1878, 32
  %v1911 = vadd.s32 %v1879, 32
  %v1912 = vadd.s32 %v1880, 32
  %v1913 = vadd.s32 %v1881, 32
  %v1914 = vadd.s32 %v1882, 32
  %v1915 = vadd.s32 %v1883, 32
  %v1916 = vadd.s32 %v1884, 32
  %v1917 = vadd.s32 %v1885, 32
  %v1918 = vadd.s32 %v1886, 32
  %v1919 = vadd.s32 %v1887, 32
  %v1920 = vadd.s32 %v1888, 32
  %v1921 = vadd.s32 %v1889, 32
  %v1922 = vadd.s32 %v1890, 32
  %v1923 = vadd.s32 %v1891, 32
  %v1924 = vadd.s32 %v1892, 32
  %v1925 = vadd.s32 %v1893, 32
  %v1926 = vadd.s32 %v1894, 32
  %v1927 = vadd.s32 %v1895, 32
  %v1928 = vadd.s32 %v1896, 32
  %v1929 = vadd.s32 %v1897, 32
  %v1930 = vadd.s32 %v1898, 32
  %v1931 = vadd.s32 %v1899, 32
  %1932 = vset.pattern.permute.xlu0 0
  %1933 = vperm.xlu0 %1932, %v1900
  %v1934 = vpop.permute.xlu0 %1933
  %1935 = vset.pattern.permute.xlu0 0
  %1936 = vperm.xlu0 %1935, %v1901
  %v1937 = vpop.permute.xlu0 %1936
  %1938 = vset.pattern.permute.xlu0 0
  %1939 = vperm.xlu0 %1938, %v1902
  %v1940 = vpop.permute.xlu0 %1939
  %1941 = vset.pattern.permute.xlu0 0
  %1942 = vperm.xlu0 %1941, %v1903
  %v1943 = vpop.permute.xlu0 %1942
  %1944 = vset.pattern.permute.xlu0 0
  %1945 = vperm.xlu0 %1944, %v1904
  %v1946 = vpop.permute.xlu0 %1945
  %1947 = vset.pattern.permute.xlu0 0
  %1948 = vperm.xlu0 %1947, %v1905
  %v1949 = vpop.permute.xlu0 %1948
  %1950 = vset.pattern.permute.xlu0 0
  %1951 = vperm.xlu0 %1950, %v1906
  %v1952 = vpop.permute.xlu0 %1951
  %1953 = vset.pattern.permute.xlu0 0
  %1954 = vperm.xlu0 %1953, %v1907
  %v1955 = vpop.permute.xlu0 %1954
  %1956 = vset.pattern.permute.xlu0 0
  %1957 = vperm.xlu0 %1956, %v1908
  %v1958 = vpop.permute.xlu0 %1957
  %1959 = vset.pattern.permute.xlu0 0
  %1960 = vperm.xlu0 %1959, %v1909
  %v1961 = vpop.permute.xlu0 %1960
  %1962 = vset.pattern.permute.xlu0 0
  %1963 = vperm.xlu0 %1962, %v1910
  %v1964 = vpop.permute.xlu0 %1963
  %1965 = vset.pattern.permute.xlu0 0
  %1966 = vperm.xlu0 %1965, %v1911
  %v1967 = vpop.permute.xlu0 %1966
  %1968 = vset.pattern.permute.xlu0 0
  %1969 = vperm.xlu0 %1968, %v1912
  %v1970 = vpop.permute.xlu0 %1969
  %1971 = vset.pattern.permute.xlu0 0
  %1972 = vperm.xlu0 %1971, %v1913
  %v1973 = vpop.permute.xlu0 %1972
  %1974 = vset.pattern.permute.xlu0 0
  %1975 = vperm.xlu0 %1974, %v1914
  %v1976 = vpop.permute.xlu0 %1975
  %1977 = vset.pattern.permute.xlu0 0
  %1978 = vperm.xlu0 %1977, %v1915
  %v1979 = vpop.permute.xlu0 %1978
  %1980 = vset.pattern.permute.xlu0 0
  %1981 = vperm.xlu0 %1980, %v1916
  %v1982 = vpop.permute.xlu0 %1981
  %1983 = vset.pattern.permute.xlu0 0
  %1984 = vperm.xlu0 %1983, %v1917
  %v1985 = vpop.permute.xlu0 %1984
  %1986 = vset.pattern.permute.xlu0 0
  %1987 = vperm.xlu0 %1986, %v1918
  %v1988 = vpop.permute.xlu0 %1987
  %1989 = vset.pattern.permute.xlu0 0
  %1990 = vperm.xlu0 %1989, %v1919
  %v1991 = vpop.permute.xlu0 %1990
  %1992 = vset.pattern.permute.xlu0 0
  %1993 = vperm.xlu0 %1992, %v1920
  %v1994 = vpop.permute.xlu0 %1993
  %1995 = vset.pattern.permute.xlu0 0
  %1996 = vperm.xlu0 %1995, %v1921
  %v1997 = vpop.permute.xlu0 %1996
  %1998 = vset.pattern.permute.xlu0 0
  %1999 = vperm.xlu0 %1998, %v1922
  %v2000 = vpop.permute.xlu0 %1999
  %2001 = vset.pattern.permute.xlu0 0
  %2002 = vperm.xlu0 %2001, %v1923
  %v2003 = vpop.permute.xlu0 %2002
  %2004 = vset.pattern.permute.xlu0 0
  %2005 = vperm.xlu0 %2004, %v1924
  %v2006 = vpop.permute.xlu0 %2005
  %2007 = vset.pattern.permute.xlu0 0
  %2008 = vperm.xlu0 %2007, %v1925
  %v2009 = vpop.permute.xlu0 %2008
  %2010 = vset.pattern.permute.xlu0 0
  %2011 = vperm.xlu0 %2010, %v1926
  %v2012 = vpop.permute.xlu0 %2011
  %2013 = vset.pattern.permute.xlu0 0
  %2014 = vperm.xlu0 %2013, %v1927
  %v2015 = vpop.permute.xlu0 %2014
  %2016 = vset.pattern.permute.xlu0 0
  %2017 = vperm.xlu0 %2016, %v1928
  %v2018 = vpop.permute.xlu0 %2017
  %2019 = vset.pattern.permute.xlu0 0
  %2020 = vperm.xlu0 %2019, %v1929
  %v2021 = vpop.permute.xlu0 %2020
  %2022 = vset.pattern.permute.xlu0 0
  %2023 = vperm.xlu0 %2022, %v1930
  %v2024 = vpop.permute.xlu0 %2023
  %2025 = vset.pattern.permute.xlu0 0
  %2026 = vperm.xlu0 %2025, %v1931
  %v2027 = vpop.permute.xlu0 %2026
  %vm2028 = vcmp.eq.s32.totalorder %v43, %v1934
  %vm2029 = vcmp.eq.s32.totalorder %v43, %v1937
  %vm2030 = vcmp.eq.s32.totalorder %v43, %v1940
  %vm2031 = vcmp.eq.s32.totalorder %v43, %v1943
  %vm2032 = vcmp.eq.s32.totalorder %v43, %v1946
  %vm2033 = vcmp.eq.s32.totalorder %v43, %v1949
  %vm2034 = vcmp.eq.s32.totalorder %v43, %v1952
  %vm2035 = vcmp.eq.s32.totalorder %v43, %v1955
  %vm2036 = vcmp.eq.s32.totalorder %v43, %v1958
  %vm2037 = vcmp.eq.s32.totalorder %v43, %v1961
  %vm2038 = vcmp.eq.s32.totalorder %v43, %v1964
  %vm2039 = vcmp.eq.s32.totalorder %v43, %v1967
  %vm2040 = vcmp.eq.s32.totalorder %v43, %v1970
  %vm2041 = vcmp.eq.s32.totalorder %v43, %v1973
  %vm2042 = vcmp.eq.s32.totalorder %v43, %v1976
  %vm2043 = vcmp.eq.s32.totalorder %v43, %v1979
  %vm2044 = vcmp.eq.s32.totalorder %v43, %v1982
  %vm2045 = vcmp.eq.s32.totalorder %v43, %v1985
  %vm2046 = vcmp.eq.s32.totalorder %v43, %v1988
  %vm2047 = vcmp.eq.s32.totalorder %v43, %v1991
  %vm2048 = vcmp.eq.s32.totalorder %v43, %v1994
  %vm2049 = vcmp.eq.s32.totalorder %v43, %v1997
  %vm2050 = vcmp.eq.s32.totalorder %v43, %v2000
  %vm2051 = vcmp.eq.s32.totalorder %v43, %v2003
  %vm2052 = vcmp.eq.s32.totalorder %v43, %v2006
  %vm2053 = vcmp.eq.s32.totalorder %v43, %v2009
  %vm2054 = vcmp.eq.s32.totalorder %v43, %v2012
  %vm2055 = vcmp.eq.s32.totalorder %v43, %v2015
  %vm2056 = vcmp.eq.s32.totalorder %v43, %v2018
  %vm2057 = vcmp.eq.s32.totalorder %v43, %v2021
  %vm2058 = vcmp.eq.s32.totalorder %v43, %v2024
  %vm2059 = vcmp.eq.s32.totalorder %v43, %v2027
  %v2060 = vsel %vm2028, 1, 0
  %v2061 = vsel %vm2029, 1, 0
  %v2062 = vsel %vm2030, 1, 0
  %v2063 = vsel %vm2031, 1, 0
  %v2064 = vsel %vm2032, 1, 0
  %v2065 = vsel %vm2033, 1, 0
  %v2066 = vsel %vm2034, 1, 0
  %v2067 = vsel %vm2035, 1, 0
  %v2068 = vsel %vm2036, 1, 0
  %v2069 = vsel %vm2037, 1, 0
  %v2070 = vsel %vm2038, 1, 0
  %v2071 = vsel %vm2039, 1, 0
  %v2072 = vsel %vm2040, 1, 0
  %v2073 = vsel %vm2041, 1, 0
  %v2074 = vsel %vm2042, 1, 0
  %v2075 = vsel %vm2043, 1, 0
  %v2076 = vsel %vm2044, 1, 0
  %v2077 = vsel %vm2045, 1, 0
  %v2078 = vsel %vm2046, 1, 0
  %v2079 = vsel %vm2047, 1, 0
  %v2080 = vsel %vm2048, 1, 0
  %v2081 = vsel %vm2049, 1, 0
  %v2082 = vsel %vm2050, 1, 0
  %v2083 = vsel %vm2051, 1, 0
  %v2084 = vsel %vm2052, 1, 0
  %v2085 = vsel %vm2053, 1, 0
  %v2086 = vsel %vm2054, 1, 0
  %v2087 = vsel %vm2055, 1, 0
  %v2088 = vsel %vm2056, 1, 0
  %v2089 = vsel %vm2057, 1, 0
  %v2090 = vsel %vm2058, 1, 0
  %v2091 = vsel %vm2059, 1, 0
  %v2092 = vcvt.s32.f32 %v2060
  %v2093 = vcvt.s32.f32 %v2061
  %v2094 = vcvt.s32.f32 %v2062
  %v2095 = vcvt.s32.f32 %v2063
  %v2096 = vcvt.s32.f32 %v2064
  %v2097 = vcvt.s32.f32 %v2065
  %v2098 = vcvt.s32.f32 %v2066
  %v2099 = vcvt.s32.f32 %v2067
  %v2100 = vcvt.s32.f32 %v2068
  %v2101 = vcvt.s32.f32 %v2069
  %v2102 = vcvt.s32.f32 %v2070
  %v2103 = vcvt.s32.f32 %v2071
  %v2104 = vcvt.s32.f32 %v2072
  %v2105 = vcvt.s32.f32 %v2073
  %v2106 = vcvt.s32.f32 %v2074
  %v2107 = vcvt.s32.f32 %v2075
  %v2108 = vcvt.s32.f32 %v2076
  %v2109 = vcvt.s32.f32 %v2077
  %v2110 = vcvt.s32.f32 %v2078
  %v2111 = vcvt.s32.f32 %v2079
  %v2112 = vcvt.s32.f32 %v2080
  %v2113 = vcvt.s32.f32 %v2081
  %v2114 = vcvt.s32.f32 %v2082
  %v2115 = vcvt.s32.f32 %v2083
  %v2116 = vcvt.s32.f32 %v2084
  %v2117 = vcvt.s32.f32 %v2085
  %v2118 = vcvt.s32.f32 %v2086
  %v2119 = vcvt.s32.f32 %v2087
  %v2120 = vcvt.s32.f32 %v2088
  %v2121 = vcvt.s32.f32 %v2089
  %v2122 = vcvt.s32.f32 %v2090
  %v2123 = vcvt.s32.f32 %v2091
  %v2124 = vadd.f32 %v1836, %v2092
  %v2125 = vadd.f32 %v1837, %v2093
  %v2126 = vadd.f32 %v1838, %v2094
  %v2127 = vadd.f32 %v1839, %v2095
  %v2128 = vadd.f32 %v1840, %v2096
  %v2129 = vadd.f32 %v1841, %v2097
  %v2130 = vadd.f32 %v1842, %v2098
  %v2131 = vadd.f32 %v1843, %v2099
  %v2132 = vadd.f32 %v1844, %v2100
  %v2133 = vadd.f32 %v1845, %v2101
  %v2134 = vadd.f32 %v1846, %v2102
  %v2135 = vadd.f32 %v1847, %v2103
  %v2136 = vadd.f32 %v1848, %v2104
  %v2137 = vadd.f32 %v1849, %v2105
  %v2138 = vadd.f32 %v1850, %v2106
  %v2139 = vadd.f32 %v1851, %v2107
  %v2140 = vadd.f32 %v1852, %v2108
  %v2141 = vadd.f32 %v1853, %v2109
  %v2142 = vadd.f32 %v1854, %v2110
  %v2143 = vadd.f32 %v1855, %v2111
  %v2144 = vadd.f32 %v1856, %v2112
  %v2145 = vadd.f32 %v1857, %v2113
  %v2146 = vadd.f32 %v1858, %v2114
  %v2147 = vadd.f32 %v1859, %v2115
  %v2148 = vadd.f32 %v1860, %v2116
  %v2149 = vadd.f32 %v1861, %v2117
  %v2150 = vadd.f32 %v1862, %v2118
  %v2151 = vadd.f32 %v1863, %v2119
  %v2152 = vadd.f32 %v1864, %v2120
  %v2153 = vadd.f32 %v1865, %v2121
  %v2154 = vadd.f32 %v1866, %v2122
  %v2155 = vadd.f32 %v1867, %v2123
  %v2156 = vpack.c.bf16 %v2125, %v2124
  %v2157 = vpack.c.bf16 %v2127, %v2126
  %v2158 = vpack.c.bf16 %v2129, %v2128
  %v2159 = vpack.c.bf16 %v2131, %v2130
  %v2160 = vpack.c.bf16 %v2133, %v2132
  %v2161 = vpack.c.bf16 %v2135, %v2134
  %v2162 = vpack.c.bf16 %v2137, %v2136
  %v2163 = vpack.c.bf16 %v2139, %v2138
  %v2164 = vpack.c.bf16 %v2141, %v2140
  %v2165 = vpack.c.bf16 %v2143, %v2142
  %v2166 = vpack.c.bf16 %v2145, %v2144
  %v2167 = vpack.c.bf16 %v2147, %v2146
  %v2168 = vpack.c.bf16 %v2149, %v2148
  %v2169 = vpack.c.bf16 %v2151, %v2150
  %v2170 = vpack.c.bf16 %v2153, %v2152
  %v2171 = vpack.c.bf16 %v2155, %v2154
  %v2172 = vld [vmem:[%s4] sm:$0xff]
  %v2173 = vld [vmem:[%s4 + $0x8] sm:$0xff]
  %v2174 = vld [vmem:[%s4 + $0x10] sm:$0xff]
  %v2175 = vld [vmem:[%s4 + $0x18] sm:$0xff]
  %v2176 = vld [vmem:[%s4 + $0x20] sm:$0xff]
  %v2177 = vld [vmem:[%s4 + $0x28] sm:$0xff]
  %v2178 = vld [vmem:[%s4 + $0x30] sm:$0xff]
  %v2179 = vld [vmem:[%s4 + $0x38] sm:$0xff]
  %v2180 = vld [vmem:[%s1] sm:$0xff]
  %v2181 = vld [vmem:[%s1 + $0x8] sm:$0xff]
  %v2182 = vld [vmem:[%s1 + $0x10] sm:$0xff]
  %v2183 = vld [vmem:[%s1 + $0x18] sm:$0xff]
  %v2184 = vld [vmem:[%s1 + $0x20] sm:$0xff]
  %v2185 = vld [vmem:[%s1 + $0x28] sm:$0xff]
  %v2186 = vld [vmem:[%s1 + $0x30] sm:$0xff]
  %v2187 = vld [vmem:[%s1 + $0x38] sm:$0xff]
  %v2188 = vld [vmem:[%s1 + $0x40] sm:$0xff]
  %v2189 = vld [vmem:[%s1 + $0x48] sm:$0xff]
  %v2190 = vld [vmem:[%s1 + $0x50] sm:$0xff]
  %v2191 = vld [vmem:[%s1 + $0x58] sm:$0xff]
  %v2192 = vld [vmem:[%s1 + $0x60] sm:$0xff]
  %v2193 = vld [vmem:[%s1 + $0x68] sm:$0xff]
  %v2194 = vld [vmem:[%s1 + $0x70] sm:$0xff]
  %v2195 = vld [vmem:[%s1 + $0x78] sm:$0xff]
  %v2196 = vld [vmem:[%s1 + $0x80] sm:$0xff]
  %v2197 = vld [vmem:[%s1 + $0x88] sm:$0xff]
  %v2198 = vld [vmem:[%s1 + $0x90] sm:$0xff]
  %v2199 = vld [vmem:[%s1 + $0x98] sm:$0xff]
  %v2200 = vld [vmem:[%s1 + $0xa0] sm:$0xff]
  %v2201 = vld [vmem:[%s1 + $0xa8] sm:$0xff]
  %v2202 = vld [vmem:[%s1 + $0xb0] sm:$0xff]
  %v2203 = vld [vmem:[%s1 + $0xb8] sm:$0xff]
  %v2204 = vld [vmem:[%s1 + $0xc0] sm:$0xff]
  %v2205 = vld [vmem:[%s1 + $0xc8] sm:$0xff]
  %v2206 = vld [vmem:[%s1 + $0xd0] sm:$0xff]
  %v2207 = vld [vmem:[%s1 + $0xd8] sm:$0xff]
  %v2208 = vld [vmem:[%s1 + $0xe0] sm:$0xff]
  %v2209 = vld [vmem:[%s1 + $0xe8] sm:$0xff]
  %v2210 = vld [vmem:[%s1 + $0xf0] sm:$0xff]
  %v2211 = vld [vmem:[%s1 + $0xf8] sm:$0xff]
  %v2212 = vpack.c.bf16 %v2181, %v2180
  %v2213 = vpack.c.bf16 %v2183, %v2182
  %v2214 = vpack.c.bf16 %v2185, %v2184
  %v2215 = vpack.c.bf16 %v2187, %v2186
  %v2216 = vpack.c.bf16 %v2189, %v2188
  %v2217 = vpack.c.bf16 %v2191, %v2190
  %v2218 = vpack.c.bf16 %v2193, %v2192
  %v2219 = vpack.c.bf16 %v2195, %v2194
  %v2220 = vpack.c.bf16 %v2197, %v2196
  %v2221 = vpack.c.bf16 %v2199, %v2198
  %v2222 = vpack.c.bf16 %v2201, %v2200
  %v2223 = vpack.c.bf16 %v2203, %v2202
  %v2224 = vpack.c.bf16 %v2205, %v2204
  %v2225 = vpack.c.bf16 %v2207, %v2206
  %v2226 = vpack.c.bf16 %v2209, %v2208
  %v2227 = vpack.c.bf16 %v2211, %v2210
  %v2228 = vld [vmem:[%s5] sm:$0xff]
  %v2229 = vld [vmem:[%s5 + $0x8] sm:$0x11]
  %v2232 = vunpack.c.l.b16 %v2228
  %v2233 = vunpack.c.h.b16 %v2228
  %v2234 = vunpack.c.l.b16 %v2229
  %v2235 = vunpack.c.h.b16 %v2229
  %v2236 = vpack.c.b16 %v2234, %v2232
  %v2237 = vpack.c.b16 %v2235, %v2233
  %vm2238 = vcmask 80896
  %v2240 = vsel %vm2238, %v2212, 0
  %v2243 = vsel %vm2238, %v2213, 0
  %v2246 = vsel %vm2238, %v2214, 0
  %v2249 = vsel %vm2238, %v2215, 0
  %v2252 = vsel %vm2238, %v2216, 0
  %v2255 = vsel %vm2238, %v2217, 0
  %v2258 = vsel %vm2238, %v2218, 0
  %v2261 = vsel %vm2238, %v2219, 0
  %v2264 = vsel %vm2238, %v2220, 0
  %v2267 = vsel %vm2238, %v2221, 0
  %v2270 = vsel %vm2238, %v2222, 0
  %v2273 = vsel %vm2238, %v2223, 0
  %v2276 = vsel %vm2238, %v2224, 0
  %v2279 = vsel %vm2238, %v2225, 0
  %v2282 = vsel %vm2238, %v2226, 0
  %v2285 = vsel %vm2238, %v2227, 0
  %vm2287 = vcmask 1044480
  %v2289 = vsel %vm2287, %v2236, 0
  %v2292 = vsel %vm2287, %v2237, 0
  %2294 = vmatprep.subr.bf16.mxu0 %v2292
  %2295 = vmatpush1.bf16.msra.mxu0 %v2289
  %2296 = vmatprep.subr.bf16.mxu0 0
  %2297 = vmatpush1.bf16.msra.mxu0 0
  %2298 = vmatprep.subr.bf16.mxu0 0
  %2299 = vmatpush1.bf16.msra.mxu0 0
  %2300 = vmatprep.subr.bf16.mxu0 0
  %2301 = vmatpush1.bf16.msra.mxu0 0
  %2302 = vmatprep.subr.bf16.mxu0 0
  %2303 = vmatpush1.bf16.msra.mxu0 0
  %2304 = vmatprep.subr.bf16.mxu0 0
  %2305 = vmatpush1.bf16.msra.mxu0 0
  %2306 = vmatprep.subr.bf16.mxu0 0
  %2307 = vmatpush1.bf16.msra.mxu0 0
  %2308 = vmatprep.subr.bf16.mxu0 0
  %2309 = vmatpush1.bf16.msra.mxu0 0
  %2310 = vmatprep.subr.bf16.mxu0 0
  %2311 = vmatpush1.bf16.msra.mxu0 0
  %2312 = vmatprep.subr.bf16.mxu0 0
  %2313 = vmatpush1.bf16.msra.mxu0 0
  %2314 = vmatprep.subr.bf16.mxu0 0
  %2315 = vmatpush1.bf16.msra.mxu0 0
  %2316 = vmatprep.subr.bf16.mxu0 0
  %2317 = vmatpush1.bf16.msra.mxu0 0
  %2318 = vmatprep.subr.bf16.mxu0 0
  %2319 = vmatpush1.bf16.msra.mxu0 0
  %2320 = vmatprep.subr.bf16.mxu0 0
  %2321 = vmatpush1.bf16.msra.mxu0 0
  %2322 = vmatprep.subr.bf16.mxu0 0
  %2323 = vmatpush1.bf16.msra.mxu0 0
  %2324 = vmatprep.subr.bf16.mxu0 0
  %2325 = vmatpush1.bf16.msra.mxu0 0
  %2326 = vmatprep.mubr.bf16.mxu0 0
  %2327 = vmatmul.mubr.bf16.gmra.mrb[0].mxu0 %v2240
  %v2328 = vpop.f32.mrb[0].mxu0
  %v2329 = vadd.f32 0.0, %v2328
  %v2330 = vpop.f32.mrb[0].mxu0
  %v2331 = vadd.f32 0.0, %v2330
  %v2332 = vpop.f32.mrb[0].mxu0
  %v2333 = vadd.f32 0.0, %v2332
  %v2334 = vpop.f32.mrb[0].mxu0
  %v2335 = vadd.f32 0.0, %v2334
  %2336 = vmatprep.mubr.bf16.mxu0 0
  %2337 = vmatmul.mubr.bf16.gmra.mrb[0].mxu0 %v2243
  %v2338 = vpop.f32.mrb[0].mxu0
  %v2339 = vadd.f32 0.0, %v2338
  %v2340 = vpop.f32.mrb[0].mxu0
  %v2341 = vadd.f32 0.0, %v2340
  %v2342 = vpop.f32.mrb[0].mxu0
  %v2343 = vadd.f32 0.0, %v2342
  %v2344 = vpop.f32.mrb[0].mxu0
  %v2345 = vadd.f32 0.0, %v2344
  %2346 = vmatprep.mubr.bf16.mxu0 0
  %2347 = vmatmul.mubr.bf16.gmra.mrb[0].mxu0 %v2246
  %v2348 = vpop.f32.mrb[0].mxu0
  %v2349 = vadd.f32 0.0, %v2348
  %v2350 = vpop.f32.mrb[0].mxu0
  %v2351 = vadd.f32 0.0, %v2350
  %v2352 = vpop.f32.mrb[0].mxu0
  %v2353 = vadd.f32 0.0, %v2352
  %v2354 = vpop.f32.mrb[0].mxu0
  %v2355 = vadd.f32 0.0, %v2354
  %2356 = vmatprep.mubr.bf16.mxu0 0
  %2357 = vmatmul.mubr.bf16.gmra.mrb[0].mxu0 %v2249
  %v2358 = vpop.f32.mrb[0].mxu0
  %v2359 = vadd.f32 0.0, %v2358
  %v2360 = vpop.f32.mrb[0].mxu0
  %v2361 = vadd.f32 0.0, %v2360
  %v2362 = vpop.f32.mrb[0].mxu0
  %v2363 = vadd.f32 0.0, %v2362
  %v2364 = vpop.f32.mrb[0].mxu0
  %v2365 = vadd.f32 0.0, %v2364
  %2366 = vmatprep.mubr.bf16.mxu0 0
  %2367 = vmatmul.mubr.bf16.gmra.mrb[0].mxu0 %v2252
  %v2368 = vpop.f32.mrb[0].mxu0
  %v2369 = vadd.f32 0.0, %v2368
  %v2370 = vpop.f32.mrb[0].mxu0
  %v2371 = vadd.f32 0.0, %v2370
  %v2372 = vpop.f32.mrb[0].mxu0
  %v2373 = vadd.f32 0.0, %v2372
  %v2374 = vpop.f32.mrb[0].mxu0
  %v2375 = vadd.f32 0.0, %v2374
  %2376 = vmatprep.mubr.bf16.mxu0 0
  %2377 = vmatmul.mubr.bf16.gmra.mrb[0].mxu0 %v2255
  %v2378 = vpop.f32.mrb[0].mxu0
  %v2379 = vadd.f32 0.0, %v2378
  %v2380 = vpop.f32.mrb[0].mxu0
  %v2381 = vadd.f32 0.0, %v2380
  %v2382 = vpop.f32.mrb[0].mxu0
  %v2383 = vadd.f32 0.0, %v2382
  %v2384 = vpop.f32.mrb[0].mxu0
  %v2385 = vadd.f32 0.0, %v2384
  %2386 = vmatprep.mubr.bf16.mxu0 0
  %2387 = vmatmul.mubr.bf16.gmra.mrb[0].mxu0 %v2258
  %v2388 = vpop.f32.mrb[0].mxu0
  %v2389 = vadd.f32 0.0, %v2388
  %v2390 = vpop.f32.mrb[0].mxu0
  %v2391 = vadd.f32 0.0, %v2390
  %v2392 = vpop.f32.mrb[0].mxu0
  %v2393 = vadd.f32 0.0, %v2392
  %v2394 = vpop.f32.mrb[0].mxu0
  %v2395 = vadd.f32 0.0, %v2394
  %2396 = vmatprep.mubr.bf16.mxu0 0
  %2397 = vmatmul.mubr.bf16.gmra.mrb[0].mxu0 %v2261
  %v2398 = vpop.f32.mrb[0].mxu0
  %v2399 = vadd.f32 0.0, %v2398
  %v2400 = vpop.f32.mrb[0].mxu0
  %v2401 = vadd.f32 0.0, %v2400
  %v2402 = vpop.f32.mrb[0].mxu0
  %v2403 = vadd.f32 0.0, %v2402
  %v2404 = vpop.f32.mrb[0].mxu0
  %v2405 = vadd.f32 0.0, %v2404
  %2406 = vmatprep.mubr.bf16.mxu0 0
  %2407 = vmatmul.mubr.bf16.gmra.mrb[0].mxu0 %v2264
  %v2408 = vpop.f32.mrb[0].mxu0
  %v2409 = vadd.f32 0.0, %v2408
  %v2410 = vpop.f32.mrb[0].mxu0
  %v2411 = vadd.f32 0.0, %v2410
  %v2412 = vpop.f32.mrb[0].mxu0
  %v2413 = vadd.f32 0.0, %v2412
  %v2414 = vpop.f32.mrb[0].mxu0
  %v2415 = vadd.f32 0.0, %v2414
  %2416 = vmatprep.mubr.bf16.mxu0 0
  %2417 = vmatmul.mubr.bf16.gmra.mrb[0].mxu0 %v2267
  %v2418 = vpop.f32.mrb[0].mxu0
  %v2419 = vadd.f32 0.0, %v2418
  %v2420 = vpop.f32.mrb[0].mxu0
  %v2421 = vadd.f32 0.0, %v2420
  %v2422 = vpop.f32.mrb[0].mxu0
  %v2423 = vadd.f32 0.0, %v2422
  %v2424 = vpop.f32.mrb[0].mxu0
  %v2425 = vadd.f32 0.0, %v2424
  %2426 = vmatprep.mubr.bf16.mxu0 0
  %2427 = vmatmul.mubr.bf16.gmra.mrb[0].mxu0 %v2270
  %v2428 = vpop.f32.mrb[0].mxu0
  %v2429 = vadd.f32 0.0, %v2428
  %v2430 = vpop.f32.mrb[0].mxu0
  %v2431 = vadd.f32 0.0, %v2430
  %v2432 = vpop.f32.mrb[0].mxu0
  %v2433 = vadd.f32 0.0, %v2432
  %v2434 = vpop.f32.mrb[0].mxu0
  %v2435 = vadd.f32 0.0, %v2434
  %2436 = vmatprep.mubr.bf16.mxu0 0
  %2437 = vmatmul.mubr.bf16.gmra.mrb[0].mxu0 %v2273
  %v2438 = vpop.f32.mrb[0].mxu0
  %v2439 = vadd.f32 0.0, %v2438
  %v2440 = vpop.f32.mrb[0].mxu0
  %v2441 = vadd.f32 0.0, %v2440
  %v2442 = vpop.f32.mrb[0].mxu0
  %v2443 = vadd.f32 0.0, %v2442
  %v2444 = vpop.f32.mrb[0].mxu0
  %v2445 = vadd.f32 0.0, %v2444
  %2446 = vmatprep.mubr.bf16.mxu0 0
  %2447 = vmatmul.mubr.bf16.gmra.mrb[0].mxu0 %v2276
  %v2448 = vpop.f32.mrb[0].mxu0
  %v2449 = vadd.f32 0.0, %v2448
  %v2450 = vpop.f32.mrb[0].mxu0
  %v2451 = vadd.f32 0.0, %v2450
  %v2452 = vpop.f32.mrb[0].mxu0
  %v2453 = vadd.f32 0.0, %v2452
  %v2454 = vpop.f32.mrb[0].mxu0
  %v2455 = vadd.f32 0.0, %v2454
  %2456 = vmatprep.mubr.bf16.mxu0 0
  %2457 = vmatmul.mubr.bf16.gmra.mrb[0].mxu0 %v2279
  %v2458 = vpop.f32.mrb[0].mxu0
  %v2459 = vadd.f32 0.0, %v2458
  %v2460 = vpop.f32.mrb[0].mxu0
  %v2461 = vadd.f32 0.0, %v2460
  %v2462 = vpop.f32.mrb[0].mxu0
  %v2463 = vadd.f32 0.0, %v2462
  %v2464 = vpop.f32.mrb[0].mxu0
  %v2465 = vadd.f32 0.0, %v2464
  %2466 = vmatprep.mubr.bf16.mxu0 0
  %2467 = vmatmul.mubr.bf16.gmra.mrb[0].mxu0 %v2282
  %v2468 = vpop.f32.mrb[0].mxu0
  %v2469 = vadd.f32 0.0, %v2468
  %v2470 = vpop.f32.mrb[0].mxu0
  %v2471 = vadd.f32 0.0, %v2470
  %v2472 = vpop.f32.mrb[0].mxu0
  %v2473 = vadd.f32 0.0, %v2472
  %v2474 = vpop.f32.mrb[0].mxu0
  %v2475 = vadd.f32 0.0, %v2474
  %2476 = vmatprep.mubr.bf16.mxu0 0
  %2477 = vmatmul.mubr.bf16.gmra.mrb[0].mxu0 %v2285
  %v2478 = vpop.f32.mrb[0].mxu0
  %v2479 = vadd.f32 0.0, %v2478
  %v2480 = vpop.f32.mrb[0].mxu0
  %v2481 = vadd.f32 0.0, %v2480
  %v2482 = vpop.f32.mrb[0].mxu0
  %v2483 = vadd.f32 0.0, %v2482
  %v2484 = vpop.f32.mrb[0].mxu0
  %v2485 = vadd.f32 0.0, %v2484
  %2486 = vdwg.mxu0
  %v2495 = vunpack.c.l.b16 %v2172
  %v2496 = vunpack.c.h.b16 %v2172
  %v2497 = vunpack.c.l.b16 %v2173
  %v2498 = vunpack.c.h.b16 %v2173
  %v2499 = vunpack.c.l.b16 %v2174
  %v2500 = vunpack.c.h.b16 %v2174
  %v2501 = vunpack.c.l.b16 %v2175
  %v2502 = vunpack.c.h.b16 %v2175
  %v2503 = vunpack.c.l.b16 %v2176
  %v2504 = vunpack.c.h.b16 %v2176
  %v2505 = vunpack.c.l.b16 %v2177
  %v2506 = vunpack.c.h.b16 %v2177
  %v2507 = vunpack.c.l.b16 %v2178
  %v2508 = vunpack.c.h.b16 %v2178
  %v2509 = vunpack.c.l.b16 %v2179
  %v2510 = vunpack.c.h.b16 %v2179
  %v2511 = vpack.c.b16 %v2497, %v2495
  %v2512 = vpack.c.b16 %v2498, %v2496
  %v2513 = vpack.c.b16 %v2501, %v2499
  %v2514 = vpack.c.b16 %v2502, %v2500
  %v2515 = vpack.c.b16 %v2505, %v2503
  %v2516 = vpack.c.b16 %v2506, %v2504
  %v2517 = vpack.c.b16 %v2509, %v2507
  %v2518 = vpack.c.b16 %v2510, %v2508
  %vm2527 = vcmask 523264
  %v2529 = vsel %vm2527, %v2156, 0
  %v2532 = vsel %vm2527, %v2157, 0
  %v2535 = vsel %vm2527, %v2158, 0
  %v2538 = vsel %vm2527, %v2159, 0
  %v2541 = vsel %vm2527, %v2160, 0
  %v2544 = vsel %vm2527, %v2161, 0
  %v2547 = vsel %vm2527, %v2162, 0
  %v2550 = vsel %vm2527, %v2163, 0
  %v2553 = vsel %vm2527, %v2164, 0
  %v2556 = vsel %vm2527, %v2165, 0
  %v2559 = vsel %vm2527, %v2166, 0
  %v2562 = vsel %vm2527, %v2167, 0
  %v2565 = vsel %vm2527, %v2168, 0
  %v2568 = vsel %vm2527, %v2169, 0
  %v2571 = vsel %vm2527, %v2170, 0
  %v2574 = vsel %vm2527, %v2171, 0
  %2576 = vmatprep.subr.bf16.mxu0 %v2512
  %2577 = vmatpush1.bf16.msra.mxu0 %v2511
  %2578 = vmatprep.subr.bf16.mxu0 %v2514
  %2579 = vmatpush1.bf16.msra.mxu0 %v2513
  %2580 = vmatprep.subr.bf16.mxu0 %v2516
  %2581 = vmatpush1.bf16.msra.mxu0 %v2515
  %2582 = vmatprep.subr.bf16.mxu0 %v2518
  %2583 = vmatpush1.bf16.msra.mxu0 %v2517
  %2584 = vmatprep.subr.bf16.mxu0 0
  %2585 = vmatpush1.bf16.msra.mxu0 0
  %2586 = vmatprep.subr.bf16.mxu0 0
  %2587 = vmatpush1.bf16.msra.mxu0 0
  %2588 = vmatprep.subr.bf16.mxu0 0
  %2589 = vmatpush1.bf16.msra.mxu0 0
  %2590 = vmatprep.subr.bf16.mxu0 0
  %2591 = vmatpush1.bf16.msra.mxu0 0
  %2592 = vmatprep.subr.bf16.mxu0 0
  %2593 = vmatpush1.bf16.msra.mxu0 0
  %2594 = vmatprep.subr.bf16.mxu0 0
  %2595 = vmatpush1.bf16.msra.mxu0 0
  %2596 = vmatprep.subr.bf16.mxu0 0
  %2597 = vmatpush1.bf16.msra.mxu0 0
  %2598 = vmatprep.subr.bf16.mxu0 0
  %2599 = vmatpush1.bf16.msra.mxu0 0
  %2600 = vmatprep.subr.bf16.mxu0 0
  %2601 = vmatpush1.bf16.msra.mxu0 0
  %2602 = vmatprep.subr.bf16.mxu0 0
  %2603 = vmatpush1.bf16.msra.mxu0 0
  %2604 = vmatprep.subr.bf16.mxu0 0
  %2605 = vmatpush1.bf16.msra.mxu0 0
  %2606 = vmatprep.subr.bf16.mxu0 0
  %2607 = vmatpush1.bf16.msra.mxu0 0
  %2608 = vmatprep.mubr.bf16.mxu0 0
  %2609 = vmatmul.mubr.bf16.gmra.mrb[0].mxu0 %v2529
  %v2610 = vpop.f32.mrb[0].mxu0
  %v2611 = vadd.f32 %v2329, %v2610
  %v2612 = vpop.f32.mrb[0].mxu0
  %v2613 = vadd.f32 %v2331, %v2612
  %v2614 = vpop.f32.mrb[0].mxu0
  %v2615 = vadd.f32 %v2333, %v2614
  %v2616 = vpop.f32.mrb[0].mxu0
  %v2617 = vadd.f32 %v2335, %v2616
  %2618 = vmatprep.mubr.bf16.mxu0 0
  %2619 = vmatmul.mubr.bf16.gmra.mrb[0].mxu0 %v2532
  %v2620 = vpop.f32.mrb[0].mxu0
  %v2621 = vadd.f32 %v2339, %v2620
  %v2622 = vpop.f32.mrb[0].mxu0
  %v2623 = vadd.f32 %v2341, %v2622
  %v2624 = vpop.f32.mrb[0].mxu0
  %v2625 = vadd.f32 %v2343, %v2624
  %v2626 = vpop.f32.mrb[0].mxu0
  %v2627 = vadd.f32 %v2345, %v2626
  %2628 = vmatprep.mubr.bf16.mxu0 0
  %2629 = vmatmul.mubr.bf16.gmra.mrb[0].mxu0 %v2535
  %v2630 = vpop.f32.mrb[0].mxu0
  %v2631 = vadd.f32 %v2349, %v2630
  %v2632 = vpop.f32.mrb[0].mxu0
  %v2633 = vadd.f32 %v2351, %v2632
  %v2634 = vpop.f32.mrb[0].mxu0
  %v2635 = vadd.f32 %v2353, %v2634
  %v2636 = vpop.f32.mrb[0].mxu0
  %v2637 = vadd.f32 %v2355, %v2636
  %2638 = vmatprep.mubr.bf16.mxu0 0
  %2639 = vmatmul.mubr.bf16.gmra.mrb[0].mxu0 %v2538
  %v2640 = vpop.f32.mrb[0].mxu0
  %v2641 = vadd.f32 %v2359, %v2640
  %v2642 = vpop.f32.mrb[0].mxu0
  %v2643 = vadd.f32 %v2361, %v2642
  %v2644 = vpop.f32.mrb[0].mxu0
  %v2645 = vadd.f32 %v2363, %v2644
  %v2646 = vpop.f32.mrb[0].mxu0
  %v2647 = vadd.f32 %v2365, %v2646
  %2648 = vmatprep.mubr.bf16.mxu0 0
  %2649 = vmatmul.mubr.bf16.gmra.mrb[0].mxu0 %v2541
  %v2650 = vpop.f32.mrb[0].mxu0
  %v2651 = vadd.f32 %v2369, %v2650
  %v2652 = vpop.f32.mrb[0].mxu0
  %v2653 = vadd.f32 %v2371, %v2652
  %v2654 = vpop.f32.mrb[0].mxu0
  %v2655 = vadd.f32 %v2373, %v2654
  %v2656 = vpop.f32.mrb[0].mxu0
  %v2657 = vadd.f32 %v2375, %v2656
  %2658 = vmatprep.mubr.bf16.mxu0 0
  %2659 = vmatmul.mubr.bf16.gmra.mrb[0].mxu0 %v2544
  %v2660 = vpop.f32.mrb[0].mxu0
  %v2661 = vadd.f32 %v2379, %v2660
  %v2662 = vpop.f32.mrb[0].mxu0
  %v2663 = vadd.f32 %v2381, %v2662
  %v2664 = vpop.f32.mrb[0].mxu0
  %v2665 = vadd.f32 %v2383, %v2664
  %v2666 = vpop.f32.mrb[0].mxu0
  %v2667 = vadd.f32 %v2385, %v2666
  %2668 = vmatprep.mubr.bf16.mxu0 0
  %2669 = vmatmul.mubr.bf16.gmra.mrb[0].mxu0 %v2547
  %v2670 = vpop.f32.mrb[0].mxu0
  %v2671 = vadd.f32 %v2389, %v2670
  %v2672 = vpop.f32.mrb[0].mxu0
  %v2673 = vadd.f32 %v2391, %v2672
  %v2674 = vpop.f32.mrb[0].mxu0
  %v2675 = vadd.f32 %v2393, %v2674
  %v2676 = vpop.f32.mrb[0].mxu0
  %v2677 = vadd.f32 %v2395, %v2676
  %2678 = vmatprep.mubr.bf16.mxu0 0
  %2679 = vmatmul.mubr.bf16.gmra.mrb[0].mxu0 %v2550
  %v2680 = vpop.f32.mrb[0].mxu0
  %v2681 = vadd.f32 %v2399, %v2680
  %v2682 = vpop.f32.mrb[0].mxu0
  %v2683 = vadd.f32 %v2401, %v2682
  %v2684 = vpop.f32.mrb[0].mxu0
  %v2685 = vadd.f32 %v2403, %v2684
  %v2686 = vpop.f32.mrb[0].mxu0
  %v2687 = vadd.f32 %v2405, %v2686
  %2688 = vmatprep.mubr.bf16.mxu0 0
  %2689 = vmatmul.mubr.bf16.gmra.mrb[0].mxu0 %v2553
  %v2690 = vpop.f32.mrb[0].mxu0
  %v2691 = vadd.f32 %v2409, %v2690
  %v2692 = vpop.f32.mrb[0].mxu0
  %v2693 = vadd.f32 %v2411, %v2692
  %v2694 = vpop.f32.mrb[0].mxu0
  %v2695 = vadd.f32 %v2413, %v2694
  %v2696 = vpop.f32.mrb[0].mxu0
  %v2697 = vadd.f32 %v2415, %v2696
  %2698 = vmatprep.mubr.bf16.mxu0 0
  %2699 = vmatmul.mubr.bf16.gmra.mrb[0].mxu0 %v2556
  %v2700 = vpop.f32.mrb[0].mxu0
  %v2701 = vadd.f32 %v2419, %v2700
  %v2702 = vpop.f32.mrb[0].mxu0
  %v2703 = vadd.f32 %v2421, %v2702
  %v2704 = vpop.f32.mrb[0].mxu0
  %v2705 = vadd.f32 %v2423, %v2704
  %v2706 = vpop.f32.mrb[0].mxu0
  %v2707 = vadd.f32 %v2425, %v2706
  %2708 = vmatprep.mubr.bf16.mxu0 0
  %2709 = vmatmul.mubr.bf16.gmra.mrb[0].mxu0 %v2559
  %v2710 = vpop.f32.mrb[0].mxu0
  %v2711 = vadd.f32 %v2429, %v2710
  %v2712 = vpop.f32.mrb[0].mxu0
  %v2713 = vadd.f32 %v2431, %v2712
  %v2714 = vpop.f32.mrb[0].mxu0
  %v2715 = vadd.f32 %v2433, %v2714
  %v2716 = vpop.f32.mrb[0].mxu0
  %v2717 = vadd.f32 %v2435, %v2716
  %2718 = vmatprep.mubr.bf16.mxu0 0
  %2719 = vmatmul.mubr.bf16.gmra.mrb[0].mxu0 %v2562
  %v2720 = vpop.f32.mrb[0].mxu0
  %v2721 = vadd.f32 %v2439, %v2720
  %v2722 = vpop.f32.mrb[0].mxu0
  %v2723 = vadd.f32 %v2441, %v2722
  %v2724 = vpop.f32.mrb[0].mxu0
  %v2725 = vadd.f32 %v2443, %v2724
  %v2726 = vpop.f32.mrb[0].mxu0
  %v2727 = vadd.f32 %v2445, %v2726
  %2728 = vmatprep.mubr.bf16.mxu0 0
  %2729 = vmatmul.mubr.bf16.gmra.mrb[0].mxu0 %v2565
  %v2730 = vpop.f32.mrb[0].mxu0
  %v2731 = vadd.f32 %v2449, %v2730
  %v2732 = vpop.f32.mrb[0].mxu0
  %v2733 = vadd.f32 %v2451, %v2732
  %v2734 = vpop.f32.mrb[0].mxu0
  %v2735 = vadd.f32 %v2453, %v2734
  %v2736 = vpop.f32.mrb[0].mxu0
  %v2737 = vadd.f32 %v2455, %v2736
  %2738 = vmatprep.mubr.bf16.mxu0 0
  %2739 = vmatmul.mubr.bf16.gmra.mrb[0].mxu0 %v2568
  %v2740 = vpop.f32.mrb[0].mxu0
  %v2741 = vadd.f32 %v2459, %v2740
  %v2742 = vpop.f32.mrb[0].mxu0
  %v2743 = vadd.f32 %v2461, %v2742
  %v2744 = vpop.f32.mrb[0].mxu0
  %v2745 = vadd.f32 %v2463, %v2744
  %v2746 = vpop.f32.mrb[0].mxu0
  %v2747 = vadd.f32 %v2465, %v2746
  %2748 = vmatprep.mubr.bf16.mxu0 0
  %2749 = vmatmul.mubr.bf16.gmra.mrb[0].mxu0 %v2571
  %v2750 = vpop.f32.mrb[0].mxu0
  %v2751 = vadd.f32 %v2469, %v2750
  %v2752 = vpop.f32.mrb[0].mxu0
  %v2753 = vadd.f32 %v2471, %v2752
  %v2754 = vpop.f32.mrb[0].mxu0
  %v2755 = vadd.f32 %v2473, %v2754
  %v2756 = vpop.f32.mrb[0].mxu0
  %v2757 = vadd.f32 %v2475, %v2756
  %2758 = vmatprep.mubr.bf16.mxu0 0
  %2759 = vmatmul.mubr.bf16.gmra.mrb[0].mxu0 %v2574
  %v2760 = vpop.f32.mrb[0].mxu0
  %v2761 = vadd.f32 %v2479, %v2760
  %v2762 = vpop.f32.mrb[0].mxu0
  %v2763 = vadd.f32 %v2481, %v2762
  %v2764 = vpop.f32.mrb[0].mxu0
  %v2765 = vadd.f32 %v2483, %v2764
  %v2766 = vpop.f32.mrb[0].mxu0
  %v2767 = vadd.f32 %v2485, %v2766
  %2768 = vdwg.mxu0
  %v2769 = vld [vmem:[%s8] sm:$0xf]
  %2770 = vmatprep.subr.mxu0 %v2613
  %2771 = vmatpush1.msra.mxu0 %v2611
  %2772 = vmatprep.subr.mxu0 %v2617
  %2773 = vmatpush1.msra.mxu0 %v2615
  %2774 = vmatprep.subr.mxu0 %v2623
  %2775 = vmatpush1.msra.mxu0 %v2621
  %2776 = vmatprep.subr.mxu0 %v2627
  %2777 = vmatpush1.msra.mxu0 %v2625
  %2778 = vmatprep.subr.mxu0 %v2633
  %2779 = vmatpush1.msra.mxu0 %v2631
  %2780 = vmatprep.subr.mxu0 %v2637
  %2781 = vmatpush1.msra.mxu0 %v2635
  %2782 = vmatprep.subr.mxu0 %v2643
  %2783 = vmatpush1.msra.mxu0 %v2641
  %2784 = vmatprep.subr.mxu0 %v2647
  %2785 = vmatpush1.msra.mxu0 %v2645
  %2786 = vmatprep.subr.mxu0 %v2653
  %2787 = vmatpush1.msra.mxu0 %v2651
  %2788 = vmatprep.subr.mxu0 %v2657
  %2789 = vmatpush1.msra.mxu0 %v2655
  %2790 = vmatprep.subr.mxu0 %v2663
  %2791 = vmatpush1.msra.mxu0 %v2661
  %2792 = vmatprep.subr.mxu0 %v2667
  %2793 = vmatpush1.msra.mxu0 %v2665
  %2794 = vmatprep.subr.mxu0 %v2673
  %2795 = vmatpush1.msra.mxu0 %v2671
  %2796 = vmatprep.subr.mxu0 %v2677
  %2797 = vmatpush1.msra.mxu0 %v2675
  %2798 = vmatprep.subr.mxu0 %v2683
  %2799 = vmatpush1.msra.mxu0 %v2681
  %2800 = vmatprep.subr.mxu0 %v2687
  %2801 = vmatpush1.msra.mxu0 %v2685
  %2802 = vmatprep.subr.mxu0 %v2693
  %2803 = vmatpush1.msra.mxu0 %v2691
  %2804 = vmatprep.subr.mxu0 %v2697
  %2805 = vmatpush1.msra.mxu0 %v2695
  %2806 = vmatprep.subr.mxu0 %v2703
  %2807 = vmatpush1.msra.mxu0 %v2701
  %2808 = vmatprep.subr.mxu0 %v2707
  %2809 = vmatpush1.msra.mxu0 %v2705
  %2810 = vmatprep.subr.mxu0 %v2713
  %2811 = vmatpush1.msra.mxu0 %v2711
  %2812 = vmatprep.subr.mxu0 %v2717
  %2813 = vmatpush1.msra.mxu0 %v2715
  %2814 = vmatprep.subr.mxu0 %v2723
  %2815 = vmatpush1.msra.mxu0 %v2721
  %2816 = vmatprep.subr.mxu0 %v2727
  %2817 = vmatpush1.msra.mxu0 %v2725
  %2818 = vmatprep.subr.mxu0 %v2733
  %2819 = vmatpush1.msra.mxu0 %v2731
  %2820 = vmatprep.subr.mxu0 %v2737
  %2821 = vmatpush1.msra.mxu0 %v2735
  %2822 = vmatprep.subr.mxu0 %v2743
  %2823 = vmatpush1.msra.mxu0 %v2741
  %2824 = vmatprep.subr.mxu0 %v2747
  %2825 = vmatpush1.msra.mxu0 %v2745
  %2826 = vmatprep.subr.mxu0 %v2753
  %2827 = vmatpush1.msra.mxu0 %v2751
  %2828 = vmatprep.subr.mxu0 %v2757
  %2829 = vmatpush1.msra.mxu0 %v2755
  %2830 = vmatprep.subr.mxu0 %v2763
  %2831 = vmatpush1.msra.mxu0 %v2761
  %2832 = vmatprep.subr.mxu0 %v2767
  %2833 = vmatpush1.msra.mxu0 %v2765
  %2834 = vmatprep.mubr.f32.mxu0 1.0
  %2835 = vmatmul.mubr.f32.gmra.mrb[0].mxu0 1.0
  %v2836 = vpop.f32.mrb[0].mxu0
  %v2837 = vadd.f32 0.0, %v2836
  %v2838 = vpop.f32.mrb[0].mxu0
  %v2839 = vadd.f32 0.0, %v2838
  %2840 = vdwg.mxu0
  %v2841 = vmul.f32 %v2837, 0.00390625
  %v2842 = vmul.f32 %v2839, 0.00390625
  %v2843 = vlaneseq
  %v2844 = vshrl.u32 %v2843, 7
  %v2845 = vsub.s32 0, %v2844
  %v2846 = vrot.slane %v2841, %v2845
  %v2847 = vlaneseq
  %v2848 = vshrl.u32 %v2847, 7
  %v2849 = vsub.s32 0, %v2848
  %v2850 = vrot.slane %v2842, %v2849
  %v2851 = vsub.f32 %v2611, %v2846
  %v2852 = vsub.f32 %v2613, %v2850
  %v2853 = vsub.f32 %v2615, %v2846
  %v2854 = vsub.f32 %v2617, %v2850
  %v2855 = vsub.f32 %v2621, %v2846
  %v2856 = vsub.f32 %v2623, %v2850
  %v2857 = vsub.f32 %v2625, %v2846
  %v2858 = vsub.f32 %v2627, %v2850
  %v2859 = vsub.f32 %v2631, %v2846
  %v2860 = vsub.f32 %v2633, %v2850
  %v2861 = vsub.f32 %v2635, %v2846
  %v2862 = vsub.f32 %v2637, %v2850
  %v2863 = vsub.f32 %v2641, %v2846
  %v2864 = vsub.f32 %v2643, %v2850
  %v2865 = vsub.f32 %v2645, %v2846
  %v2866 = vsub.f32 %v2647, %v2850
  %v2867 = vsub.f32 %v2651, %v2846
  %v2868 = vsub.f32 %v2653, %v2850
  %v2869 = vsub.f32 %v2655, %v2846
  %v2870 = vsub.f32 %v2657, %v2850
  %v2871 = vsub.f32 %v2661, %v2846
  %v2872 = vsub.f32 %v2663, %v2850
  %v2873 = vsub.f32 %v2665, %v2846
  %v2874 = vsub.f32 %v2667, %v2850
  %v2875 = vsub.f32 %v2671, %v2846
  %v2876 = vsub.f32 %v2673, %v2850
  %v2877 = vsub.f32 %v2675, %v2846
  %v2878 = vsub.f32 %v2677, %v2850
  %v2879 = vsub.f32 %v2681, %v2846
  %v2880 = vsub.f32 %v2683, %v2850
  %v2881 = vsub.f32 %v2685, %v2846
  %v2882 = vsub.f32 %v2687, %v2850
  %v2883 = vsub.f32 %v2691, %v2846
  %v2884 = vsub.f32 %v2693, %v2850
  %v2885 = vsub.f32 %v2695, %v2846
  %v2886 = vsub.f32 %v2697, %v2850
  %v2887 = vsub.f32 %v2701, %v2846
  %v2888 = vsub.f32 %v2703, %v2850
  %v2889 = vsub.f32 %v2705, %v2846
  %v2890 = vsub.f32 %v2707, %v2850
  %v2891 = vsub.f32 %v2711, %v2846
  %v2892 = vsub.f32 %v2713, %v2850
  %v2893 = vsub.f32 %v2715, %v2846
  %v2894 = vsub.f32 %v2717, %v2850
  %v2895 = vsub.f32 %v2721, %v2846
  %v2896 = vsub.f32 %v2723, %v2850
  %v2897 = vsub.f32 %v2725, %v2846
  %v2898 = vsub.f32 %v2727, %v2850
  %v2899 = vsub.f32 %v2731, %v2846
  %v2900 = vsub.f32 %v2733, %v2850
  %v2901 = vsub.f32 %v2735, %v2846
  %v2902 = vsub.f32 %v2737, %v2850
  %v2903 = vsub.f32 %v2741, %v2846
  %v2904 = vsub.f32 %v2743, %v2850
  %v2905 = vsub.f32 %v2745, %v2846
  %v2906 = vsub.f32 %v2747, %v2850
  %v2907 = vsub.f32 %v2751, %v2846
  %v2908 = vsub.f32 %v2753, %v2850
  %v2909 = vsub.f32 %v2755, %v2846
  %v2910 = vsub.f32 %v2757, %v2850
  %v2911 = vsub.f32 %v2761, %v2846
  %v2912 = vsub.f32 %v2763, %v2850
  %v2913 = vsub.f32 %v2765, %v2846
  %v2914 = vsub.f32 %v2767, %v2850
  %v2915 = vmul.f32 %v2851, %v2851
  %v2916 = vmul.f32 %v2852, %v2852
  %v2917 = vmul.f32 %v2853, %v2853
  %v2918 = vmul.f32 %v2854, %v2854
  %v2919 = vmul.f32 %v2855, %v2855
  %v2920 = vmul.f32 %v2856, %v2856
  %v2921 = vmul.f32 %v2857, %v2857
  %v2922 = vmul.f32 %v2858, %v2858
  %v2923 = vmul.f32 %v2859, %v2859
  %v2924 = vmul.f32 %v2860, %v2860
  %v2925 = vmul.f32 %v2861, %v2861
  %v2926 = vmul.f32 %v2862, %v2862
  %v2927 = vmul.f32 %v2863, %v2863
  %v2928 = vmul.f32 %v2864, %v2864
  %v2929 = vmul.f32 %v2865, %v2865
  %v2930 = vmul.f32 %v2866, %v2866
  %v2931 = vmul.f32 %v2867, %v2867
  %v2932 = vmul.f32 %v2868, %v2868
  %v2933 = vmul.f32 %v2869, %v2869
  %v2934 = vmul.f32 %v2870, %v2870
  %v2935 = vmul.f32 %v2871, %v2871
  %v2936 = vmul.f32 %v2872, %v2872
  %v2937 = vmul.f32 %v2873, %v2873
  %v2938 = vmul.f32 %v2874, %v2874
  %v2939 = vmul.f32 %v2875, %v2875
  %v2940 = vmul.f32 %v2876, %v2876
  %v2941 = vmul.f32 %v2877, %v2877
  %v2942 = vmul.f32 %v2878, %v2878
  %v2943 = vmul.f32 %v2879, %v2879
  %v2944 = vmul.f32 %v2880, %v2880
  %v2945 = vmul.f32 %v2881, %v2881
  %v2946 = vmul.f32 %v2882, %v2882
  %v2947 = vmul.f32 %v2883, %v2883
  %v2948 = vmul.f32 %v2884, %v2884
  %v2949 = vmul.f32 %v2885, %v2885
  %v2950 = vmul.f32 %v2886, %v2886
  %v2951 = vmul.f32 %v2887, %v2887
  %v2952 = vmul.f32 %v2888, %v2888
  %v2953 = vmul.f32 %v2889, %v2889
  %v2954 = vmul.f32 %v2890, %v2890
  %v2955 = vmul.f32 %v2891, %v2891
  %v2956 = vmul.f32 %v2892, %v2892
  %v2957 = vmul.f32 %v2893, %v2893
  %v2958 = vmul.f32 %v2894, %v2894
  %v2959 = vmul.f32 %v2895, %v2895
  %v2960 = vmul.f32 %v2896, %v2896
  %v2961 = vmul.f32 %v2897, %v2897
  %v2962 = vmul.f32 %v2898, %v2898
  %v2963 = vmul.f32 %v2899, %v2899
  %v2964 = vmul.f32 %v2900, %v2900
  %v2965 = vmul.f32 %v2901, %v2901
  %v2966 = vmul.f32 %v2902, %v2902
  %v2967 = vmul.f32 %v2903, %v2903
  %v2968 = vmul.f32 %v2904, %v2904
  %v2969 = vmul.f32 %v2905, %v2905
  %v2970 = vmul.f32 %v2906, %v2906
  %v2971 = vmul.f32 %v2907, %v2907
  %v2972 = vmul.f32 %v2908, %v2908
  %v2973 = vmul.f32 %v2909, %v2909
  %v2974 = vmul.f32 %v2910, %v2910
  %v2975 = vmul.f32 %v2911, %v2911
  %v2976 = vmul.f32 %v2912, %v2912
  %v2977 = vmul.f32 %v2913, %v2913
  %v2978 = vmul.f32 %v2914, %v2914
  %2979 = vmatprep.subr.mxu0 %v2916
  %2980 = vmatpush1.msra.mxu0 %v2915
  %2981 = vmatprep.subr.mxu0 %v2918
  %2982 = vmatpush1.msra.mxu0 %v2917
  %2983 = vmatprep.subr.mxu0 %v2920
  %2984 = vmatpush1.msra.mxu0 %v2919
  %2985 = vmatprep.subr.mxu0 %v2922
  %2986 = vmatpush1.msra.mxu0 %v2921
  %2987 = vmatprep.subr.mxu0 %v2924
  %2988 = vmatpush1.msra.mxu0 %v2923
  %2989 = vmatprep.subr.mxu0 %v2926
  %2990 = vmatpush1.msra.mxu0 %v2925
  %2991 = vmatprep.subr.mxu0 %v2928
  %2992 = vmatpush1.msra.mxu0 %v2927
  %2993 = vmatprep.subr.mxu0 %v2930
  %2994 = vmatpush1.msra.mxu0 %v2929
  %2995 = vmatprep.subr.mxu0 %v2932
  %2996 = vmatpush1.msra.mxu0 %v2931
  %2997 = vmatprep.subr.mxu0 %v2934
  %2998 = vmatpush1.msra.mxu0 %v2933
  %2999 = vmatprep.subr.mxu0 %v2936
  %3000 = vmatpush1.msra.mxu0 %v2935
  %3001 = vmatprep.subr.mxu0 %v2938
  %3002 = vmatpush1.msra.mxu0 %v2937
  %3003 = vmatprep.subr.mxu0 %v2940
  %3004 = vmatpush1.msra.mxu0 %v2939
  %3005 = vmatprep.subr.mxu0 %v2942
  %3006 = vmatpush1.msra.mxu0 %v2941
  %3007 = vmatprep.subr.mxu0 %v2944
  %3008 = vmatpush1.msra.mxu0 %v2943
  %3009 = vmatprep.subr.mxu0 %v2946
  %3010 = vmatpush1.msra.mxu0 %v2945
  %3011 = vmatprep.subr.mxu0 %v2948
  %3012 = vmatpush1.msra.mxu0 %v2947
  %3013 = vmatprep.subr.mxu0 %v2950
  %3014 = vmatpush1.msra.mxu0 %v2949
  %3015 = vmatprep.subr.mxu0 %v2952
  %3016 = vmatpush1.msra.mxu0 %v2951
  %3017 = vmatprep.subr.mxu0 %v2954
  %3018 = vmatpush1.msra.mxu0 %v2953
  %3019 = vmatprep.subr.mxu0 %v2956
  %3020 = vmatpush1.msra.mxu0 %v2955
  %3021 = vmatprep.subr.mxu0 %v2958
  %3022 = vmatpush1.msra.mxu0 %v2957
  %3023 = vmatprep.subr.mxu0 %v2960
  %3024 = vmatpush1.msra.mxu0 %v2959
  %3025 = vmatprep.subr.mxu0 %v2962
  %3026 = vmatpush1.msra.mxu0 %v2961
  %3027 = vmatprep.subr.mxu0 %v2964
  %3028 = vmatpush1.msra.mxu0 %v2963
  %3029 = vmatprep.subr.mxu0 %v2966
  %3030 = vmatpush1.msra.mxu0 %v2965
  %3031 = vmatprep.subr.mxu0 %v2968
  %3032 = vmatpush1.msra.mxu0 %v2967
  %3033 = vmatprep.subr.mxu0 %v2970
  %3034 = vmatpush1.msra.mxu0 %v2969
  %3035 = vmatprep.subr.mxu0 %v2972
  %3036 = vmatpush1.msra.mxu0 %v2971
  %3037 = vmatprep.subr.mxu0 %v2974
  %3038 = vmatpush1.msra.mxu0 %v2973
  %3039 = vmatprep.subr.mxu0 %v2976
  %3040 = vmatpush1.msra.mxu0 %v2975
  %3041 = vmatprep.subr.mxu0 %v2978
  %3042 = vmatpush1.msra.mxu0 %v2977
  %3043 = vmatprep.mubr.f32.mxu0 1.0
  %3044 = vmatmul.mubr.f32.gmra.mrb[0].mxu0 1.0
  %v3045 = vpop.f32.mrb[0].mxu0
  %v3046 = vadd.f32 0.0, %v3045
  %v3047 = vpop.f32.mrb[0].mxu0
  %v3048 = vadd.f32 0.0, %v3047
  %3049 = vdwg.mxu0
  %v3050 = vmul.f32 %v3046, 0.00390625
  %v3051 = vmul.f32 %v3048, 0.00390625
  %v3052 = vadd.f32 %v3050, 1e-05
  %v3053 = vadd.f32 %v3051, 1e-05
  %v3054 = vrsqrt.pop %v3052
  %v3055 = vrsqrt.pop %v3053
  %v3056 = vlaneseq
  %v3057 = vshrl.u32 %v3056, 7
  %v3058 = vsub.s32 0, %v3057
  %v3059 = vrot.slane %v3054, %v3058
  %v3060 = vlaneseq
  %v3061 = vshrl.u32 %v3060, 7
  %v3062 = vsub.s32 0, %v3061
  %v3063 = vrot.slane %v3055, %v3062
  %v3064 = vmul.f32 %v2851, %v3059
  %v3065 = vmul.f32 %v2852, %v3063
  %v3066 = vmul.f32 %v2853, %v3059
  %v3067 = vmul.f32 %v2854, %v3063
  %v3068 = vmul.f32 %v2855, %v3059
  %v3069 = vmul.f32 %v2856, %v3063
  %v3070 = vmul.f32 %v2857, %v3059
  %v3071 = vmul.f32 %v2858, %v3063
  %v3072 = vmul.f32 %v2859, %v3059
  %v3073 = vmul.f32 %v2860, %v3063
  %v3074 = vmul.f32 %v2861, %v3059
  %v3075 = vmul.f32 %v2862, %v3063
  %v3076 = vmul.f32 %v2863, %v3059
  %v3077 = vmul.f32 %v2864, %v3063
  %v3078 = vmul.f32 %v2865, %v3059
  %v3079 = vmul.f32 %v2866, %v3063
  %v3080 = vmul.f32 %v2867, %v3059
  %v3081 = vmul.f32 %v2868, %v3063
  %v3082 = vmul.f32 %v2869, %v3059
  %v3083 = vmul.f32 %v2870, %v3063
  %v3084 = vmul.f32 %v2871, %v3059
  %v3085 = vmul.f32 %v2872, %v3063
  %v3086 = vmul.f32 %v2873, %v3059
  %v3087 = vmul.f32 %v2874, %v3063
  %v3088 = vmul.f32 %v2875, %v3059
  %v3089 = vmul.f32 %v2876, %v3063
  %v3090 = vmul.f32 %v2877, %v3059
  %v3091 = vmul.f32 %v2878, %v3063
  %v3092 = vmul.f32 %v2879, %v3059
  %v3093 = vmul.f32 %v2880, %v3063
  %v3094 = vmul.f32 %v2881, %v3059
  %v3095 = vmul.f32 %v2882, %v3063
  %v3096 = vmul.f32 %v2883, %v3059
  %v3097 = vmul.f32 %v2884, %v3063
  %v3098 = vmul.f32 %v2885, %v3059
  %v3099 = vmul.f32 %v2886, %v3063
  %v3100 = vmul.f32 %v2887, %v3059
  %v3101 = vmul.f32 %v2888, %v3063
  %v3102 = vmul.f32 %v2889, %v3059
  %v3103 = vmul.f32 %v2890, %v3063
  %v3104 = vmul.f32 %v2891, %v3059
  %v3105 = vmul.f32 %v2892, %v3063
  %v3106 = vmul.f32 %v2893, %v3059
  %v3107 = vmul.f32 %v2894, %v3063
  %v3108 = vmul.f32 %v2895, %v3059
  %v3109 = vmul.f32 %v2896, %v3063
  %v3110 = vmul.f32 %v2897, %v3059
  %v3111 = vmul.f32 %v2898, %v3063
  %v3112 = vmul.f32 %v2899, %v3059
  %v3113 = vmul.f32 %v2900, %v3063
  %v3114 = vmul.f32 %v2901, %v3059
  %v3115 = vmul.f32 %v2902, %v3063
  %v3116 = vmul.f32 %v2903, %v3059
  %v3117 = vmul.f32 %v2904, %v3063
  %v3118 = vmul.f32 %v2905, %v3059
  %v3119 = vmul.f32 %v2906, %v3063
  %v3120 = vmul.f32 %v2907, %v3059
  %v3121 = vmul.f32 %v2908, %v3063
  %v3122 = vmul.f32 %v2909, %v3059
  %v3123 = vmul.f32 %v2910, %v3063
  %v3124 = vmul.f32 %v2911, %v3059
  %v3125 = vmul.f32 %v2912, %v3063
  %v3126 = vmul.f32 %v2913, %v3059
  %v3127 = vmul.f32 %v2914, %v3063
  %v3129 = vlaneseq
  %v3130 = vshrl.u32 %v3129, 7
  %v3131 = vsub.s32 0, %v3130
  %v3132 = vrot.slane %v2769, %v3131
  %v3133 = vlaneseq
  %v3134 = vshrl.u32 %v3133, 7
  %v3135 = vsub.s32 2, %v3134
  %v3136 = vrot.slane %v2769, %v3135
  %v3139 = vlaneseq
  %v3140 = vshrl.u32 %v3139, 7
  %v3141 = vsub.s32 0, %v3140
  %v3142 = vrot.slane %v3132, %v3141
  %v3143 = vlaneseq
  %v3144 = vshrl.u32 %v3143, 7
  %v3145 = vsub.s32 0, %v3144
  %v3146 = vrot.slane %v3136, %v3145
  %v3147 = vmul.f32 %v3064, %v3142
  %v3148 = vmul.f32 %v3065, %v3146
  %v3149 = vmul.f32 %v3066, %v3142
  %v3150 = vmul.f32 %v3067, %v3146
  %v3151 = vmul.f32 %v3068, %v3142
  %v3152 = vmul.f32 %v3069, %v3146
  %v3153 = vmul.f32 %v3070, %v3142
  %v3154 = vmul.f32 %v3071, %v3146
  %v3155 = vmul.f32 %v3072, %v3142
  %v3156 = vmul.f32 %v3073, %v3146
  %v3157 = vmul.f32 %v3074, %v3142
  %v3158 = vmul.f32 %v3075, %v3146
  %v3159 = vmul.f32 %v3076, %v3142
  %v3160 = vmul.f32 %v3077, %v3146
  %v3161 = vmul.f32 %v3078, %v3142
  %v3162 = vmul.f32 %v3079, %v3146
  %v3163 = vmul.f32 %v3080, %v3142
  %v3164 = vmul.f32 %v3081, %v3146
  %v3165 = vmul.f32 %v3082, %v3142
  %v3166 = vmul.f32 %v3083, %v3146
  %v3167 = vmul.f32 %v3084, %v3142
  %v3168 = vmul.f32 %v3085, %v3146
  %v3169 = vmul.f32 %v3086, %v3142
  %v3170 = vmul.f32 %v3087, %v3146
  %v3171 = vmul.f32 %v3088, %v3142
  %v3172 = vmul.f32 %v3089, %v3146
  %v3173 = vmul.f32 %v3090, %v3142
  %v3174 = vmul.f32 %v3091, %v3146
  %v3175 = vmul.f32 %v3092, %v3142
  %v3176 = vmul.f32 %v3093, %v3146
  %v3177 = vmul.f32 %v3094, %v3142
  %v3178 = vmul.f32 %v3095, %v3146
  %v3179 = vmul.f32 %v3096, %v3142
  %v3180 = vmul.f32 %v3097, %v3146
  %v3181 = vmul.f32 %v3098, %v3142
  %v3182 = vmul.f32 %v3099, %v3146
  %v3183 = vmul.f32 %v3100, %v3142
  %v3184 = vmul.f32 %v3101, %v3146
  %v3185 = vmul.f32 %v3102, %v3142
  %v3186 = vmul.f32 %v3103, %v3146
  %v3187 = vmul.f32 %v3104, %v3142
  %v3188 = vmul.f32 %v3105, %v3146
  %v3189 = vmul.f32 %v3106, %v3142
  %v3190 = vmul.f32 %v3107, %v3146
  %v3191 = vmul.f32 %v3108, %v3142
  %v3192 = vmul.f32 %v3109, %v3146
  %v3193 = vmul.f32 %v3110, %v3142
  %v3194 = vmul.f32 %v3111, %v3146
  %v3195 = vmul.f32 %v3112, %v3142
  %v3196 = vmul.f32 %v3113, %v3146
  %v3197 = vmul.f32 %v3114, %v3142
  %v3198 = vmul.f32 %v3115, %v3146
  %v3199 = vmul.f32 %v3116, %v3142
  %v3200 = vmul.f32 %v3117, %v3146
  %v3201 = vmul.f32 %v3118, %v3142
  %v3202 = vmul.f32 %v3119, %v3146
  %v3203 = vmul.f32 %v3120, %v3142
  %v3204 = vmul.f32 %v3121, %v3146
  %v3205 = vmul.f32 %v3122, %v3142
  %v3206 = vmul.f32 %v3123, %v3146
  %v3207 = vmul.f32 %v3124, %v3142
  %v3208 = vmul.f32 %v3125, %v3146
  %v3209 = vmul.f32 %v3126, %v3142
  %v3210 = vmul.f32 %v3127, %v3146
  %v3211 = vlaneseq
  %v3212 = vshrl.u32 %v3211, 7
  %v3213 = vsub.s32 1, %v3212
  %v3214 = vrot.slane %v2769, %v3213
  %v3215 = vlaneseq
  %v3216 = vshrl.u32 %v3215, 7
  %v3217 = vsub.s32 3, %v3216
  %v3218 = vrot.slane %v2769, %v3217
  %v3221 = vlaneseq
  %v3222 = vshrl.u32 %v3221, 7
  %v3223 = vsub.s32 1, %v3222
  %v3224 = vrot.slane %v3214, %v3223
  %v3225 = vlaneseq
  %v3226 = vshrl.u32 %v3225, 7
  %v3227 = vsub.s32 1, %v3226
  %v3228 = vrot.slane %v3218, %v3227
  %v3229 = vadd.f32 %v3147, %v3224
  %v3230 = vadd.f32 %v3148, %v3228
  %v3231 = vadd.f32 %v3149, %v3224
  %v3232 = vadd.f32 %v3150, %v3228
  %v3233 = vadd.f32 %v3151, %v3224
  %v3234 = vadd.f32 %v3152, %v3228
  %v3235 = vadd.f32 %v3153, %v3224
  %v3236 = vadd.f32 %v3154, %v3228
  %v3237 = vadd.f32 %v3155, %v3224
  %v3238 = vadd.f32 %v3156, %v3228
  %v3239 = vadd.f32 %v3157, %v3224
  %v3240 = vadd.f32 %v3158, %v3228
  %v3241 = vadd.f32 %v3159, %v3224
  %v3242 = vadd.f32 %v3160, %v3228
  %v3243 = vadd.f32 %v3161, %v3224
  %v3244 = vadd.f32 %v3162, %v3228
  %v3245 = vadd.f32 %v3163, %v3224
  %v3246 = vadd.f32 %v3164, %v3228
  %v3247 = vadd.f32 %v3165, %v3224
  %v3248 = vadd.f32 %v3166, %v3228
  %v3249 = vadd.f32 %v3167, %v3224
  %v3250 = vadd.f32 %v3168, %v3228
  %v3251 = vadd.f32 %v3169, %v3224
  %v3252 = vadd.f32 %v3170, %v3228
  %v3253 = vadd.f32 %v3171, %v3224
  %v3254 = vadd.f32 %v3172, %v3228
  %v3255 = vadd.f32 %v3173, %v3224
  %v3256 = vadd.f32 %v3174, %v3228
  %v3257 = vadd.f32 %v3175, %v3224
  %v3258 = vadd.f32 %v3176, %v3228
  %v3259 = vadd.f32 %v3177, %v3224
  %v3260 = vadd.f32 %v3178, %v3228
  %v3261 = vadd.f32 %v3179, %v3224
  %v3262 = vadd.f32 %v3180, %v3228
  %v3263 = vadd.f32 %v3181, %v3224
  %v3264 = vadd.f32 %v3182, %v3228
  %v3265 = vadd.f32 %v3183, %v3224
  %v3266 = vadd.f32 %v3184, %v3228
  %v3267 = vadd.f32 %v3185, %v3224
  %v3268 = vadd.f32 %v3186, %v3228
  %v3269 = vadd.f32 %v3187, %v3224
  %v3270 = vadd.f32 %v3188, %v3228
  %v3271 = vadd.f32 %v3189, %v3224
  %v3272 = vadd.f32 %v3190, %v3228
  %v3273 = vadd.f32 %v3191, %v3224
  %v3274 = vadd.f32 %v3192, %v3228
  %v3275 = vadd.f32 %v3193, %v3224
  %v3276 = vadd.f32 %v3194, %v3228
  %v3277 = vadd.f32 %v3195, %v3224
  %v3278 = vadd.f32 %v3196, %v3228
  %v3279 = vadd.f32 %v3197, %v3224
  %v3280 = vadd.f32 %v3198, %v3228
  %v3281 = vadd.f32 %v3199, %v3224
  %v3282 = vadd.f32 %v3200, %v3228
  %v3283 = vadd.f32 %v3201, %v3224
  %v3284 = vadd.f32 %v3202, %v3228
  %v3285 = vadd.f32 %v3203, %v3224
  %v3286 = vadd.f32 %v3204, %v3228
  %v3287 = vadd.f32 %v3205, %v3224
  %v3288 = vadd.f32 %v3206, %v3228
  %v3289 = vadd.f32 %v3207, %v3224
  %v3290 = vadd.f32 %v3208, %v3228
  %v3291 = vadd.f32 %v3209, %v3224
  %v3292 = vadd.f32 %v3210, %v3228
  %v3293 = vmax.f32 %v3229, 0.0
  %v3294 = vmax.f32 %v3230, 0.0
  %v3295 = vmax.f32 %v3231, 0.0
  %v3296 = vmax.f32 %v3232, 0.0
  %v3297 = vmax.f32 %v3233, 0.0
  %v3298 = vmax.f32 %v3234, 0.0
  %v3299 = vmax.f32 %v3235, 0.0
  %v3300 = vmax.f32 %v3236, 0.0
  %v3301 = vmax.f32 %v3237, 0.0
  %v3302 = vmax.f32 %v3238, 0.0
  %v3303 = vmax.f32 %v3239, 0.0
  %v3304 = vmax.f32 %v3240, 0.0
  %v3305 = vmax.f32 %v3241, 0.0
  %v3306 = vmax.f32 %v3242, 0.0
  %v3307 = vmax.f32 %v3243, 0.0
  %v3308 = vmax.f32 %v3244, 0.0
  %v3309 = vmax.f32 %v3245, 0.0
  %v3310 = vmax.f32 %v3246, 0.0
  %v3311 = vmax.f32 %v3247, 0.0
  %v3312 = vmax.f32 %v3248, 0.0
  %v3313 = vmax.f32 %v3249, 0.0
  %v3314 = vmax.f32 %v3250, 0.0
  %v3315 = vmax.f32 %v3251, 0.0
  %v3316 = vmax.f32 %v3252, 0.0
  %v3317 = vmax.f32 %v3253, 0.0
  %v3318 = vmax.f32 %v3254, 0.0
  %v3319 = vmax.f32 %v3255, 0.0
  %v3320 = vmax.f32 %v3256, 0.0
  %v3321 = vmax.f32 %v3257, 0.0
  %v3322 = vmax.f32 %v3258, 0.0
  %v3323 = vmax.f32 %v3259, 0.0
  %v3324 = vmax.f32 %v3260, 0.0
  %v3325 = vmax.f32 %v3261, 0.0
  %v3326 = vmax.f32 %v3262, 0.0
  %v3327 = vmax.f32 %v3263, 0.0
  %v3328 = vmax.f32 %v3264, 0.0
  %v3329 = vmax.f32 %v3265, 0.0
  %v3330 = vmax.f32 %v3266, 0.0
  %v3331 = vmax.f32 %v3267, 0.0
  %v3332 = vmax.f32 %v3268, 0.0
  %v3333 = vmax.f32 %v3269, 0.0
  %v3334 = vmax.f32 %v3270, 0.0
  %v3335 = vmax.f32 %v3271, 0.0
  %v3336 = vmax.f32 %v3272, 0.0
  %v3337 = vmax.f32 %v3273, 0.0
  %v3338 = vmax.f32 %v3274, 0.0
  %v3339 = vmax.f32 %v3275, 0.0
  %v3340 = vmax.f32 %v3276, 0.0
  %v3341 = vmax.f32 %v3277, 0.0
  %v3342 = vmax.f32 %v3278, 0.0
  %v3343 = vmax.f32 %v3279, 0.0
  %v3344 = vmax.f32 %v3280, 0.0
  %v3345 = vmax.f32 %v3281, 0.0
  %v3346 = vmax.f32 %v3282, 0.0
  %v3347 = vmax.f32 %v3283, 0.0
  %v3348 = vmax.f32 %v3284, 0.0
  %v3349 = vmax.f32 %v3285, 0.0
  %v3350 = vmax.f32 %v3286, 0.0
  %v3351 = vmax.f32 %v3287, 0.0
  %v3352 = vmax.f32 %v3288, 0.0
  %v3353 = vmax.f32 %v3289, 0.0
  %v3354 = vmax.f32 %v3290, 0.0
  %v3355 = vmax.f32 %v3291, 0.0
  %v3356 = vmax.f32 %v3292, 0.0
  %v3357 = vpack.c.bf16 %v3295, %v3293
  %v3358 = vpack.c.bf16 %v3296, %v3294
  %v3359 = vpack.c.bf16 %v3299, %v3297
  %v3360 = vpack.c.bf16 %v3300, %v3298
  %v3361 = vpack.c.bf16 %v3303, %v3301
  %v3362 = vpack.c.bf16 %v3304, %v3302
  %v3363 = vpack.c.bf16 %v3307, %v3305
  %v3364 = vpack.c.bf16 %v3308, %v3306
  %v3365 = vpack.c.bf16 %v3311, %v3309
  %v3366 = vpack.c.bf16 %v3312, %v3310
  %v3367 = vpack.c.bf16 %v3315, %v3313
  %v3368 = vpack.c.bf16 %v3316, %v3314
  %v3369 = vpack.c.bf16 %v3319, %v3317
  %v3370 = vpack.c.bf16 %v3320, %v3318
  %v3371 = vpack.c.bf16 %v3323, %v3321
  %v3372 = vpack.c.bf16 %v3324, %v3322
  %v3373 = vpack.c.bf16 %v3327, %v3325
  %v3374 = vpack.c.bf16 %v3328, %v3326
  %v3375 = vpack.c.bf16 %v3331, %v3329
  %v3376 = vpack.c.bf16 %v3332, %v3330
  %v3377 = vpack.c.bf16 %v3335, %v3333
  %v3378 = vpack.c.bf16 %v3336, %v3334
  %v3379 = vpack.c.bf16 %v3339, %v3337
  %v3380 = vpack.c.bf16 %v3340, %v3338
  %v3381 = vpack.c.bf16 %v3343, %v3341
  %v3382 = vpack.c.bf16 %v3344, %v3342
  %v3383 = vpack.c.bf16 %v3347, %v3345
  %v3384 = vpack.c.bf16 %v3348, %v3346
  %v3385 = vpack.c.bf16 %v3351, %v3349
  %v3386 = vpack.c.bf16 %v3352, %v3350
  %v3387 = vpack.c.bf16 %v3355, %v3353
  %v3388 = vpack.c.bf16 %v3356, %v3354
  %v3389 = vld [vmem:[%s6] sm:$0xf]
  %v3390 = vld [vmem:[%s6 + $0x4] sm:$0xf]
  %v3391 = vld [vmem:[%s6 + $0x8] sm:$0xf]
  %v3392 = vld [vmem:[%s6 + $0xc] sm:$0xf]
  %v3393 = vld [vmem:[%s6 + $0x10] sm:$0xf]
  %v3394 = vld [vmem:[%s6 + $0x14] sm:$0xf]
  %v3395 = vld [vmem:[%s6 + $0x18] sm:$0xf]
  %v3396 = vld [vmem:[%s6 + $0x1c] sm:$0xf]
  %v3397 = vld [vmem:[%s6 + $0x20] sm:$0xf]
  %v3398 = vld [vmem:[%s6 + $0x24] sm:$0xf]
  %v3399 = vld [vmem:[%s6 + $0x28] sm:$0xf]
  %v3400 = vld [vmem:[%s6 + $0x2c] sm:$0xf]
  %v3401 = vld [vmem:[%s6 + $0x30] sm:$0xf]
  %v3402 = vld [vmem:[%s6 + $0x34] sm:$0xf]
  %v3403 = vld [vmem:[%s6 + $0x38] sm:$0xf]
  %v3404 = vld [vmem:[%s6 + $0x3c] sm:$0xf]
  %v3405 = vld [vmem:[%s6 + $0x40] sm:$0xf]
  %v3406 = vld [vmem:[%s6 + $0x44] sm:$0xf]
  %v3407 = vld [vmem:[%s6 + $0x48] sm:$0xf]
  %v3408 = vld [vmem:[%s6 + $0x4c] sm:$0xf]
  %v3409 = vld [vmem:[%s6 + $0x50] sm:$0xf]
  %v3410 = vld [vmem:[%s6 + $0x54] sm:$0xf]
  %v3411 = vld [vmem:[%s6 + $0x58] sm:$0xf]
  %v3412 = vld [vmem:[%s6 + $0x5c] sm:$0xf]
  %v3413 = vld [vmem:[%s6 + $0x60] sm:$0xf]
  %v3414 = vld [vmem:[%s6 + $0x64] sm:$0xf]
  %v3415 = vld [vmem:[%s6 + $0x68] sm:$0xf]
  %v3416 = vld [vmem:[%s6 + $0x6c] sm:$0xf]
  %v3417 = vld [vmem:[%s6 + $0x70] sm:$0xf]
  %v3418 = vld [vmem:[%s6 + $0x74] sm:$0xf]
  %v3419 = vld [vmem:[%s6 + $0x78] sm:$0xf]
  %v3420 = vld [vmem:[%s6 + $0x7c] sm:$0xf]
  %v3453 = vunpack.c.l.b16 %v3389
  %v3454 = vunpack.c.l.b16 %v3390
  %v3455 = vunpack.c.l.b16 %v3391
  %v3456 = vunpack.c.l.b16 %v3392
  %v3457 = vunpack.c.l.b16 %v3393
  %v3458 = vunpack.c.l.b16 %v3394
  %v3459 = vunpack.c.l.b16 %v3395
  %v3460 = vunpack.c.l.b16 %v3396
  %v3461 = vunpack.c.l.b16 %v3397
  %v3462 = vunpack.c.l.b16 %v3398
  %v3463 = vunpack.c.l.b16 %v3399
  %v3464 = vunpack.c.l.b16 %v3400
  %v3465 = vunpack.c.l.b16 %v3401
  %v3466 = vunpack.c.l.b16 %v3402
  %v3467 = vunpack.c.l.b16 %v3403
  %v3468 = vunpack.c.l.b16 %v3404
  %v3469 = vunpack.c.l.b16 %v3405
  %v3470 = vunpack.c.l.b16 %v3406
  %v3471 = vunpack.c.l.b16 %v3407
  %v3472 = vunpack.c.l.b16 %v3408
  %v3473 = vunpack.c.l.b16 %v3409
  %v3474 = vunpack.c.l.b16 %v3410
  %v3475 = vunpack.c.l.b16 %v3411
  %v3476 = vunpack.c.l.b16 %v3412
  %v3477 = vunpack.c.l.b16 %v3413
  %v3478 = vunpack.c.l.b16 %v3414
  %v3479 = vunpack.c.l.b16 %v3415
  %v3480 = vunpack.c.l.b16 %v3416
  %v3481 = vunpack.c.l.b16 %v3417
  %v3482 = vunpack.c.l.b16 %v3418
  %v3483 = vunpack.c.l.b16 %v3419
  %v3484 = vunpack.c.l.b16 %v3420
  %v3485 = vpack.c.b16 %v3454, %v3453
  %v3486 = vpack.c.b16 %v3456, %v3455
  %v3487 = vpack.c.b16 %v3458, %v3457
  %v3488 = vpack.c.b16 %v3460, %v3459
  %v3489 = vpack.c.b16 %v3462, %v3461
  %v3490 = vpack.c.b16 %v3464, %v3463
  %v3491 = vpack.c.b16 %v3466, %v3465
  %v3492 = vpack.c.b16 %v3468, %v3467
  %v3493 = vpack.c.b16 %v3470, %v3469
  %v3494 = vpack.c.b16 %v3472, %v3471
  %v3495 = vpack.c.b16 %v3474, %v3473
  %v3496 = vpack.c.b16 %v3476, %v3475
  %v3497 = vpack.c.b16 %v3478, %v3477
  %v3498 = vpack.c.b16 %v3480, %v3479
  %v3499 = vpack.c.b16 %v3482, %v3481
  %v3500 = vpack.c.b16 %v3484, %v3483
  %3517 = vmatprep.subr.bf16.mxu0 0
  %3518 = vmatpush1.bf16.msra.mxu0 %v3485
  %3519 = vmatprep.subr.bf16.mxu0 0
  %3520 = vmatpush1.bf16.msra.mxu0 %v3486
  %3521 = vmatprep.subr.bf16.mxu0 0
  %3522 = vmatpush1.bf16.msra.mxu0 %v3487
  %3523 = vmatprep.subr.bf16.mxu0 0
  %3524 = vmatpush1.bf16.msra.mxu0 %v3488
  %3525 = vmatprep.subr.bf16.mxu0 0
  %3526 = vmatpush1.bf16.msra.mxu0 %v3489
  %3527 = vmatprep.subr.bf16.mxu0 0
  %3528 = vmatpush1.bf16.msra.mxu0 %v3490
  %3529 = vmatprep.subr.bf16.mxu0 0
  %3530 = vmatpush1.bf16.msra.mxu0 %v3491
  %3531 = vmatprep.subr.bf16.mxu0 0
  %3532 = vmatpush1.bf16.msra.mxu0 %v3492
  %3533 = vmatprep.subr.bf16.mxu0 0
  %3534 = vmatpush1.bf16.msra.mxu0 %v3493
  %3535 = vmatprep.subr.bf16.mxu0 0
  %3536 = vmatpush1.bf16.msra.mxu0 %v3494
  %3537 = vmatprep.subr.bf16.mxu0 0
  %3538 = vmatpush1.bf16.msra.mxu0 %v3495
  %3539 = vmatprep.subr.bf16.mxu0 0
  %3540 = vmatpush1.bf16.msra.mxu0 %v3496
  %3541 = vmatprep.subr.bf16.mxu0 0
  %3542 = vmatpush1.bf16.msra.mxu0 %v3497
  %3543 = vmatprep.subr.bf16.mxu0 0
  %3544 = vmatpush1.bf16.msra.mxu0 %v3498
  %3545 = vmatprep.subr.bf16.mxu0 0
  %3546 = vmatpush1.bf16.msra.mxu0 %v3499
  %3547 = vmatprep.subr.bf16.mxu0 0
  %3548 = vmatpush1.bf16.msra.mxu0 %v3500
  %3549 = vmatprep.mubr.bf16.mxu0 %v3358
  %3550 = vmatmul.mubr.bf16.gmra.mrb[0].mxu0 %v3357
  %v3551 = vpop.f32.mrb[0].mxu0
  %v3552 = vadd.f32 0.0, %v3551
  %v3553 = vpop.f32.mrb[0].mxu0
  %v3554 = vpop.f32.mrb[0].mxu0
  %v3555 = vadd.f32 0.0, %v3554
  %v3556 = vpop.f32.mrb[0].mxu0
  %3557 = vmatprep.mubr.bf16.mxu0 %v3360
  %3558 = vmatmul.mubr.bf16.gmra.mrb[0].mxu0 %v3359
  %v3559 = vpop.f32.mrb[0].mxu0
  %v3560 = vadd.f32 0.0, %v3559
  %v3561 = vpop.f32.mrb[0].mxu0
  %v3562 = vpop.f32.mrb[0].mxu0
  %v3563 = vadd.f32 0.0, %v3562
  %v3564 = vpop.f32.mrb[0].mxu0
  %3565 = vmatprep.mubr.bf16.mxu0 %v3362
  %3566 = vmatmul.mubr.bf16.gmra.mrb[0].mxu0 %v3361
  %v3567 = vpop.f32.mrb[0].mxu0
  %v3568 = vadd.f32 0.0, %v3567
  %v3569 = vpop.f32.mrb[0].mxu0
  %v3570 = vpop.f32.mrb[0].mxu0
  %v3571 = vadd.f32 0.0, %v3570
  %v3572 = vpop.f32.mrb[0].mxu0
  %3573 = vmatprep.mubr.bf16.mxu0 %v3364
  %3574 = vmatmul.mubr.bf16.gmra.mrb[0].mxu0 %v3363
  %v3575 = vpop.f32.mrb[0].mxu0
  %v3576 = vadd.f32 0.0, %v3575
  %v3577 = vpop.f32.mrb[0].mxu0
  %v3578 = vpop.f32.mrb[0].mxu0
  %v3579 = vadd.f32 0.0, %v3578
  %v3580 = vpop.f32.mrb[0].mxu0
  %3581 = vmatprep.mubr.bf16.mxu0 %v3366
  %3582 = vmatmul.mubr.bf16.gmra.mrb[0].mxu0 %v3365
  %v3583 = vpop.f32.mrb[0].mxu0
  %v3584 = vadd.f32 0.0, %v3583
  %v3585 = vpop.f32.mrb[0].mxu0
  %v3586 = vpop.f32.mrb[0].mxu0
  %v3587 = vadd.f32 0.0, %v3586
  %v3588 = vpop.f32.mrb[0].mxu0
  %3589 = vmatprep.mubr.bf16.mxu0 %v3368
  %3590 = vmatmul.mubr.bf16.gmra.mrb[0].mxu0 %v3367
  %v3591 = vpop.f32.mrb[0].mxu0
  %v3592 = vadd.f32 0.0, %v3591
  %v3593 = vpop.f32.mrb[0].mxu0
  %v3594 = vpop.f32.mrb[0].mxu0
  %v3595 = vadd.f32 0.0, %v3594
  %v3596 = vpop.f32.mrb[0].mxu0
  %3597 = vmatprep.mubr.bf16.mxu0 %v3370
  %3598 = vmatmul.mubr.bf16.gmra.mrb[0].mxu0 %v3369
  %v3599 = vpop.f32.mrb[0].mxu0
  %v3600 = vadd.f32 0.0, %v3599
  %v3601 = vpop.f32.mrb[0].mxu0
  %v3602 = vpop.f32.mrb[0].mxu0
  %v3603 = vadd.f32 0.0, %v3602
  %v3604 = vpop.f32.mrb[0].mxu0
  %3605 = vmatprep.mubr.bf16.mxu0 %v3372
  %3606 = vmatmul.mubr.bf16.gmra.mrb[0].mxu0 %v3371
  %v3607 = vpop.f32.mrb[0].mxu0
  %v3608 = vadd.f32 0.0, %v3607
  %v3609 = vpop.f32.mrb[0].mxu0
  %v3610 = vpop.f32.mrb[0].mxu0
  %v3611 = vadd.f32 0.0, %v3610
  %v3612 = vpop.f32.mrb[0].mxu0
  %3613 = vmatprep.mubr.bf16.mxu0 %v3374
  %3614 = vmatmul.mubr.bf16.gmra.mrb[0].mxu0 %v3373
  %v3615 = vpop.f32.mrb[0].mxu0
  %v3616 = vadd.f32 0.0, %v3615
  %v3617 = vpop.f32.mrb[0].mxu0
  %v3618 = vpop.f32.mrb[0].mxu0
  %v3619 = vadd.f32 0.0, %v3618
  %v3620 = vpop.f32.mrb[0].mxu0
  %3621 = vmatprep.mubr.bf16.mxu0 %v3376
  %3622 = vmatmul.mubr.bf16.gmra.mrb[0].mxu0 %v3375
  %v3623 = vpop.f32.mrb[0].mxu0
  %v3624 = vadd.f32 0.0, %v3623
  %v3625 = vpop.f32.mrb[0].mxu0
  %v3626 = vpop.f32.mrb[0].mxu0
  %v3627 = vadd.f32 0.0, %v3626
  %v3628 = vpop.f32.mrb[0].mxu0
  %3629 = vmatprep.mubr.bf16.mxu0 %v3378
  %3630 = vmatmul.mubr.bf16.gmra.mrb[0].mxu0 %v3377
  %v3631 = vpop.f32.mrb[0].mxu0
  %v3632 = vadd.f32 0.0, %v3631
  %v3633 = vpop.f32.mrb[0].mxu0
  %v3634 = vpop.f32.mrb[0].mxu0
  %v3635 = vadd.f32 0.0, %v3634
  %v3636 = vpop.f32.mrb[0].mxu0
  %3637 = vmatprep.mubr.bf16.mxu0 %v3380
  %3638 = vmatmul.mubr.bf16.gmra.mrb[0].mxu0 %v3379
  %v3639 = vpop.f32.mrb[0].mxu0
  %v3640 = vadd.f32 0.0, %v3639
  %v3641 = vpop.f32.mrb[0].mxu0
  %v3642 = vpop.f32.mrb[0].mxu0
  %v3643 = vadd.f32 0.0, %v3642
  %v3644 = vpop.f32.mrb[0].mxu0
  %3645 = vmatprep.mubr.bf16.mxu0 %v3382
  %3646 = vmatmul.mubr.bf16.gmra.mrb[0].mxu0 %v3381
  %v3647 = vpop.f32.mrb[0].mxu0
  %v3648 = vadd.f32 0.0, %v3647
  %v3649 = vpop.f32.mrb[0].mxu0
  %v3650 = vpop.f32.mrb[0].mxu0
  %v3651 = vadd.f32 0.0, %v3650
  %v3652 = vpop.f32.mrb[0].mxu0
  %3653 = vmatprep.mubr.bf16.mxu0 %v3384
  %3654 = vmatmul.mubr.bf16.gmra.mrb[0].mxu0 %v3383
  %v3655 = vpop.f32.mrb[0].mxu0
  %v3656 = vadd.f32 0.0, %v3655
  %v3657 = vpop.f32.mrb[0].mxu0
  %v3658 = vpop.f32.mrb[0].mxu0
  %v3659 = vadd.f32 0.0, %v3658
  %v3660 = vpop.f32.mrb[0].mxu0
  %3661 = vmatprep.mubr.bf16.mxu0 %v3386
  %3662 = vmatmul.mubr.bf16.gmra.mrb[0].mxu0 %v3385
  %v3663 = vpop.f32.mrb[0].mxu0
  %v3664 = vadd.f32 0.0, %v3663
  %v3665 = vpop.f32.mrb[0].mxu0
  %v3666 = vpop.f32.mrb[0].mxu0
  %v3667 = vadd.f32 0.0, %v3666
  %v3668 = vpop.f32.mrb[0].mxu0
  %3669 = vmatprep.mubr.bf16.mxu0 %v3388
  %3670 = vmatmul.mubr.bf16.gmra.mrb[0].mxu0 %v3387
  %v3671 = vpop.f32.mrb[0].mxu0
  %v3672 = vadd.f32 0.0, %v3671
  %v3673 = vpop.f32.mrb[0].mxu0
  %v3674 = vpop.f32.mrb[0].mxu0
  %v3675 = vadd.f32 0.0, %v3674
  %v3676 = vpop.f32.mrb[0].mxu0
  %3677 = vdwg.mxu0
  %v3678 = vld [vmem:[%s9] sm:$0x3]
  %3679 = vmatprep.subr.mxu0 0.0
  %3680 = vmatpush1.msra.mxu0 %v3552
  %3681 = vmatprep.subr.mxu0 0.0
  %3682 = vmatpush1.msra.mxu0 %v3555
  %3683 = vmatprep.subr.mxu0 0.0
  %3684 = vmatpush1.msra.mxu0 %v3560
  %3685 = vmatprep.subr.mxu0 0.0
  %3686 = vmatpush1.msra.mxu0 %v3563
  %3687 = vmatprep.subr.mxu0 0.0
  %3688 = vmatpush1.msra.mxu0 %v3568
  %3689 = vmatprep.subr.mxu0 0.0
  %3690 = vmatpush1.msra.mxu0 %v3571
  %3691 = vmatprep.subr.mxu0 0.0
  %3692 = vmatpush1.msra.mxu0 %v3576
  %3693 = vmatprep.subr.mxu0 0.0
  %3694 = vmatpush1.msra.mxu0 %v3579
  %3695 = vmatprep.subr.mxu0 0.0
  %3696 = vmatpush1.msra.mxu0 %v3584
  %3697 = vmatprep.subr.mxu0 0.0
  %3698 = vmatpush1.msra.mxu0 %v3587
  %3699 = vmatprep.subr.mxu0 0.0
  %3700 = vmatpush1.msra.mxu0 %v3592
  %3701 = vmatprep.subr.mxu0 0.0
  %3702 = vmatpush1.msra.mxu0 %v3595
  %3703 = vmatprep.subr.mxu0 0.0
  %3704 = vmatpush1.msra.mxu0 %v3600
  %3705 = vmatprep.subr.mxu0 0.0
  %3706 = vmatpush1.msra.mxu0 %v3603
  %3707 = vmatprep.subr.mxu0 0.0
  %3708 = vmatpush1.msra.mxu0 %v3608
  %3709 = vmatprep.subr.mxu0 0.0
  %3710 = vmatpush1.msra.mxu0 %v3611
  %3711 = vmatprep.subr.mxu0 0.0
  %3712 = vmatpush1.msra.mxu0 %v3616
  %3713 = vmatprep.subr.mxu0 0.0
  %3714 = vmatpush1.msra.mxu0 %v3619
  %3715 = vmatprep.subr.mxu0 0.0
  %3716 = vmatpush1.msra.mxu0 %v3624
  %3717 = vmatprep.subr.mxu0 0.0
  %3718 = vmatpush1.msra.mxu0 %v3627
  %3719 = vmatprep.subr.mxu0 0.0
  %3720 = vmatpush1.msra.mxu0 %v3632
  %3721 = vmatprep.subr.mxu0 0.0
  %3722 = vmatpush1.msra.mxu0 %v3635
  %3723 = vmatprep.subr.mxu0 0.0
  %3724 = vmatpush1.msra.mxu0 %v3640
  %3725 = vmatprep.subr.mxu0 0.0
  %3726 = vmatpush1.msra.mxu0 %v3643
  %3727 = vmatprep.subr.mxu0 0.0
  %3728 = vmatpush1.msra.mxu0 %v3648
  %3729 = vmatprep.subr.mxu0 0.0
  %3730 = vmatpush1.msra.mxu0 %v3651
  %3731 = vmatprep.subr.mxu0 0.0
  %3732 = vmatpush1.msra.mxu0 %v3656
  %3733 = vmatprep.subr.mxu0 0.0
  %3734 = vmatpush1.msra.mxu0 %v3659
  %3735 = vmatprep.subr.mxu0 0.0
  %3736 = vmatpush1.msra.mxu0 %v3664
  %3737 = vmatprep.subr.mxu0 0.0
  %3738 = vmatpush1.msra.mxu0 %v3667
  %3739 = vmatprep.subr.mxu0 0.0
  %3740 = vmatpush1.msra.mxu0 %v3672
  %3741 = vmatprep.subr.mxu0 0.0
  %3742 = vmatpush1.msra.mxu0 %v3675
  %3743 = vmatprep.mubr.f32.mxu0 1.0
  %3744 = vmatmul.mubr.f32.gmra.mrb[0].mxu0 1.0
  %v3745 = vpop.f32.mrb[0].mxu0
  %v3746 = vadd.f32 0.0, %v3745
  %v3747 = vpop.f32.mrb[0].mxu0
  %3748 = vdwg.mxu0
  %v3749 = vmul.f32 %v3746, 0.00390625
  %v3750 = vlaneseq
  %v3751 = vshrl.u32 %v3750, 7
  %v3752 = vsub.s32 0, %v3751
  %v3753 = vrot.slane %v3749, %v3752
  %v3754 = vsub.f32 %v3552, %v3753
  %v3755 = vsub.f32 %v3555, %v3753
  %v3756 = vsub.f32 %v3560, %v3753
  %v3757 = vsub.f32 %v3563, %v3753
  %v3758 = vsub.f32 %v3568, %v3753
  %v3759 = vsub.f32 %v3571, %v3753
  %v3760 = vsub.f32 %v3576, %v3753
  %v3761 = vsub.f32 %v3579, %v3753
  %v3762 = vsub.f32 %v3584, %v3753
  %v3763 = vsub.f32 %v3587, %v3753
  %v3764 = vsub.f32 %v3592, %v3753
  %v3765 = vsub.f32 %v3595, %v3753
  %v3766 = vsub.f32 %v3600, %v3753
  %v3767 = vsub.f32 %v3603, %v3753
  %v3768 = vsub.f32 %v3608, %v3753
  %v3769 = vsub.f32 %v3611, %v3753
  %v3770 = vsub.f32 %v3616, %v3753
  %v3771 = vsub.f32 %v3619, %v3753
  %v3772 = vsub.f32 %v3624, %v3753
  %v3773 = vsub.f32 %v3627, %v3753
  %v3774 = vsub.f32 %v3632, %v3753
  %v3775 = vsub.f32 %v3635, %v3753
  %v3776 = vsub.f32 %v3640, %v3753
  %v3777 = vsub.f32 %v3643, %v3753
  %v3778 = vsub.f32 %v3648, %v3753
  %v3779 = vsub.f32 %v3651, %v3753
  %v3780 = vsub.f32 %v3656, %v3753
  %v3781 = vsub.f32 %v3659, %v3753
  %v3782 = vsub.f32 %v3664, %v3753
  %v3783 = vsub.f32 %v3667, %v3753
  %v3784 = vsub.f32 %v3672, %v3753
  %v3785 = vsub.f32 %v3675, %v3753
  %v3786 = vmul.f32 %v3754, %v3754
  %v3787 = vmul.f32 %v3755, %v3755
  %v3788 = vmul.f32 %v3756, %v3756
  %v3789 = vmul.f32 %v3757, %v3757
  %v3790 = vmul.f32 %v3758, %v3758
  %v3791 = vmul.f32 %v3759, %v3759
  %v3792 = vmul.f32 %v3760, %v3760
  %v3793 = vmul.f32 %v3761, %v3761
  %v3794 = vmul.f32 %v3762, %v3762
  %v3795 = vmul.f32 %v3763, %v3763
  %v3796 = vmul.f32 %v3764, %v3764
  %v3797 = vmul.f32 %v3765, %v3765
  %v3798 = vmul.f32 %v3766, %v3766
  %v3799 = vmul.f32 %v3767, %v3767
  %v3800 = vmul.f32 %v3768, %v3768
  %v3801 = vmul.f32 %v3769, %v3769
  %v3802 = vmul.f32 %v3770, %v3770
  %v3803 = vmul.f32 %v3771, %v3771
  %v3804 = vmul.f32 %v3772, %v3772
  %v3805 = vmul.f32 %v3773, %v3773
  %v3806 = vmul.f32 %v3774, %v3774
  %v3807 = vmul.f32 %v3775, %v3775
  %v3808 = vmul.f32 %v3776, %v3776
  %v3809 = vmul.f32 %v3777, %v3777
  %v3810 = vmul.f32 %v3778, %v3778
  %v3811 = vmul.f32 %v3779, %v3779
  %v3812 = vmul.f32 %v3780, %v3780
  %v3813 = vmul.f32 %v3781, %v3781
  %v3814 = vmul.f32 %v3782, %v3782
  %v3815 = vmul.f32 %v3783, %v3783
  %v3816 = vmul.f32 %v3784, %v3784
  %v3817 = vmul.f32 %v3785, %v3785
  %3818 = vmatprep.subr.mxu0 0.0
  %3819 = vmatpush1.msra.mxu0 %v3786
  %3820 = vmatprep.subr.mxu0 0.0
  %3821 = vmatpush1.msra.mxu0 %v3787
  %3822 = vmatprep.subr.mxu0 0.0
  %3823 = vmatpush1.msra.mxu0 %v3788
  %3824 = vmatprep.subr.mxu0 0.0
  %3825 = vmatpush1.msra.mxu0 %v3789
  %3826 = vmatprep.subr.mxu0 0.0
  %3827 = vmatpush1.msra.mxu0 %v3790
  %3828 = vmatprep.subr.mxu0 0.0
  %3829 = vmatpush1.msra.mxu0 %v3791
  %3830 = vmatprep.subr.mxu0 0.0
  %3831 = vmatpush1.msra.mxu0 %v3792
  %3832 = vmatprep.subr.mxu0 0.0
  %3833 = vmatpush1.msra.mxu0 %v3793
  %3834 = vmatprep.subr.mxu0 0.0
  %3835 = vmatpush1.msra.mxu0 %v3794
  %3836 = vmatprep.subr.mxu0 0.0
  %3837 = vmatpush1.msra.mxu0 %v3795
  %3838 = vmatprep.subr.mxu0 0.0
  %3839 = vmatpush1.msra.mxu0 %v3796
  %3840 = vmatprep.subr.mxu0 0.0
  %3841 = vmatpush1.msra.mxu0 %v3797
  %3842 = vmatprep.subr.mxu0 0.0
  %3843 = vmatpush1.msra.mxu0 %v3798
  %3844 = vmatprep.subr.mxu0 0.0
  %3845 = vmatpush1.msra.mxu0 %v3799
  %3846 = vmatprep.subr.mxu0 0.0
  %3847 = vmatpush1.msra.mxu0 %v3800
  %3848 = vmatprep.subr.mxu0 0.0
  %3849 = vmatpush1.msra.mxu0 %v3801
  %3850 = vmatprep.subr.mxu0 0.0
  %3851 = vmatpush1.msra.mxu0 %v3802
  %3852 = vmatprep.subr.mxu0 0.0
  %3853 = vmatpush1.msra.mxu0 %v3803
  %3854 = vmatprep.subr.mxu0 0.0
  %3855 = vmatpush1.msra.mxu0 %v3804
  %3856 = vmatprep.subr.mxu0 0.0
  %3857 = vmatpush1.msra.mxu0 %v3805
  %3858 = vmatprep.subr.mxu0 0.0
  %3859 = vmatpush1.msra.mxu0 %v3806
  %3860 = vmatprep.subr.mxu0 0.0
  %3861 = vmatpush1.msra.mxu0 %v3807
  %3862 = vmatprep.subr.mxu0 0.0
  %3863 = vmatpush1.msra.mxu0 %v3808
  %3864 = vmatprep.subr.mxu0 0.0
  %3865 = vmatpush1.msra.mxu0 %v3809
  %3866 = vmatprep.subr.mxu0 0.0
  %3867 = vmatpush1.msra.mxu0 %v3810
  %3868 = vmatprep.subr.mxu0 0.0
  %3869 = vmatpush1.msra.mxu0 %v3811
  %3870 = vmatprep.subr.mxu0 0.0
  %3871 = vmatpush1.msra.mxu0 %v3812
  %3872 = vmatprep.subr.mxu0 0.0
  %3873 = vmatpush1.msra.mxu0 %v3813
  %3874 = vmatprep.subr.mxu0 0.0
  %3875 = vmatpush1.msra.mxu0 %v3814
  %3876 = vmatprep.subr.mxu0 0.0
  %3877 = vmatpush1.msra.mxu0 %v3815
  %3878 = vmatprep.subr.mxu0 0.0
  %3879 = vmatpush1.msra.mxu0 %v3816
  %3880 = vmatprep.subr.mxu0 0.0
  %3881 = vmatpush1.msra.mxu0 %v3817
  %3882 = vmatprep.mubr.f32.mxu0 1.0
  %3883 = vmatmul.mubr.f32.gmra.mrb[0].mxu0 1.0
  %v3884 = vpop.f32.mrb[0].mxu0
  %v3885 = vadd.f32 0.0, %v3884
  %v3886 = vpop.f32.mrb[0].mxu0
  %3887 = vdwg.mxu0
  %v3888 = vmul.f32 %v3885, 0.00390625
  %v3889 = vadd.f32 %v3888, 1e-05
  %v3890 = vrsqrt.pop %v3889
  %v3891 = vlaneseq
  %v3892 = vshrl.u32 %v3891, 7
  %v3893 = vsub.s32 0, %v3892
  %v3894 = vrot.slane %v3890, %v3893
  %v3895 = vmul.f32 %v3754, %v3894
  %v3896 = vmul.f32 %v3755, %v3894
  %v3897 = vmul.f32 %v3756, %v3894
  %v3898 = vmul.f32 %v3757, %v3894
  %v3899 = vmul.f32 %v3758, %v3894
  %v3900 = vmul.f32 %v3759, %v3894
  %v3901 = vmul.f32 %v3760, %v3894
  %v3902 = vmul.f32 %v3761, %v3894
  %v3903 = vmul.f32 %v3762, %v3894
  %v3904 = vmul.f32 %v3763, %v3894
  %v3905 = vmul.f32 %v3764, %v3894
  %v3906 = vmul.f32 %v3765, %v3894
  %v3907 = vmul.f32 %v3766, %v3894
  %v3908 = vmul.f32 %v3767, %v3894
  %v3909 = vmul.f32 %v3768, %v3894
  %v3910 = vmul.f32 %v3769, %v3894
  %v3911 = vmul.f32 %v3770, %v3894
  %v3912 = vmul.f32 %v3771, %v3894
  %v3913 = vmul.f32 %v3772, %v3894
  %v3914 = vmul.f32 %v3773, %v3894
  %v3915 = vmul.f32 %v3774, %v3894
  %v3916 = vmul.f32 %v3775, %v3894
  %v3917 = vmul.f32 %v3776, %v3894
  %v3918 = vmul.f32 %v3777, %v3894
  %v3919 = vmul.f32 %v3778, %v3894
  %v3920 = vmul.f32 %v3779, %v3894
  %v3921 = vmul.f32 %v3780, %v3894
  %v3922 = vmul.f32 %v3781, %v3894
  %v3923 = vmul.f32 %v3782, %v3894
  %v3924 = vmul.f32 %v3783, %v3894
  %v3925 = vmul.f32 %v3784, %v3894
  %v3926 = vmul.f32 %v3785, %v3894
  %v3927 = vlaneseq
  %v3928 = vshrl.u32 %v3927, 7
  %v3929 = vsub.s32 0, %v3928
  %v3930 = vrot.slane %v3678, %v3929
  %v3931 = vmul.f32 %v3895, %v3930
  %v3932 = vmul.f32 %v3896, %v3930
  %v3933 = vmul.f32 %v3897, %v3930
  %v3934 = vmul.f32 %v3898, %v3930
  %v3935 = vmul.f32 %v3899, %v3930
  %v3936 = vmul.f32 %v3900, %v3930
  %v3937 = vmul.f32 %v3901, %v3930
  %v3938 = vmul.f32 %v3902, %v3930
  %v3939 = vmul.f32 %v3903, %v3930
  %v3940 = vmul.f32 %v3904, %v3930
  %v3941 = vmul.f32 %v3905, %v3930
  %v3942 = vmul.f32 %v3906, %v3930
  %v3943 = vmul.f32 %v3907, %v3930
  %v3944 = vmul.f32 %v3908, %v3930
  %v3945 = vmul.f32 %v3909, %v3930
  %v3946 = vmul.f32 %v3910, %v3930
  %v3947 = vmul.f32 %v3911, %v3930
  %v3948 = vmul.f32 %v3912, %v3930
  %v3949 = vmul.f32 %v3913, %v3930
  %v3950 = vmul.f32 %v3914, %v3930
  %v3951 = vmul.f32 %v3915, %v3930
  %v3952 = vmul.f32 %v3916, %v3930
  %v3953 = vmul.f32 %v3917, %v3930
  %v3954 = vmul.f32 %v3918, %v3930
  %v3955 = vmul.f32 %v3919, %v3930
  %v3956 = vmul.f32 %v3920, %v3930
  %v3957 = vmul.f32 %v3921, %v3930
  %v3958 = vmul.f32 %v3922, %v3930
  %v3959 = vmul.f32 %v3923, %v3930
  %v3960 = vmul.f32 %v3924, %v3930
  %v3961 = vmul.f32 %v3925, %v3930
  %v3962 = vmul.f32 %v3926, %v3930
  %v3963 = vlaneseq
  %v3964 = vshrl.u32 %v3963, 7
  %v3965 = vsub.s32 1, %v3964
  %v3966 = vrot.slane %v3678, %v3965
  %v3967 = vadd.f32 %v3931, %v3966
  %v3968 = vadd.f32 %v3932, %v3966
  %v3969 = vadd.f32 %v3933, %v3966
  %v3970 = vadd.f32 %v3934, %v3966
  %v3971 = vadd.f32 %v3935, %v3966
  %v3972 = vadd.f32 %v3936, %v3966
  %v3973 = vadd.f32 %v3937, %v3966
  %v3974 = vadd.f32 %v3938, %v3966
  %v3975 = vadd.f32 %v3939, %v3966
  %v3976 = vadd.f32 %v3940, %v3966
  %v3977 = vadd.f32 %v3941, %v3966
  %v3978 = vadd.f32 %v3942, %v3966
  %v3979 = vadd.f32 %v3943, %v3966
  %v3980 = vadd.f32 %v3944, %v3966
  %v3981 = vadd.f32 %v3945, %v3966
  %v3982 = vadd.f32 %v3946, %v3966
  %v3983 = vadd.f32 %v3947, %v3966
  %v3984 = vadd.f32 %v3948, %v3966
  %v3985 = vadd.f32 %v3949, %v3966
  %v3986 = vadd.f32 %v3950, %v3966
  %v3987 = vadd.f32 %v3951, %v3966
  %v3988 = vadd.f32 %v3952, %v3966
  %v3989 = vadd.f32 %v3953, %v3966
  %v3990 = vadd.f32 %v3954, %v3966
  %v3991 = vadd.f32 %v3955, %v3966
  %v3992 = vadd.f32 %v3956, %v3966
  %v3993 = vadd.f32 %v3957, %v3966
  %v3994 = vadd.f32 %v3958, %v3966
  %v3995 = vadd.f32 %v3959, %v3966
  %v3996 = vadd.f32 %v3960, %v3966
  %v3997 = vadd.f32 %v3961, %v3966
  %v3998 = vadd.f32 %v3962, %v3966
  %v3999 = vpack.c.bf16 %v3968, %v3967
  %v4000 = vpack.c.bf16 %v3970, %v3969
  %v4001 = vpack.c.bf16 %v3972, %v3971
  %v4002 = vpack.c.bf16 %v3974, %v3973
  %v4003 = vpack.c.bf16 %v3976, %v3975
  %v4004 = vpack.c.bf16 %v3978, %v3977
  %v4005 = vpack.c.bf16 %v3980, %v3979
  %v4006 = vpack.c.bf16 %v3982, %v3981
  %v4007 = vpack.c.bf16 %v3984, %v3983
  %v4008 = vpack.c.bf16 %v3986, %v3985
  %v4009 = vpack.c.bf16 %v3988, %v3987
  %v4010 = vpack.c.bf16 %v3990, %v3989
  %v4011 = vpack.c.bf16 %v3992, %v3991
  %v4012 = vpack.c.bf16 %v3994, %v3993
  %v4013 = vpack.c.bf16 %v3996, %v3995
  %v4014 = vpack.c.bf16 %v3998, %v3997
  %v4015 = vld [vmem:[%s7] sm:$0xf]
  %v4016 = vld [vmem:[%s7 + $0x4] sm:$0xf]
  %v4017 = vld [vmem:[%s7 + $0x8] sm:$0xf]
  %v4018 = vld [vmem:[%s7 + $0xc] sm:$0xf]
  %v4019 = vld [vmem:[%s7 + $0x10] sm:$0xf]
  %v4020 = vld [vmem:[%s7 + $0x14] sm:$0xf]
  %v4021 = vld [vmem:[%s7 + $0x18] sm:$0xf]
  %v4022 = vld [vmem:[%s7 + $0x1c] sm:$0xf]
  %v4023 = vld [vmem:[%s7 + $0x20] sm:$0xf]
  %v4024 = vld [vmem:[%s7 + $0x24] sm:$0xf]
  %v4025 = vld [vmem:[%s7 + $0x28] sm:$0xf]
  %v4026 = vld [vmem:[%s7 + $0x2c] sm:$0xf]
  %v4027 = vld [vmem:[%s7 + $0x30] sm:$0xf]
  %v4028 = vld [vmem:[%s7 + $0x34] sm:$0xf]
  %v4029 = vld [vmem:[%s7 + $0x38] sm:$0xf]
  %v4030 = vld [vmem:[%s7 + $0x3c] sm:$0xf]
  %v4047 = vunpack.c.l.b16 %v4015
  %v4048 = vunpack.c.l.b16 %v4016
  %v4049 = vunpack.c.l.b16 %v4017
  %v4050 = vunpack.c.l.b16 %v4018
  %v4051 = vunpack.c.l.b16 %v4019
  %v4052 = vunpack.c.l.b16 %v4020
  %v4053 = vunpack.c.l.b16 %v4021
  %v4054 = vunpack.c.l.b16 %v4022
  %v4055 = vunpack.c.l.b16 %v4023
  %v4056 = vunpack.c.l.b16 %v4024
  %v4057 = vunpack.c.l.b16 %v4025
  %v4058 = vunpack.c.l.b16 %v4026
  %v4059 = vunpack.c.l.b16 %v4027
  %v4060 = vunpack.c.l.b16 %v4028
  %v4061 = vunpack.c.l.b16 %v4029
  %v4062 = vunpack.c.l.b16 %v4030
  %v4063 = vpack.c.b16 %v4048, %v4047
  %v4064 = vpack.c.b16 %v4050, %v4049
  %v4065 = vpack.c.b16 %v4052, %v4051
  %v4066 = vpack.c.b16 %v4054, %v4053
  %v4067 = vpack.c.b16 %v4056, %v4055
  %v4068 = vpack.c.b16 %v4058, %v4057
  %v4069 = vpack.c.b16 %v4060, %v4059
  %v4070 = vpack.c.b16 %v4062, %v4061
  %4079 = vmatprep.subr.bf16.mxu0 0
  %4080 = vmatpush1.bf16.msra.mxu0 %v4063
  %4081 = vmatprep.subr.bf16.mxu0 0
  %4082 = vmatpush1.bf16.msra.mxu0 %v4064
  %4083 = vmatprep.subr.bf16.mxu0 0
  %4084 = vmatpush1.bf16.msra.mxu0 %v4065
  %4085 = vmatprep.subr.bf16.mxu0 0
  %4086 = vmatpush1.bf16.msra.mxu0 %v4066
  %4087 = vmatprep.subr.bf16.mxu0 0
  %4088 = vmatpush1.bf16.msra.mxu0 %v4067
  %4089 = vmatprep.subr.bf16.mxu0 0
  %4090 = vmatpush1.bf16.msra.mxu0 %v4068
  %4091 = vmatprep.subr.bf16.mxu0 0
  %4092 = vmatpush1.bf16.msra.mxu0 %v4069
  %4093 = vmatprep.subr.bf16.mxu0 0
  %4094 = vmatpush1.bf16.msra.mxu0 %v4070
  %4095 = vmatprep.subr.bf16.mxu0 0
  %4096 = vmatpush1.bf16.msra.mxu0 0
  %4097 = vmatprep.subr.bf16.mxu0 0
  %4098 = vmatpush1.bf16.msra.mxu0 0
  %4099 = vmatprep.subr.bf16.mxu0 0
  %4100 = vmatpush1.bf16.msra.mxu0 0
  %4101 = vmatprep.subr.bf16.mxu0 0
  %4102 = vmatpush1.bf16.msra.mxu0 0
  %4103 = vmatprep.subr.bf16.mxu0 0
  %4104 = vmatpush1.bf16.msra.mxu0 0
  %4105 = vmatprep.subr.bf16.mxu0 0
  %4106 = vmatpush1.bf16.msra.mxu0 0
  %4107 = vmatprep.subr.bf16.mxu0 0
  %4108 = vmatpush1.bf16.msra.mxu0 0
  %4109 = vmatprep.subr.bf16.mxu0 0
  %4110 = vmatpush1.bf16.msra.mxu0 0
  %4111 = vmatprep.mubr.bf16.mxu0 0
  %4112 = vmatmul.mubr.bf16.gmra.mrb[0].mxu0 %v3999
  %v4113 = vpop.f32.mrb[0].mxu0
  %v4114 = vadd.f32 0.0, %v4113
  %v4115 = vpop.f32.mrb[0].mxu0
  %v4116 = vpop.f32.mrb[0].mxu0
  %v4117 = vadd.f32 0.0, %v4116
  %v4118 = vpop.f32.mrb[0].mxu0
  %4119 = vmatprep.mubr.bf16.mxu0 0
  %4120 = vmatmul.mubr.bf16.gmra.mrb[0].mxu0 %v4000
  %v4121 = vpop.f32.mrb[0].mxu0
  %v4122 = vadd.f32 0.0, %v4121
  %v4123 = vpop.f32.mrb[0].mxu0
  %v4124 = vpop.f32.mrb[0].mxu0
  %v4125 = vadd.f32 0.0, %v4124
  %v4126 = vpop.f32.mrb[0].mxu0
  %4127 = vmatprep.mubr.bf16.mxu0 0
  %4128 = vmatmul.mubr.bf16.gmra.mrb[0].mxu0 %v4001
  %v4129 = vpop.f32.mrb[0].mxu0
  %v4130 = vadd.f32 0.0, %v4129
  %v4131 = vpop.f32.mrb[0].mxu0
  %v4132 = vpop.f32.mrb[0].mxu0
  %v4133 = vadd.f32 0.0, %v4132
  %v4134 = vpop.f32.mrb[0].mxu0
  %4135 = vmatprep.mubr.bf16.mxu0 0
  %4136 = vmatmul.mubr.bf16.gmra.mrb[0].mxu0 %v4002
  %v4137 = vpop.f32.mrb[0].mxu0
  %v4138 = vadd.f32 0.0, %v4137
  %v4139 = vpop.f32.mrb[0].mxu0
  %v4140 = vpop.f32.mrb[0].mxu0
  %v4141 = vadd.f32 0.0, %v4140
  %v4142 = vpop.f32.mrb[0].mxu0
  %4143 = vmatprep.mubr.bf16.mxu0 0
  %4144 = vmatmul.mubr.bf16.gmra.mrb[0].mxu0 %v4003
  %v4145 = vpop.f32.mrb[0].mxu0
  %v4146 = vadd.f32 0.0, %v4145
  %v4147 = vpop.f32.mrb[0].mxu0
  %v4148 = vpop.f32.mrb[0].mxu0
  %v4149 = vadd.f32 0.0, %v4148
  %v4150 = vpop.f32.mrb[0].mxu0
  %4151 = vmatprep.mubr.bf16.mxu0 0
  %4152 = vmatmul.mubr.bf16.gmra.mrb[0].mxu0 %v4004
  %v4153 = vpop.f32.mrb[0].mxu0
  %v4154 = vadd.f32 0.0, %v4153
  %v4155 = vpop.f32.mrb[0].mxu0
  %v4156 = vpop.f32.mrb[0].mxu0
  %v4157 = vadd.f32 0.0, %v4156
  %v4158 = vpop.f32.mrb[0].mxu0
  %4159 = vmatprep.mubr.bf16.mxu0 0
  %4160 = vmatmul.mubr.bf16.gmra.mrb[0].mxu0 %v4005
  %v4161 = vpop.f32.mrb[0].mxu0
  %v4162 = vadd.f32 0.0, %v4161
  %v4163 = vpop.f32.mrb[0].mxu0
  %v4164 = vpop.f32.mrb[0].mxu0
  %v4165 = vadd.f32 0.0, %v4164
  %v4166 = vpop.f32.mrb[0].mxu0
  %4167 = vmatprep.mubr.bf16.mxu0 0
  %4168 = vmatmul.mubr.bf16.gmra.mrb[0].mxu0 %v4006
  %v4169 = vpop.f32.mrb[0].mxu0
  %v4170 = vadd.f32 0.0, %v4169
  %v4171 = vpop.f32.mrb[0].mxu0
  %v4172 = vpop.f32.mrb[0].mxu0
  %v4173 = vadd.f32 0.0, %v4172
  %v4174 = vpop.f32.mrb[0].mxu0
  %4175 = vmatprep.mubr.bf16.mxu0 0
  %4176 = vmatmul.mubr.bf16.gmra.mrb[0].mxu0 %v4007
  %v4177 = vpop.f32.mrb[0].mxu0
  %v4178 = vadd.f32 0.0, %v4177
  %v4179 = vpop.f32.mrb[0].mxu0
  %v4180 = vpop.f32.mrb[0].mxu0
  %v4181 = vadd.f32 0.0, %v4180
  %v4182 = vpop.f32.mrb[0].mxu0
  %4183 = vmatprep.mubr.bf16.mxu0 0
  %4184 = vmatmul.mubr.bf16.gmra.mrb[0].mxu0 %v4008
  %v4185 = vpop.f32.mrb[0].mxu0
  %v4186 = vadd.f32 0.0, %v4185
  %v4187 = vpop.f32.mrb[0].mxu0
  %v4188 = vpop.f32.mrb[0].mxu0
  %v4189 = vadd.f32 0.0, %v4188
  %v4190 = vpop.f32.mrb[0].mxu0
  %4191 = vmatprep.mubr.bf16.mxu0 0
  %4192 = vmatmul.mubr.bf16.gmra.mrb[0].mxu0 %v4009
  %v4193 = vpop.f32.mrb[0].mxu0
  %v4194 = vadd.f32 0.0, %v4193
  %v4195 = vpop.f32.mrb[0].mxu0
  %v4196 = vpop.f32.mrb[0].mxu0
  %v4197 = vadd.f32 0.0, %v4196
  %v4198 = vpop.f32.mrb[0].mxu0
  %4199 = vmatprep.mubr.bf16.mxu0 0
  %4200 = vmatmul.mubr.bf16.gmra.mrb[0].mxu0 %v4010
  %v4201 = vpop.f32.mrb[0].mxu0
  %v4202 = vadd.f32 0.0, %v4201
  %v4203 = vpop.f32.mrb[0].mxu0
  %v4204 = vpop.f32.mrb[0].mxu0
  %v4205 = vadd.f32 0.0, %v4204
  %v4206 = vpop.f32.mrb[0].mxu0
  %4207 = vmatprep.mubr.bf16.mxu0 0
  %4208 = vmatmul.mubr.bf16.gmra.mrb[0].mxu0 %v4011
  %v4209 = vpop.f32.mrb[0].mxu0
  %v4210 = vadd.f32 0.0, %v4209
  %v4211 = vpop.f32.mrb[0].mxu0
  %v4212 = vpop.f32.mrb[0].mxu0
  %v4213 = vadd.f32 0.0, %v4212
  %v4214 = vpop.f32.mrb[0].mxu0
  %4215 = vmatprep.mubr.bf16.mxu0 0
  %4216 = vmatmul.mubr.bf16.gmra.mrb[0].mxu0 %v4012
  %v4217 = vpop.f32.mrb[0].mxu0
  %v4218 = vadd.f32 0.0, %v4217
  %v4219 = vpop.f32.mrb[0].mxu0
  %v4220 = vpop.f32.mrb[0].mxu0
  %v4221 = vadd.f32 0.0, %v4220
  %v4222 = vpop.f32.mrb[0].mxu0
  %4223 = vmatprep.mubr.bf16.mxu0 0
  %4224 = vmatmul.mubr.bf16.gmra.mrb[0].mxu0 %v4013
  %v4225 = vpop.f32.mrb[0].mxu0
  %v4226 = vadd.f32 0.0, %v4225
  %v4227 = vpop.f32.mrb[0].mxu0
  %v4228 = vpop.f32.mrb[0].mxu0
  %v4229 = vadd.f32 0.0, %v4228
  %v4230 = vpop.f32.mrb[0].mxu0
  %4231 = vmatprep.mubr.bf16.mxu0 0
  %4232 = vmatmul.mubr.bf16.gmra.mrb[0].mxu0 %v4014
  %v4233 = vpop.f32.mrb[0].mxu0
  %v4234 = vadd.f32 0.0, %v4233
  %v4235 = vpop.f32.mrb[0].mxu0
  %v4236 = vpop.f32.mrb[0].mxu0
  %v4237 = vadd.f32 0.0, %v4236
  %v4238 = vpop.f32.mrb[0].mxu0
  %4239 = vdwg.mxu0
  %v4240 = vld [vmem:[%s10] sm:$0x3]
  %4241 = vmatprep.subr.mxu0 0.0
  %4242 = vmatpush1.msra.mxu0 %v4114
  %4243 = vmatprep.subr.mxu0 0.0
  %4244 = vmatpush1.msra.mxu0 %v4117
  %4245 = vmatprep.subr.mxu0 0.0
  %4246 = vmatpush1.msra.mxu0 %v4122
  %4247 = vmatprep.subr.mxu0 0.0
  %4248 = vmatpush1.msra.mxu0 %v4125
  %4249 = vmatprep.subr.mxu0 0.0
  %4250 = vmatpush1.msra.mxu0 %v4130
  %4251 = vmatprep.subr.mxu0 0.0
  %4252 = vmatpush1.msra.mxu0 %v4133
  %4253 = vmatprep.subr.mxu0 0.0
  %4254 = vmatpush1.msra.mxu0 %v4138
  %4255 = vmatprep.subr.mxu0 0.0
  %4256 = vmatpush1.msra.mxu0 %v4141
  %4257 = vmatprep.subr.mxu0 0.0
  %4258 = vmatpush1.msra.mxu0 %v4146
  %4259 = vmatprep.subr.mxu0 0.0
  %4260 = vmatpush1.msra.mxu0 %v4149
  %4261 = vmatprep.subr.mxu0 0.0
  %4262 = vmatpush1.msra.mxu0 %v4154
  %4263 = vmatprep.subr.mxu0 0.0
  %4264 = vmatpush1.msra.mxu0 %v4157
  %4265 = vmatprep.subr.mxu0 0.0
  %4266 = vmatpush1.msra.mxu0 %v4162
  %4267 = vmatprep.subr.mxu0 0.0
  %4268 = vmatpush1.msra.mxu0 %v4165
  %4269 = vmatprep.subr.mxu0 0.0
  %4270 = vmatpush1.msra.mxu0 %v4170
  %4271 = vmatprep.subr.mxu0 0.0
  %4272 = vmatpush1.msra.mxu0 %v4173
  %4273 = vmatprep.subr.mxu0 0.0
  %4274 = vmatpush1.msra.mxu0 %v4178
  %4275 = vmatprep.subr.mxu0 0.0
  %4276 = vmatpush1.msra.mxu0 %v4181
  %4277 = vmatprep.subr.mxu0 0.0
  %4278 = vmatpush1.msra.mxu0 %v4186
  %4279 = vmatprep.subr.mxu0 0.0
  %4280 = vmatpush1.msra.mxu0 %v4189
  %4281 = vmatprep.subr.mxu0 0.0
  %4282 = vmatpush1.msra.mxu0 %v4194
  %4283 = vmatprep.subr.mxu0 0.0
  %4284 = vmatpush1.msra.mxu0 %v4197
  %4285 = vmatprep.subr.mxu0 0.0
  %4286 = vmatpush1.msra.mxu0 %v4202
  %4287 = vmatprep.subr.mxu0 0.0
  %4288 = vmatpush1.msra.mxu0 %v4205
  %4289 = vmatprep.subr.mxu0 0.0
  %4290 = vmatpush1.msra.mxu0 %v4210
  %4291 = vmatprep.subr.mxu0 0.0
  %4292 = vmatpush1.msra.mxu0 %v4213
  %4293 = vmatprep.subr.mxu0 0.0
  %4294 = vmatpush1.msra.mxu0 %v4218
  %4295 = vmatprep.subr.mxu0 0.0
  %4296 = vmatpush1.msra.mxu0 %v4221
  %4297 = vmatprep.subr.mxu0 0.0
  %4298 = vmatpush1.msra.mxu0 %v4226
  %4299 = vmatprep.subr.mxu0 0.0
  %4300 = vmatpush1.msra.mxu0 %v4229
  %4301 = vmatprep.subr.mxu0 0.0
  %4302 = vmatpush1.msra.mxu0 %v4234
  %4303 = vmatprep.subr.mxu0 0.0
  %4304 = vmatpush1.msra.mxu0 %v4237
  %4305 = vmatprep.mubr.f32.mxu0 1.0
  %4306 = vmatmul.mubr.f32.gmra.mrb[0].mxu0 1.0
  %v4307 = vpop.f32.mrb[0].mxu0
  %v4308 = vadd.f32 0.0, %v4307
  %v4309 = vpop.f32.mrb[0].mxu0
  %4310 = vdwg.mxu0
  %v4311 = vmul.f32 %v4308, 0.00390625
  %v4312 = vlaneseq
  %v4313 = vshrl.u32 %v4312, 7
  %v4314 = vsub.s32 0, %v4313
  %v4315 = vrot.slane %v4311, %v4314
  %v4316 = vsub.f32 %v4114, %v4315
  %v4317 = vsub.f32 %v4117, %v4315
  %v4318 = vsub.f32 %v4122, %v4315
  %v4319 = vsub.f32 %v4125, %v4315
  %v4320 = vsub.f32 %v4130, %v4315
  %v4321 = vsub.f32 %v4133, %v4315
  %v4322 = vsub.f32 %v4138, %v4315
  %v4323 = vsub.f32 %v4141, %v4315
  %v4324 = vsub.f32 %v4146, %v4315
  %v4325 = vsub.f32 %v4149, %v4315
  %v4326 = vsub.f32 %v4154, %v4315
  %v4327 = vsub.f32 %v4157, %v4315
  %v4328 = vsub.f32 %v4162, %v4315
  %v4329 = vsub.f32 %v4165, %v4315
  %v4330 = vsub.f32 %v4170, %v4315
  %v4331 = vsub.f32 %v4173, %v4315
  %v4332 = vsub.f32 %v4178, %v4315
  %v4333 = vsub.f32 %v4181, %v4315
  %v4334 = vsub.f32 %v4186, %v4315
  %v4335 = vsub.f32 %v4189, %v4315
  %v4336 = vsub.f32 %v4194, %v4315
  %v4337 = vsub.f32 %v4197, %v4315
  %v4338 = vsub.f32 %v4202, %v4315
  %v4339 = vsub.f32 %v4205, %v4315
  %v4340 = vsub.f32 %v4210, %v4315
  %v4341 = vsub.f32 %v4213, %v4315
  %v4342 = vsub.f32 %v4218, %v4315
  %v4343 = vsub.f32 %v4221, %v4315
  %v4344 = vsub.f32 %v4226, %v4315
  %v4345 = vsub.f32 %v4229, %v4315
  %v4346 = vsub.f32 %v4234, %v4315
  %v4347 = vsub.f32 %v4237, %v4315
  %v4348 = vmul.f32 %v4316, %v4316
  %v4349 = vmul.f32 %v4317, %v4317
  %v4350 = vmul.f32 %v4318, %v4318
  %v4351 = vmul.f32 %v4319, %v4319
  %v4352 = vmul.f32 %v4320, %v4320
  %v4353 = vmul.f32 %v4321, %v4321
  %v4354 = vmul.f32 %v4322, %v4322
  %v4355 = vmul.f32 %v4323, %v4323
  %v4356 = vmul.f32 %v4324, %v4324
  %v4357 = vmul.f32 %v4325, %v4325
  %v4358 = vmul.f32 %v4326, %v4326
  %v4359 = vmul.f32 %v4327, %v4327
  %v4360 = vmul.f32 %v4328, %v4328
  %v4361 = vmul.f32 %v4329, %v4329
  %v4362 = vmul.f32 %v4330, %v4330
  %v4363 = vmul.f32 %v4331, %v4331
  %v4364 = vmul.f32 %v4332, %v4332
  %v4365 = vmul.f32 %v4333, %v4333
  %v4366 = vmul.f32 %v4334, %v4334
  %v4367 = vmul.f32 %v4335, %v4335
  %v4368 = vmul.f32 %v4336, %v4336
  %v4369 = vmul.f32 %v4337, %v4337
  %v4370 = vmul.f32 %v4338, %v4338
  %v4371 = vmul.f32 %v4339, %v4339
  %v4372 = vmul.f32 %v4340, %v4340
  %v4373 = vmul.f32 %v4341, %v4341
  %v4374 = vmul.f32 %v4342, %v4342
  %v4375 = vmul.f32 %v4343, %v4343
  %v4376 = vmul.f32 %v4344, %v4344
  %v4377 = vmul.f32 %v4345, %v4345
  %v4378 = vmul.f32 %v4346, %v4346
  %v4379 = vmul.f32 %v4347, %v4347
  %4380 = vmatprep.subr.mxu0 0.0
  %4381 = vmatpush1.msra.mxu0 %v4348
  %4382 = vmatprep.subr.mxu0 0.0
  %4383 = vmatpush1.msra.mxu0 %v4349
  %4384 = vmatprep.subr.mxu0 0.0
  %4385 = vmatpush1.msra.mxu0 %v4350
  %4386 = vmatprep.subr.mxu0 0.0
  %4387 = vmatpush1.msra.mxu0 %v4351
  %4388 = vmatprep.subr.mxu0 0.0
  %4389 = vmatpush1.msra.mxu0 %v4352
  %4390 = vmatprep.subr.mxu0 0.0
  %4391 = vmatpush1.msra.mxu0 %v4353
  %4392 = vmatprep.subr.mxu0 0.0
  %4393 = vmatpush1.msra.mxu0 %v4354
  %4394 = vmatprep.subr.mxu0 0.0
  %4395 = vmatpush1.msra.mxu0 %v4355
  %4396 = vmatprep.subr.mxu0 0.0
  %4397 = vmatpush1.msra.mxu0 %v4356
  %4398 = vmatprep.subr.mxu0 0.0
  %4399 = vmatpush1.msra.mxu0 %v4357
  %4400 = vmatprep.subr.mxu0 0.0
  %4401 = vmatpush1.msra.mxu0 %v4358
  %4402 = vmatprep.subr.mxu0 0.0
  %4403 = vmatpush1.msra.mxu0 %v4359
  %4404 = vmatprep.subr.mxu0 0.0
  %4405 = vmatpush1.msra.mxu0 %v4360
  %4406 = vmatprep.subr.mxu0 0.0
  %4407 = vmatpush1.msra.mxu0 %v4361
  %4408 = vmatprep.subr.mxu0 0.0
  %4409 = vmatpush1.msra.mxu0 %v4362
  %4410 = vmatprep.subr.mxu0 0.0
  %4411 = vmatpush1.msra.mxu0 %v4363
  %4412 = vmatprep.subr.mxu0 0.0
  %4413 = vmatpush1.msra.mxu0 %v4364
  %4414 = vmatprep.subr.mxu0 0.0
  %4415 = vmatpush1.msra.mxu0 %v4365
  %4416 = vmatprep.subr.mxu0 0.0
  %4417 = vmatpush1.msra.mxu0 %v4366
  %4418 = vmatprep.subr.mxu0 0.0
  %4419 = vmatpush1.msra.mxu0 %v4367
  %4420 = vmatprep.subr.mxu0 0.0
  %4421 = vmatpush1.msra.mxu0 %v4368
  %4422 = vmatprep.subr.mxu0 0.0
  %4423 = vmatpush1.msra.mxu0 %v4369
  %4424 = vmatprep.subr.mxu0 0.0
  %4425 = vmatpush1.msra.mxu0 %v4370
  %4426 = vmatprep.subr.mxu0 0.0
  %4427 = vmatpush1.msra.mxu0 %v4371
  %4428 = vmatprep.subr.mxu0 0.0
  %4429 = vmatpush1.msra.mxu0 %v4372
  %4430 = vmatprep.subr.mxu0 0.0
  %4431 = vmatpush1.msra.mxu0 %v4373
  %4432 = vmatprep.subr.mxu0 0.0
  %4433 = vmatpush1.msra.mxu0 %v4374
  %4434 = vmatprep.subr.mxu0 0.0
  %4435 = vmatpush1.msra.mxu0 %v4375
  %4436 = vmatprep.subr.mxu0 0.0
  %4437 = vmatpush1.msra.mxu0 %v4376
  %4438 = vmatprep.subr.mxu0 0.0
  %4439 = vmatpush1.msra.mxu0 %v4377
  %4440 = vmatprep.subr.mxu0 0.0
  %4441 = vmatpush1.msra.mxu0 %v4378
  %4442 = vmatprep.subr.mxu0 0.0
  %4443 = vmatpush1.msra.mxu0 %v4379
  %4444 = vmatprep.mubr.f32.mxu0 1.0
  %4445 = vmatmul.mubr.f32.gmra.mrb[0].mxu0 1.0
  %v4446 = vpop.f32.mrb[0].mxu0
  %v4447 = vadd.f32 0.0, %v4446
  %v4448 = vpop.f32.mrb[0].mxu0
  %4449 = vdwg.mxu0
  %v4450 = vmul.f32 %v4447, 0.00390625
  %v4451 = vadd.f32 %v4450, 1e-05
  %v4452 = vrsqrt.pop %v4451
  %v4453 = vlaneseq
  %v4454 = vshrl.u32 %v4453, 7
  %v4455 = vsub.s32 0, %v4454
  %v4456 = vrot.slane %v4452, %v4455
  %v4457 = vmul.f32 %v4316, %v4456
  %v4458 = vmul.f32 %v4317, %v4456
  %v4459 = vmul.f32 %v4318, %v4456
  %v4460 = vmul.f32 %v4319, %v4456
  %v4461 = vmul.f32 %v4320, %v4456
  %v4462 = vmul.f32 %v4321, %v4456
  %v4463 = vmul.f32 %v4322, %v4456
  %v4464 = vmul.f32 %v4323, %v4456
  %v4465 = vmul.f32 %v4324, %v4456
  %v4466 = vmul.f32 %v4325, %v4456
  %v4467 = vmul.f32 %v4326, %v4456
  %v4468 = vmul.f32 %v4327, %v4456
  %v4469 = vmul.f32 %v4328, %v4456
  %v4470 = vmul.f32 %v4329, %v4456
  %v4471 = vmul.f32 %v4330, %v4456
  %v4472 = vmul.f32 %v4331, %v4456
  %v4473 = vmul.f32 %v4332, %v4456
  %v4474 = vmul.f32 %v4333, %v4456
  %v4475 = vmul.f32 %v4334, %v4456
  %v4476 = vmul.f32 %v4335, %v4456
  %v4477 = vmul.f32 %v4336, %v4456
  %v4478 = vmul.f32 %v4337, %v4456
  %v4479 = vmul.f32 %v4338, %v4456
  %v4480 = vmul.f32 %v4339, %v4456
  %v4481 = vmul.f32 %v4340, %v4456
  %v4482 = vmul.f32 %v4341, %v4456
  %v4483 = vmul.f32 %v4342, %v4456
  %v4484 = vmul.f32 %v4343, %v4456
  %v4485 = vmul.f32 %v4344, %v4456
  %v4486 = vmul.f32 %v4345, %v4456
  %v4487 = vmul.f32 %v4346, %v4456
  %v4488 = vmul.f32 %v4347, %v4456
  %v4489 = vlaneseq
  %v4490 = vshrl.u32 %v4489, 7
  %v4491 = vsub.s32 0, %v4490
  %v4492 = vrot.slane %v4240, %v4491
  %v4493 = vmul.f32 %v4457, %v4492
  %v4494 = vmul.f32 %v4458, %v4492
  %v4495 = vmul.f32 %v4459, %v4492
  %v4496 = vmul.f32 %v4460, %v4492
  %v4497 = vmul.f32 %v4461, %v4492
  %v4498 = vmul.f32 %v4462, %v4492
  %v4499 = vmul.f32 %v4463, %v4492
  %v4500 = vmul.f32 %v4464, %v4492
  %v4501 = vmul.f32 %v4465, %v4492
  %v4502 = vmul.f32 %v4466, %v4492
  %v4503 = vmul.f32 %v4467, %v4492
  %v4504 = vmul.f32 %v4468, %v4492
  %v4505 = vmul.f32 %v4469, %v4492
  %v4506 = vmul.f32 %v4470, %v4492
  %v4507 = vmul.f32 %v4471, %v4492
  %v4508 = vmul.f32 %v4472, %v4492
  %v4509 = vmul.f32 %v4473, %v4492
  %v4510 = vmul.f32 %v4474, %v4492
  %v4511 = vmul.f32 %v4475, %v4492
  %v4512 = vmul.f32 %v4476, %v4492
  %v4513 = vmul.f32 %v4477, %v4492
  %v4514 = vmul.f32 %v4478, %v4492
  %v4515 = vmul.f32 %v4479, %v4492
  %v4516 = vmul.f32 %v4480, %v4492
  %v4517 = vmul.f32 %v4481, %v4492
  %v4518 = vmul.f32 %v4482, %v4492
  %v4519 = vmul.f32 %v4483, %v4492
  %v4520 = vmul.f32 %v4484, %v4492
  %v4521 = vmul.f32 %v4485, %v4492
  %v4522 = vmul.f32 %v4486, %v4492
  %v4523 = vmul.f32 %v4487, %v4492
  %v4524 = vmul.f32 %v4488, %v4492
  %v4525 = vlaneseq
  %v4526 = vshrl.u32 %v4525, 7
  %v4527 = vsub.s32 1, %v4526
  %v4528 = vrot.slane %v4240, %v4527
  %v4529 = vadd.f32 %v4493, %v4528
  %v4530 = vadd.f32 %v4494, %v4528
  %v4531 = vadd.f32 %v4495, %v4528
  %v4532 = vadd.f32 %v4496, %v4528
  %v4533 = vadd.f32 %v4497, %v4528
  %v4534 = vadd.f32 %v4498, %v4528
  %v4535 = vadd.f32 %v4499, %v4528
  %v4536 = vadd.f32 %v4500, %v4528
  %v4537 = vadd.f32 %v4501, %v4528
  %v4538 = vadd.f32 %v4502, %v4528
  %v4539 = vadd.f32 %v4503, %v4528
  %v4540 = vadd.f32 %v4504, %v4528
  %v4541 = vadd.f32 %v4505, %v4528
  %v4542 = vadd.f32 %v4506, %v4528
  %v4543 = vadd.f32 %v4507, %v4528
  %v4544 = vadd.f32 %v4508, %v4528
  %v4545 = vadd.f32 %v4509, %v4528
  %v4546 = vadd.f32 %v4510, %v4528
  %v4547 = vadd.f32 %v4511, %v4528
  %v4548 = vadd.f32 %v4512, %v4528
  %v4549 = vadd.f32 %v4513, %v4528
  %v4550 = vadd.f32 %v4514, %v4528
  %v4551 = vadd.f32 %v4515, %v4528
  %v4552 = vadd.f32 %v4516, %v4528
  %v4553 = vadd.f32 %v4517, %v4528
  %v4554 = vadd.f32 %v4518, %v4528
  %v4555 = vadd.f32 %v4519, %v4528
  %v4556 = vadd.f32 %v4520, %v4528
  %v4557 = vadd.f32 %v4521, %v4528
  %v4558 = vadd.f32 %v4522, %v4528
  %v4559 = vadd.f32 %v4523, %v4528
  %v4560 = vadd.f32 %v4524, %v4528
  %v4561 = vmax.f32 %v4529, 0.0
  %v4562 = vmax.f32 %v4530, 0.0
  %v4563 = vmax.f32 %v4531, 0.0
  %v4564 = vmax.f32 %v4532, 0.0
  %v4565 = vmax.f32 %v4533, 0.0
  %v4566 = vmax.f32 %v4534, 0.0
  %v4567 = vmax.f32 %v4535, 0.0
  %v4568 = vmax.f32 %v4536, 0.0
  %v4569 = vmax.f32 %v4537, 0.0
  %v4570 = vmax.f32 %v4538, 0.0
  %v4571 = vmax.f32 %v4539, 0.0
  %v4572 = vmax.f32 %v4540, 0.0
  %v4573 = vmax.f32 %v4541, 0.0
  %v4574 = vmax.f32 %v4542, 0.0
  %v4575 = vmax.f32 %v4543, 0.0
  %v4576 = vmax.f32 %v4544, 0.0
  %v4577 = vmax.f32 %v4545, 0.0
  %v4578 = vmax.f32 %v4546, 0.0
  %v4579 = vmax.f32 %v4547, 0.0
  %v4580 = vmax.f32 %v4548, 0.0
  %v4581 = vmax.f32 %v4549, 0.0
  %v4582 = vmax.f32 %v4550, 0.0
  %v4583 = vmax.f32 %v4551, 0.0
  %v4584 = vmax.f32 %v4552, 0.0
  %v4585 = vmax.f32 %v4553, 0.0
  %v4586 = vmax.f32 %v4554, 0.0
  %v4587 = vmax.f32 %v4555, 0.0
  %v4588 = vmax.f32 %v4556, 0.0
  %v4589 = vmax.f32 %v4557, 0.0
  %v4590 = vmax.f32 %v4558, 0.0
  %v4591 = vmax.f32 %v4559, 0.0
  %v4592 = vmax.f32 %v4560, 0.0
  %v4593 = vld [vmem:[%s11] sm:$0x7]
  %v4594 = vlaneseq
  %v4595 = vshrl.u32 %v4594, 7
  %v4596 = vsub.s32 0, %v4595
  %v4597 = vrot.slane %v4593, %v4596
  %v4598 = vmul.f32 %v4561, %v4597
  %v4599 = vmul.f32 %v4562, %v4597
  %v4600 = vmul.f32 %v4563, %v4597
  %v4601 = vmul.f32 %v4564, %v4597
  %v4602 = vmul.f32 %v4565, %v4597
  %v4603 = vmul.f32 %v4566, %v4597
  %v4604 = vmul.f32 %v4567, %v4597
  %v4605 = vmul.f32 %v4568, %v4597
  %v4606 = vmul.f32 %v4569, %v4597
  %v4607 = vmul.f32 %v4570, %v4597
  %v4608 = vmul.f32 %v4571, %v4597
  %v4609 = vmul.f32 %v4572, %v4597
  %v4610 = vmul.f32 %v4573, %v4597
  %v4611 = vmul.f32 %v4574, %v4597
  %v4612 = vmul.f32 %v4575, %v4597
  %v4613 = vmul.f32 %v4576, %v4597
  %v4614 = vmul.f32 %v4577, %v4597
  %v4615 = vmul.f32 %v4578, %v4597
  %v4616 = vmul.f32 %v4579, %v4597
  %v4617 = vmul.f32 %v4580, %v4597
  %v4618 = vmul.f32 %v4581, %v4597
  %v4619 = vmul.f32 %v4582, %v4597
  %v4620 = vmul.f32 %v4583, %v4597
  %v4621 = vmul.f32 %v4584, %v4597
  %v4622 = vmul.f32 %v4585, %v4597
  %v4623 = vmul.f32 %v4586, %v4597
  %v4624 = vmul.f32 %v4587, %v4597
  %v4625 = vmul.f32 %v4588, %v4597
  %v4626 = vmul.f32 %v4589, %v4597
  %v4627 = vmul.f32 %v4590, %v4597
  %v4628 = vmul.f32 %v4591, %v4597
  %v4629 = vmul.f32 %v4592, %v4597
  %vm4630 = vcmask 261120
  %v4631 = vsel %vm4630, %v4598, 0.0
  %4632 = vadd.xlane.f32.xlu0 %v4631
  %v4633 = vpop.xlane.xlu0 %4632
  %v4634 = vsel %vm4630, %v4599, 0.0
  %4635 = vadd.xlane.f32.xlu0 %v4634
  %v4636 = vpop.xlane.xlu0 %4635
  %v4637 = vsel %vm4630, %v4600, 0.0
  %4638 = vadd.xlane.f32.xlu0 %v4637
  %v4639 = vpop.xlane.xlu0 %4638
  %v4640 = vsel %vm4630, %v4601, 0.0
  %4641 = vadd.xlane.f32.xlu0 %v4640
  %v4642 = vpop.xlane.xlu0 %4641
  %v4643 = vsel %vm4630, %v4602, 0.0
  %4644 = vadd.xlane.f32.xlu0 %v4643
  %v4645 = vpop.xlane.xlu0 %4644
  %v4646 = vsel %vm4630, %v4603, 0.0
  %4647 = vadd.xlane.f32.xlu0 %v4646
  %v4648 = vpop.xlane.xlu0 %4647
  %v4649 = vsel %vm4630, %v4604, 0.0
  %4650 = vadd.xlane.f32.xlu0 %v4649
  %v4651 = vpop.xlane.xlu0 %4650
  %v4652 = vsel %vm4630, %v4605, 0.0
  %4653 = vadd.xlane.f32.xlu0 %v4652
  %v4654 = vpop.xlane.xlu0 %4653
  %v4655 = vsel %vm4630, %v4606, 0.0
  %4656 = vadd.xlane.f32.xlu0 %v4655
  %v4657 = vpop.xlane.xlu0 %4656
  %v4658 = vsel %vm4630, %v4607, 0.0
  %4659 = vadd.xlane.f32.xlu0 %v4658
  %v4660 = vpop.xlane.xlu0 %4659
  %v4661 = vsel %vm4630, %v4608, 0.0
  %4662 = vadd.xlane.f32.xlu0 %v4661
  %v4663 = vpop.xlane.xlu0 %4662
  %v4664 = vsel %vm4630, %v4609, 0.0
  %4665 = vadd.xlane.f32.xlu0 %v4664
  %v4666 = vpop.xlane.xlu0 %4665
  %v4667 = vsel %vm4630, %v4610, 0.0
  %4668 = vadd.xlane.f32.xlu0 %v4667
  %v4669 = vpop.xlane.xlu0 %4668
  %v4670 = vsel %vm4630, %v4611, 0.0
  %4671 = vadd.xlane.f32.xlu0 %v4670
  %v4672 = vpop.xlane.xlu0 %4671
  %v4673 = vsel %vm4630, %v4612, 0.0
  %4674 = vadd.xlane.f32.xlu0 %v4673
  %v4675 = vpop.xlane.xlu0 %4674
  %v4676 = vsel %vm4630, %v4613, 0.0
  %4677 = vadd.xlane.f32.xlu0 %v4676
  %v4678 = vpop.xlane.xlu0 %4677
  %v4679 = vsel %vm4630, %v4614, 0.0
  %4680 = vadd.xlane.f32.xlu0 %v4679
  %v4681 = vpop.xlane.xlu0 %4680
  %v4682 = vsel %vm4630, %v4615, 0.0
  %4683 = vadd.xlane.f32.xlu0 %v4682
  %v4684 = vpop.xlane.xlu0 %4683
  %v4685 = vsel %vm4630, %v4616, 0.0
  %4686 = vadd.xlane.f32.xlu0 %v4685
  %v4687 = vpop.xlane.xlu0 %4686
  %v4688 = vsel %vm4630, %v4617, 0.0
  %4689 = vadd.xlane.f32.xlu0 %v4688
  %v4690 = vpop.xlane.xlu0 %4689
  %v4691 = vsel %vm4630, %v4618, 0.0
  %4692 = vadd.xlane.f32.xlu0 %v4691
  %v4693 = vpop.xlane.xlu0 %4692
  %v4694 = vsel %vm4630, %v4619, 0.0
  %4695 = vadd.xlane.f32.xlu0 %v4694
  %v4696 = vpop.xlane.xlu0 %4695
  %v4697 = vsel %vm4630, %v4620, 0.0
  %4698 = vadd.xlane.f32.xlu0 %v4697
  %v4699 = vpop.xlane.xlu0 %4698
  %v4700 = vsel %vm4630, %v4621, 0.0
  %4701 = vadd.xlane.f32.xlu0 %v4700
  %v4702 = vpop.xlane.xlu0 %4701
  %v4703 = vsel %vm4630, %v4622, 0.0
  %4704 = vadd.xlane.f32.xlu0 %v4703
  %v4705 = vpop.xlane.xlu0 %4704
  %v4706 = vsel %vm4630, %v4623, 0.0
  %4707 = vadd.xlane.f32.xlu0 %v4706
  %v4708 = vpop.xlane.xlu0 %4707
  %v4709 = vsel %vm4630, %v4624, 0.0
  %4710 = vadd.xlane.f32.xlu0 %v4709
  %v4711 = vpop.xlane.xlu0 %4710
  %v4712 = vsel %vm4630, %v4625, 0.0
  %4713 = vadd.xlane.f32.xlu0 %v4712
  %v4714 = vpop.xlane.xlu0 %4713
  %v4715 = vsel %vm4630, %v4626, 0.0
  %4716 = vadd.xlane.f32.xlu0 %v4715
  %v4717 = vpop.xlane.xlu0 %4716
  %v4718 = vsel %vm4630, %v4627, 0.0
  %4719 = vadd.xlane.f32.xlu0 %v4718
  %v4720 = vpop.xlane.xlu0 %4719
  %v4721 = vsel %vm4630, %v4628, 0.0
  %4722 = vadd.xlane.f32.xlu0 %v4721
  %v4723 = vpop.xlane.xlu0 %4722
  %v4724 = vsel %vm4630, %v4629, 0.0
  %4725 = vadd.xlane.f32.xlu0 %v4724
  %v4726 = vpop.xlane.xlu0 %4725
  %v4727 = vlaneseq
  %v4728 = vshrl.u32 %v4727, 7
  %v4729 = vsub.s32 2, %v4728
  %v4730 = vrot.slane %v4593, %v4729
  %v4731 = vadd.f32 %v4633, %v4730
  %v4732 = vadd.f32 %v4636, %v4730
  %v4733 = vadd.f32 %v4639, %v4730
  %v4734 = vadd.f32 %v4642, %v4730
  %v4735 = vadd.f32 %v4645, %v4730
  %v4736 = vadd.f32 %v4648, %v4730
  %v4737 = vadd.f32 %v4651, %v4730
  %v4738 = vadd.f32 %v4654, %v4730
  %v4739 = vadd.f32 %v4657, %v4730
  %v4740 = vadd.f32 %v4660, %v4730
  %v4741 = vadd.f32 %v4663, %v4730
  %v4742 = vadd.f32 %v4666, %v4730
  %v4743 = vadd.f32 %v4669, %v4730
  %v4744 = vadd.f32 %v4672, %v4730
  %v4745 = vadd.f32 %v4675, %v4730
  %v4746 = vadd.f32 %v4678, %v4730
  %v4747 = vadd.f32 %v4681, %v4730
  %v4748 = vadd.f32 %v4684, %v4730
  %v4749 = vadd.f32 %v4687, %v4730
  %v4750 = vadd.f32 %v4690, %v4730
  %v4751 = vadd.f32 %v4693, %v4730
  %v4752 = vadd.f32 %v4696, %v4730
  %v4753 = vadd.f32 %v4699, %v4730
  %v4754 = vadd.f32 %v4702, %v4730
  %v4755 = vadd.f32 %v4705, %v4730
  %v4756 = vadd.f32 %v4708, %v4730
  %v4757 = vadd.f32 %v4711, %v4730
  %v4758 = vadd.f32 %v4714, %v4730
  %v4759 = vadd.f32 %v4717, %v4730
  %v4760 = vadd.f32 %v4720, %v4730
  %v4761 = vadd.f32 %v4723, %v4730
  %v4762 = vadd.f32 %v4726, %v4730
  %v4763 = vld [vmem:[%s0] sm:$0xff]
  %v4764 = vld [vmem:[%s0 + $0x8] sm:$0xff]
  %v4765 = vld [vmem:[%s0 + $0x10] sm:$0xff]
  %v4766 = vld [vmem:[%s0 + $0x18] sm:$0xff]
  %v4767 = vld [vmem:[%s0 + $0x20] sm:$0xff]
  %v4768 = vld [vmem:[%s0 + $0x28] sm:$0xff]
  %v4769 = vld [vmem:[%s0 + $0x30] sm:$0xff]
  %v4770 = vld [vmem:[%s0 + $0x38] sm:$0xff]
  %v4771 = vld [vmem:[%s0 + $0x40] sm:$0xff]
  %v4772 = vld [vmem:[%s0 + $0x48] sm:$0xff]
  %v4773 = vld [vmem:[%s0 + $0x50] sm:$0xff]
  %v4774 = vld [vmem:[%s0 + $0x58] sm:$0xff]
  %v4775 = vld [vmem:[%s0 + $0x60] sm:$0xff]
  %v4776 = vld [vmem:[%s0 + $0x68] sm:$0xff]
  %v4777 = vld [vmem:[%s0 + $0x70] sm:$0xff]
  %v4778 = vld [vmem:[%s0 + $0x78] sm:$0xff]
  %v4779 = vld [vmem:[%s0 + $0x80] sm:$0xff]
  %v4780 = vld [vmem:[%s0 + $0x88] sm:$0xff]
  %v4781 = vld [vmem:[%s0 + $0x90] sm:$0xff]
  %v4782 = vld [vmem:[%s0 + $0x98] sm:$0xff]
  %v4783 = vld [vmem:[%s0 + $0xa0] sm:$0xff]
  %v4784 = vld [vmem:[%s0 + $0xa8] sm:$0xff]
  %v4785 = vld [vmem:[%s0 + $0xb0] sm:$0xff]
  %v4786 = vld [vmem:[%s0 + $0xb8] sm:$0xff]
  %v4787 = vld [vmem:[%s0 + $0xc0] sm:$0xff]
  %v4788 = vld [vmem:[%s0 + $0xc8] sm:$0xff]
  %v4789 = vld [vmem:[%s0 + $0xd0] sm:$0xff]
  %v4790 = vld [vmem:[%s0 + $0xd8] sm:$0xff]
  %v4791 = vld [vmem:[%s0 + $0xe0] sm:$0xff]
  %v4792 = vld [vmem:[%s0 + $0xe8] sm:$0xff]
  %v4793 = vld [vmem:[%s0 + $0xf0] sm:$0xff]
  %v4794 = vld [vmem:[%s0 + $0xf8] sm:$0xff]
  %v4795 = vlaneseq
  %v4796 = vshrl.u32 %v4795, 7
  %v4797 = vsub.s32 1, %v4796
  %v4798 = vrot.slane %v4593, %v4797
  %v4799 = vmul.f32 %v4763, %v4798
  %v4800 = vmul.f32 %v4764, %v4798
  %v4801 = vmul.f32 %v4765, %v4798
  %v4802 = vmul.f32 %v4766, %v4798
  %v4803 = vmul.f32 %v4767, %v4798
  %v4804 = vmul.f32 %v4768, %v4798
  %v4805 = vmul.f32 %v4769, %v4798
  %v4806 = vmul.f32 %v4770, %v4798
  %v4807 = vmul.f32 %v4771, %v4798
  %v4808 = vmul.f32 %v4772, %v4798
  %v4809 = vmul.f32 %v4773, %v4798
  %v4810 = vmul.f32 %v4774, %v4798
  %v4811 = vmul.f32 %v4775, %v4798
  %v4812 = vmul.f32 %v4776, %v4798
  %v4813 = vmul.f32 %v4777, %v4798
  %v4814 = vmul.f32 %v4778, %v4798
  %v4815 = vmul.f32 %v4779, %v4798
  %v4816 = vmul.f32 %v4780, %v4798
  %v4817 = vmul.f32 %v4781, %v4798
  %v4818 = vmul.f32 %v4782, %v4798
  %v4819 = vmul.f32 %v4783, %v4798
  %v4820 = vmul.f32 %v4784, %v4798
  %v4821 = vmul.f32 %v4785, %v4798
  %v4822 = vmul.f32 %v4786, %v4798
  %v4823 = vmul.f32 %v4787, %v4798
  %v4824 = vmul.f32 %v4788, %v4798
  %v4825 = vmul.f32 %v4789, %v4798
  %v4826 = vmul.f32 %v4790, %v4798
  %v4827 = vmul.f32 %v4791, %v4798
  %v4828 = vmul.f32 %v4792, %v4798
  %v4829 = vmul.f32 %v4793, %v4798
  %v4830 = vmul.f32 %v4794, %v4798
  %vm4831 = vcmask 97280
  %v4832 = vsel %vm4831, %v4799, 0.0
  %4833 = vadd.xlane.f32.xlu0 %v4832
  %v4834 = vpop.xlane.xlu0 %4833
  %v4835 = vsel %vm4831, %v4800, 0.0
  %4836 = vadd.xlane.f32.xlu0 %v4835
  %v4837 = vpop.xlane.xlu0 %4836
  %v4838 = vsel %vm4831, %v4801, 0.0
  %4839 = vadd.xlane.f32.xlu0 %v4838
  %v4840 = vpop.xlane.xlu0 %4839
  %v4841 = vsel %vm4831, %v4802, 0.0
  %4842 = vadd.xlane.f32.xlu0 %v4841
  %v4843 = vpop.xlane.xlu0 %4842
  %v4844 = vsel %vm4831, %v4803, 0.0
  %4845 = vadd.xlane.f32.xlu0 %v4844
  %v4846 = vpop.xlane.xlu0 %4845
  %v4847 = vsel %vm4831, %v4804, 0.0
  %4848 = vadd.xlane.f32.xlu0 %v4847
  %v4849 = vpop.xlane.xlu0 %4848
  %v4850 = vsel %vm4831, %v4805, 0.0
  %4851 = vadd.xlane.f32.xlu0 %v4850
  %v4852 = vpop.xlane.xlu0 %4851
  %v4853 = vsel %vm4831, %v4806, 0.0
  %4854 = vadd.xlane.f32.xlu0 %v4853
  %v4855 = vpop.xlane.xlu0 %4854
  %v4856 = vsel %vm4831, %v4807, 0.0
  %4857 = vadd.xlane.f32.xlu0 %v4856
  %v4858 = vpop.xlane.xlu0 %4857
  %v4859 = vsel %vm4831, %v4808, 0.0
  %4860 = vadd.xlane.f32.xlu0 %v4859
  %v4861 = vpop.xlane.xlu0 %4860
  %v4862 = vsel %vm4831, %v4809, 0.0
  %4863 = vadd.xlane.f32.xlu0 %v4862
  %v4864 = vpop.xlane.xlu0 %4863
  %v4865 = vsel %vm4831, %v4810, 0.0
  %4866 = vadd.xlane.f32.xlu0 %v4865
  %v4867 = vpop.xlane.xlu0 %4866
  %v4868 = vsel %vm4831, %v4811, 0.0
  %4869 = vadd.xlane.f32.xlu0 %v4868
  %v4870 = vpop.xlane.xlu0 %4869
  %v4871 = vsel %vm4831, %v4812, 0.0
  %4872 = vadd.xlane.f32.xlu0 %v4871
  %v4873 = vpop.xlane.xlu0 %4872
  %v4874 = vsel %vm4831, %v4813, 0.0
  %4875 = vadd.xlane.f32.xlu0 %v4874
  %v4876 = vpop.xlane.xlu0 %4875
  %v4877 = vsel %vm4831, %v4814, 0.0
  %4878 = vadd.xlane.f32.xlu0 %v4877
  %v4879 = vpop.xlane.xlu0 %4878
  %v4880 = vsel %vm4831, %v4815, 0.0
  %4881 = vadd.xlane.f32.xlu0 %v4880
  %v4882 = vpop.xlane.xlu0 %4881
  %v4883 = vsel %vm4831, %v4816, 0.0
  %4884 = vadd.xlane.f32.xlu0 %v4883
  %v4885 = vpop.xlane.xlu0 %4884
  %v4886 = vsel %vm4831, %v4817, 0.0
  %4887 = vadd.xlane.f32.xlu0 %v4886
  %v4888 = vpop.xlane.xlu0 %4887
  %v4889 = vsel %vm4831, %v4818, 0.0
  %4890 = vadd.xlane.f32.xlu0 %v4889
  %v4891 = vpop.xlane.xlu0 %4890
  %v4892 = vsel %vm4831, %v4819, 0.0
  %4893 = vadd.xlane.f32.xlu0 %v4892
  %v4894 = vpop.xlane.xlu0 %4893
  %v4895 = vsel %vm4831, %v4820, 0.0
  %4896 = vadd.xlane.f32.xlu0 %v4895
  %v4897 = vpop.xlane.xlu0 %4896
  %v4898 = vsel %vm4831, %v4821, 0.0
  %4899 = vadd.xlane.f32.xlu0 %v4898
  %v4900 = vpop.xlane.xlu0 %4899
  %v4901 = vsel %vm4831, %v4822, 0.0
  %4902 = vadd.xlane.f32.xlu0 %v4901
  %v4903 = vpop.xlane.xlu0 %4902
  %v4904 = vsel %vm4831, %v4823, 0.0
  %4905 = vadd.xlane.f32.xlu0 %v4904
  %v4906 = vpop.xlane.xlu0 %4905
  %v4907 = vsel %vm4831, %v4824, 0.0
  %4908 = vadd.xlane.f32.xlu0 %v4907
  %v4909 = vpop.xlane.xlu0 %4908
  %v4910 = vsel %vm4831, %v4825, 0.0
  %4911 = vadd.xlane.f32.xlu0 %v4910
  %v4912 = vpop.xlane.xlu0 %4911
  %v4913 = vsel %vm4831, %v4826, 0.0
  %4914 = vadd.xlane.f32.xlu0 %v4913
  %v4915 = vpop.xlane.xlu0 %4914
  %v4916 = vsel %vm4831, %v4827, 0.0
  %4917 = vadd.xlane.f32.xlu0 %v4916
  %v4918 = vpop.xlane.xlu0 %4917
  %v4919 = vsel %vm4831, %v4828, 0.0
  %4920 = vadd.xlane.f32.xlu0 %v4919
  %v4921 = vpop.xlane.xlu0 %4920
  %v4922 = vsel %vm4831, %v4829, 0.0
  %4923 = vadd.xlane.f32.xlu0 %v4922
  %v4924 = vpop.xlane.xlu0 %4923
  %v4925 = vsel %vm4831, %v4830, 0.0
  %4926 = vadd.xlane.f32.xlu0 %v4925
  %v4927 = vpop.xlane.xlu0 %4926
  %v4928 = vadd.f32 %v4834, %v4730
  %v4929 = vadd.f32 %v4837, %v4730
  %v4930 = vadd.f32 %v4840, %v4730
  %v4931 = vadd.f32 %v4843, %v4730
  %v4932 = vadd.f32 %v4846, %v4730
  %v4933 = vadd.f32 %v4849, %v4730
  %v4934 = vadd.f32 %v4852, %v4730
  %v4935 = vadd.f32 %v4855, %v4730
  %v4936 = vadd.f32 %v4858, %v4730
  %v4937 = vadd.f32 %v4861, %v4730
  %v4938 = vadd.f32 %v4864, %v4730
  %v4939 = vadd.f32 %v4867, %v4730
  %v4940 = vadd.f32 %v4870, %v4730
  %v4941 = vadd.f32 %v4873, %v4730
  %v4942 = vadd.f32 %v4876, %v4730
  %v4943 = vadd.f32 %v4879, %v4730
  %v4944 = vadd.f32 %v4882, %v4730
  %v4945 = vadd.f32 %v4885, %v4730
  %v4946 = vadd.f32 %v4888, %v4730
  %v4947 = vadd.f32 %v4891, %v4730
  %v4948 = vadd.f32 %v4894, %v4730
  %v4949 = vadd.f32 %v4897, %v4730
  %v4950 = vadd.f32 %v4900, %v4730
  %v4951 = vadd.f32 %v4903, %v4730
  %v4952 = vadd.f32 %v4906, %v4730
  %v4953 = vadd.f32 %v4909, %v4730
  %v4954 = vadd.f32 %v4912, %v4730
  %v4955 = vadd.f32 %v4915, %v4730
  %v4956 = vadd.f32 %v4918, %v4730
  %v4957 = vadd.f32 %v4921, %v4730
  %v4958 = vadd.f32 %v4924, %v4730
  %v4959 = vadd.f32 %v4927, %v4730
  %v4960 = vxor.u32 %v4928, 2147483648
  %v4961 = vxor.u32 %v4929, 2147483648
  %v4962 = vxor.u32 %v4930, 2147483648
  %v4963 = vxor.u32 %v4931, 2147483648
  %v4964 = vxor.u32 %v4932, 2147483648
  %v4965 = vxor.u32 %v4933, 2147483648
  %v4966 = vxor.u32 %v4934, 2147483648
  %v4967 = vxor.u32 %v4935, 2147483648
  %v4968 = vxor.u32 %v4936, 2147483648
  %v4969 = vxor.u32 %v4937, 2147483648
  %v4970 = vxor.u32 %v4938, 2147483648
  %v4971 = vxor.u32 %v4939, 2147483648
  %v4972 = vxor.u32 %v4940, 2147483648
  %v4973 = vxor.u32 %v4941, 2147483648
  %v4974 = vxor.u32 %v4942, 2147483648
  %v4975 = vxor.u32 %v4943, 2147483648
  %v4976 = vxor.u32 %v4944, 2147483648
  %v4977 = vxor.u32 %v4945, 2147483648
  %v4978 = vxor.u32 %v4946, 2147483648
  %v4979 = vxor.u32 %v4947, 2147483648
  %v4980 = vxor.u32 %v4948, 2147483648
  %v4981 = vxor.u32 %v4949, 2147483648
  %v4982 = vxor.u32 %v4950, 2147483648
  %v4983 = vxor.u32 %v4951, 2147483648
  %v4984 = vxor.u32 %v4952, 2147483648
  %v4985 = vxor.u32 %v4953, 2147483648
  %v4986 = vxor.u32 %v4954, 2147483648
  %v4987 = vxor.u32 %v4955, 2147483648
  %v4988 = vxor.u32 %v4956, 2147483648
  %v4989 = vxor.u32 %v4957, 2147483648
  %v4990 = vxor.u32 %v4958, 2147483648
  %v4991 = vxor.u32 %v4959, 2147483648
  %v4992 = vmul.f32 %v4960, 1.442695
  %v4993 = vpow.pop %v4992
  %v4994 = vmul.f32 %v4961, 1.442695
  %v4995 = vpow.pop %v4994
  %v4996 = vmul.f32 %v4962, 1.442695
  %v4997 = vpow.pop %v4996
  %v4998 = vmul.f32 %v4963, 1.442695
  %v4999 = vpow.pop %v4998
  %v5000 = vmul.f32 %v4964, 1.442695
  %v5001 = vpow.pop %v5000
  %v5002 = vmul.f32 %v4965, 1.442695
  %v5003 = vpow.pop %v5002
  %v5004 = vmul.f32 %v4966, 1.442695
  %v5005 = vpow.pop %v5004
  %v5006 = vmul.f32 %v4967, 1.442695
  %v5007 = vpow.pop %v5006
  %v5008 = vmul.f32 %v4968, 1.442695
  %v5009 = vpow.pop %v5008
  %v5010 = vmul.f32 %v4969, 1.442695
  %v5011 = vpow.pop %v5010
  %v5012 = vmul.f32 %v4970, 1.442695
  %v5013 = vpow.pop %v5012
  %v5014 = vmul.f32 %v4971, 1.442695
  %v5015 = vpow.pop %v5014
  %v5016 = vmul.f32 %v4972, 1.442695
  %v5017 = vpow.pop %v5016
  %v5018 = vmul.f32 %v4973, 1.442695
  %v5019 = vpow.pop %v5018
  %v5020 = vmul.f32 %v4974, 1.442695
  %v5021 = vpow.pop %v5020
  %v5022 = vmul.f32 %v4975, 1.442695
  %v5023 = vpow.pop %v5022
  %v5024 = vmul.f32 %v4976, 1.442695
  %v5025 = vpow.pop %v5024
  %v5026 = vmul.f32 %v4977, 1.442695
  %v5027 = vpow.pop %v5026
  %v5028 = vmul.f32 %v4978, 1.442695
  %v5029 = vpow.pop %v5028
  %v5030 = vmul.f32 %v4979, 1.442695
  %v5031 = vpow.pop %v5030
  %v5032 = vmul.f32 %v4980, 1.442695
  %v5033 = vpow.pop %v5032
  %v5034 = vmul.f32 %v4981, 1.442695
  %v5035 = vpow.pop %v5034
  %v5036 = vmul.f32 %v4982, 1.442695
  %v5037 = vpow.pop %v5036
  %v5038 = vmul.f32 %v4983, 1.442695
  %v5039 = vpow.pop %v5038
  %v5040 = vmul.f32 %v4984, 1.442695
  %v5041 = vpow.pop %v5040
  %v5042 = vmul.f32 %v4985, 1.442695
  %v5043 = vpow.pop %v5042
  %v5044 = vmul.f32 %v4986, 1.442695
  %v5045 = vpow.pop %v5044
  %v5046 = vmul.f32 %v4987, 1.442695
  %v5047 = vpow.pop %v5046
  %v5048 = vmul.f32 %v4988, 1.442695
  %v5049 = vpow.pop %v5048
  %v5050 = vmul.f32 %v4989, 1.442695
  %v5051 = vpow.pop %v5050
  %v5052 = vmul.f32 %v4990, 1.442695
  %v5053 = vpow.pop %v5052
  %v5054 = vmul.f32 %v4991, 1.442695
  %v5055 = vpow.pop %v5054
  %v5056 = vadd.f32 %v4993, 1.0
  %v5057 = vadd.f32 %v4995, 1.0
  %v5058 = vadd.f32 %v4997, 1.0
  %v5059 = vadd.f32 %v4999, 1.0
  %v5060 = vadd.f32 %v5001, 1.0
  %v5061 = vadd.f32 %v5003, 1.0
  %v5062 = vadd.f32 %v5005, 1.0
  %v5063 = vadd.f32 %v5007, 1.0
  %v5064 = vadd.f32 %v5009, 1.0
  %v5065 = vadd.f32 %v5011, 1.0
  %v5066 = vadd.f32 %v5013, 1.0
  %v5067 = vadd.f32 %v5015, 1.0
  %v5068 = vadd.f32 %v5017, 1.0
  %v5069 = vadd.f32 %v5019, 1.0
  %v5070 = vadd.f32 %v5021, 1.0
  %v5071 = vadd.f32 %v5023, 1.0
  %v5072 = vadd.f32 %v5025, 1.0
  %v5073 = vadd.f32 %v5027, 1.0
  %v5074 = vadd.f32 %v5029, 1.0
  %v5075 = vadd.f32 %v5031, 1.0
  %v5076 = vadd.f32 %v5033, 1.0
  %v5077 = vadd.f32 %v5035, 1.0
  %v5078 = vadd.f32 %v5037, 1.0
  %v5079 = vadd.f32 %v5039, 1.0
  %v5080 = vadd.f32 %v5041, 1.0
  %v5081 = vadd.f32 %v5043, 1.0
  %v5082 = vadd.f32 %v5045, 1.0
  %v5083 = vadd.f32 %v5047, 1.0
  %v5084 = vadd.f32 %v5049, 1.0
  %v5085 = vadd.f32 %v5051, 1.0
  %v5086 = vadd.f32 %v5053, 1.0
  %v5087 = vadd.f32 %v5055, 1.0
  %v5088 = vrcp.pop %v5056
  %v5089 = vmul.f32 1.0, %v5088
  %v5090 = vrcp.pop %v5057
  %v5091 = vmul.f32 1.0, %v5090
  %v5092 = vrcp.pop %v5058
  %v5093 = vmul.f32 1.0, %v5092
  %v5094 = vrcp.pop %v5059
  %v5095 = vmul.f32 1.0, %v5094
  %v5096 = vrcp.pop %v5060
  %v5097 = vmul.f32 1.0, %v5096
  %v5098 = vrcp.pop %v5061
  %v5099 = vmul.f32 1.0, %v5098
  %v5100 = vrcp.pop %v5062
  %v5101 = vmul.f32 1.0, %v5100
  %v5102 = vrcp.pop %v5063
  %v5103 = vmul.f32 1.0, %v5102
  %v5104 = vrcp.pop %v5064
  %v5105 = vmul.f32 1.0, %v5104
  %v5106 = vrcp.pop %v5065
  %v5107 = vmul.f32 1.0, %v5106
  %v5108 = vrcp.pop %v5066
  %v5109 = vmul.f32 1.0, %v5108
  %v5110 = vrcp.pop %v5067
  %v5111 = vmul.f32 1.0, %v5110
  %v5112 = vrcp.pop %v5068
  %v5113 = vmul.f32 1.0, %v5112
  %v5114 = vrcp.pop %v5069
  %v5115 = vmul.f32 1.0, %v5114
  %v5116 = vrcp.pop %v5070
  %v5117 = vmul.f32 1.0, %v5116
  %v5118 = vrcp.pop %v5071
  %v5119 = vmul.f32 1.0, %v5118
  %v5120 = vrcp.pop %v5072
  %v5121 = vmul.f32 1.0, %v5120
  %v5122 = vrcp.pop %v5073
  %v5123 = vmul.f32 1.0, %v5122
  %v5124 = vrcp.pop %v5074
  %v5125 = vmul.f32 1.0, %v5124
  %v5126 = vrcp.pop %v5075
  %v5127 = vmul.f32 1.0, %v5126
  %v5128 = vrcp.pop %v5076
  %v5129 = vmul.f32 1.0, %v5128
  %v5130 = vrcp.pop %v5077
  %v5131 = vmul.f32 1.0, %v5130
  %v5132 = vrcp.pop %v5078
  %v5133 = vmul.f32 1.0, %v5132
  %v5134 = vrcp.pop %v5079
  %v5135 = vmul.f32 1.0, %v5134
  %v5136 = vrcp.pop %v5080
  %v5137 = vmul.f32 1.0, %v5136
  %v5138 = vrcp.pop %v5081
  %v5139 = vmul.f32 1.0, %v5138
  %v5140 = vrcp.pop %v5082
  %v5141 = vmul.f32 1.0, %v5140
  %v5142 = vrcp.pop %v5083
  %v5143 = vmul.f32 1.0, %v5142
  %v5144 = vrcp.pop %v5084
  %v5145 = vmul.f32 1.0, %v5144
  %v5146 = vrcp.pop %v5085
  %v5147 = vmul.f32 1.0, %v5146
  %v5148 = vrcp.pop %v5086
  %v5149 = vmul.f32 1.0, %v5148
  %v5150 = vrcp.pop %v5087
  %v5151 = vmul.f32 1.0, %v5150
  %5153 = vrot.lane.b32.xlu0 %v4730, 126
  %v5154 = vpop.permute.xlu0 %5153
  %v5156 = vmul.f32 %v4731, %v5154
  %v5157 = vmul.f32 %v4732, %v5154
  %v5158 = vmul.f32 %v4733, %v5154
  %v5159 = vmul.f32 %v4734, %v5154
  %v5160 = vmul.f32 %v4735, %v5154
  %v5161 = vmul.f32 %v4736, %v5154
  %v5162 = vmul.f32 %v4737, %v5154
  %v5163 = vmul.f32 %v4738, %v5154
  %v5164 = vmul.f32 %v4739, %v5154
  %v5165 = vmul.f32 %v4740, %v5154
  %v5166 = vmul.f32 %v4741, %v5154
  %v5167 = vmul.f32 %v4742, %v5154
  %v5168 = vmul.f32 %v4743, %v5154
  %v5169 = vmul.f32 %v4744, %v5154
  %v5170 = vmul.f32 %v4745, %v5154
  %v5171 = vmul.f32 %v4746, %v5154
  %v5172 = vmul.f32 %v4747, %v5154
  %v5173 = vmul.f32 %v4748, %v5154
  %v5174 = vmul.f32 %v4749, %v5154
  %v5175 = vmul.f32 %v4750, %v5154
  %v5176 = vmul.f32 %v4751, %v5154
  %v5177 = vmul.f32 %v4752, %v5154
  %v5178 = vmul.f32 %v4753, %v5154
  %v5179 = vmul.f32 %v4754, %v5154
  %v5180 = vmul.f32 %v4755, %v5154
  %v5181 = vmul.f32 %v4756, %v5154
  %v5182 = vmul.f32 %v4757, %v5154
  %v5183 = vmul.f32 %v4758, %v5154
  %v5184 = vmul.f32 %v4759, %v5154
  %v5185 = vmul.f32 %v4760, %v5154
  %v5186 = vmul.f32 %v4761, %v5154
  %v5187 = vmul.f32 %v4762, %v5154
  %v5188 = vmul.f32 %v5089, %v5154
  %v5189 = vmul.f32 %v5091, %v5154
  %v5190 = vmul.f32 %v5093, %v5154
  %v5191 = vmul.f32 %v5095, %v5154
  %v5192 = vmul.f32 %v5097, %v5154
  %v5193 = vmul.f32 %v5099, %v5154
  %v5194 = vmul.f32 %v5101, %v5154
  %v5195 = vmul.f32 %v5103, %v5154
  %v5196 = vmul.f32 %v5105, %v5154
  %v5197 = vmul.f32 %v5107, %v5154
  %v5198 = vmul.f32 %v5109, %v5154
  %v5199 = vmul.f32 %v5111, %v5154
  %v5200 = vmul.f32 %v5113, %v5154
  %v5201 = vmul.f32 %v5115, %v5154
  %v5202 = vmul.f32 %v5117, %v5154
  %v5203 = vmul.f32 %v5119, %v5154
  %v5204 = vmul.f32 %v5121, %v5154
  %v5205 = vmul.f32 %v5123, %v5154
  %v5206 = vmul.f32 %v5125, %v5154
  %v5207 = vmul.f32 %v5127, %v5154
  %v5208 = vmul.f32 %v5129, %v5154
  %v5209 = vmul.f32 %v5131, %v5154
  %v5210 = vmul.f32 %v5133, %v5154
  %v5211 = vmul.f32 %v5135, %v5154
  %v5212 = vmul.f32 %v5137, %v5154
  %v5213 = vmul.f32 %v5139, %v5154
  %v5214 = vmul.f32 %v5141, %v5154
  %v5215 = vmul.f32 %v5143, %v5154
  %v5216 = vmul.f32 %v5145, %v5154
  %v5217 = vmul.f32 %v5147, %v5154
  %v5218 = vmul.f32 %v5149, %v5154
  %v5219 = vmul.f32 %v5151, %v5154
  %5252 = vrot.lane.b32.xlu0 %v5188, 127
  %v5253 = vpop.permute.xlu0 %5252
  %5254 = vrot.lane.b32.xlu0 %v5189, 127
  %v5255 = vpop.permute.xlu0 %5254
  %5256 = vrot.lane.b32.xlu0 %v5190, 127
  %v5257 = vpop.permute.xlu0 %5256
  %5258 = vrot.lane.b32.xlu0 %v5191, 127
  %v5259 = vpop.permute.xlu0 %5258
  %5260 = vrot.lane.b32.xlu0 %v5192, 127
  %v5261 = vpop.permute.xlu0 %5260
  %5262 = vrot.lane.b32.xlu0 %v5193, 127
  %v5263 = vpop.permute.xlu0 %5262
  %5264 = vrot.lane.b32.xlu0 %v5194, 127
  %v5265 = vpop.permute.xlu0 %5264
  %5266 = vrot.lane.b32.xlu0 %v5195, 127
  %v5267 = vpop.permute.xlu0 %5266
  %5268 = vrot.lane.b32.xlu0 %v5196, 127
  %v5269 = vpop.permute.xlu0 %5268
  %5270 = vrot.lane.b32.xlu0 %v5197, 127
  %v5271 = vpop.permute.xlu0 %5270
  %5272 = vrot.lane.b32.xlu0 %v5198, 127
  %v5273 = vpop.permute.xlu0 %5272
  %5274 = vrot.lane.b32.xlu0 %v5199, 127
  %v5275 = vpop.permute.xlu0 %5274
  %5276 = vrot.lane.b32.xlu0 %v5200, 127
  %v5277 = vpop.permute.xlu0 %5276
  %5278 = vrot.lane.b32.xlu0 %v5201, 127
  %v5279 = vpop.permute.xlu0 %5278
  %5280 = vrot.lane.b32.xlu0 %v5202, 127
  %v5281 = vpop.permute.xlu0 %5280
  %5282 = vrot.lane.b32.xlu0 %v5203, 127
  %v5283 = vpop.permute.xlu0 %5282
  %5284 = vrot.lane.b32.xlu0 %v5204, 127
  %v5285 = vpop.permute.xlu0 %5284
  %5286 = vrot.lane.b32.xlu0 %v5205, 127
  %v5287 = vpop.permute.xlu0 %5286
  %5288 = vrot.lane.b32.xlu0 %v5206, 127
  %v5289 = vpop.permute.xlu0 %5288
  %5290 = vrot.lane.b32.xlu0 %v5207, 127
  %v5291 = vpop.permute.xlu0 %5290
  %5292 = vrot.lane.b32.xlu0 %v5208, 127
  %v5293 = vpop.permute.xlu0 %5292
  %5294 = vrot.lane.b32.xlu0 %v5209, 127
  %v5295 = vpop.permute.xlu0 %5294
  %5296 = vrot.lane.b32.xlu0 %v5210, 127
  %v5297 = vpop.permute.xlu0 %5296
  %5298 = vrot.lane.b32.xlu0 %v5211, 127
  %v5299 = vpop.permute.xlu0 %5298
  %5300 = vrot.lane.b32.xlu0 %v5212, 127
  %v5301 = vpop.permute.xlu0 %5300
  %5302 = vrot.lane.b32.xlu0 %v5213, 127
  %v5303 = vpop.permute.xlu0 %5302
  %5304 = vrot.lane.b32.xlu0 %v5214, 127
  %v5305 = vpop.permute.xlu0 %5304
  %5306 = vrot.lane.b32.xlu0 %v5215, 127
  %v5307 = vpop.permute.xlu0 %5306
  %5308 = vrot.lane.b32.xlu0 %v5216, 127
  %v5309 = vpop.permute.xlu0 %5308
  %5310 = vrot.lane.b32.xlu0 %v5217, 127
  %v5311 = vpop.permute.xlu0 %5310
  %5312 = vrot.lane.b32.xlu0 %v5218, 127
  %v5313 = vpop.permute.xlu0 %5312
  %5314 = vrot.lane.b32.xlu0 %v5219, 127
  %v5315 = vpop.permute.xlu0 %5314
  %v5348 = vadd.f32 %v5156, %v5253
  %v5349 = vadd.f32 %v5157, %v5255
  %v5350 = vadd.f32 %v5158, %v5257
  %v5351 = vadd.f32 %v5159, %v5259
  %v5352 = vadd.f32 %v5160, %v5261
  %v5353 = vadd.f32 %v5161, %v5263
  %v5354 = vadd.f32 %v5162, %v5265
  %v5355 = vadd.f32 %v5163, %v5267
  %v5356 = vadd.f32 %v5164, %v5269
  %v5357 = vadd.f32 %v5165, %v5271
  %v5358 = vadd.f32 %v5166, %v5273
  %v5359 = vadd.f32 %v5167, %v5275
  %v5360 = vadd.f32 %v5168, %v5277
  %v5361 = vadd.f32 %v5169, %v5279
  %v5362 = vadd.f32 %v5170, %v5281
  %v5363 = vadd.f32 %v5171, %v5283
  %v5364 = vadd.f32 %v5172, %v5285
  %v5365 = vadd.f32 %v5173, %v5287
  %v5366 = vadd.f32 %v5174, %v5289
  %v5367 = vadd.f32 %v5175, %v5291
  %v5368 = vadd.f32 %v5176, %v5293
  %v5369 = vadd.f32 %v5177, %v5295
  %v5370 = vadd.f32 %v5178, %v5297
  %v5371 = vadd.f32 %v5179, %v5299
  %v5372 = vadd.f32 %v5180, %v5301
  %v5373 = vadd.f32 %v5181, %v5303
  %v5374 = vadd.f32 %v5182, %v5305
  %v5375 = vadd.f32 %v5183, %v5307
  %v5376 = vadd.f32 %v5184, %v5309
  %v5377 = vadd.f32 %v5185, %v5311
  %v5378 = vadd.f32 %v5186, %v5313
  %v5379 = vadd.f32 %v5187, %v5315
  %5380 = vrot.lane.b32.xlu0 %v4730, 124
  %v5381 = vpop.permute.xlu0 %5380
  %v5383 = vadd.f32 %v5348, %v5381
  %v5384 = vadd.f32 %v5349, %v5381
  %v5385 = vadd.f32 %v5350, %v5381
  %v5386 = vadd.f32 %v5351, %v5381
  %v5387 = vadd.f32 %v5352, %v5381
  %v5388 = vadd.f32 %v5353, %v5381
  %v5389 = vadd.f32 %v5354, %v5381
  %v5390 = vadd.f32 %v5355, %v5381
  %v5391 = vadd.f32 %v5356, %v5381
  %v5392 = vadd.f32 %v5357, %v5381
  %v5393 = vadd.f32 %v5358, %v5381
  %v5394 = vadd.f32 %v5359, %v5381
  %v5395 = vadd.f32 %v5360, %v5381
  %v5396 = vadd.f32 %v5361, %v5381
  %v5397 = vadd.f32 %v5362, %v5381
  %v5398 = vadd.f32 %v5363, %v5381
  %v5399 = vadd.f32 %v5364, %v5381
  %v5400 = vadd.f32 %v5365, %v5381
  %v5401 = vadd.f32 %v5366, %v5381
  %v5402 = vadd.f32 %v5367, %v5381
  %v5403 = vadd.f32 %v5368, %v5381
  %v5404 = vadd.f32 %v5369, %v5381
  %v5405 = vadd.f32 %v5370, %v5381
  %v5406 = vadd.f32 %v5371, %v5381
  %v5407 = vadd.f32 %v5372, %v5381
  %v5408 = vadd.f32 %v5373, %v5381
  %v5409 = vadd.f32 %v5374, %v5381
  %v5410 = vadd.f32 %v5375, %v5381
  %v5411 = vadd.f32 %v5376, %v5381
  %v5412 = vadd.f32 %v5377, %v5381
  %v5413 = vadd.f32 %v5378, %v5381
  %v5414 = vadd.f32 %v5379, %v5381
  %vm5415 = vcmask 7168
  %5416 = vst.msk [vmem:[%s12] sm:$0xff] %vm5415, %v5383
  %5417 = vst.msk [vmem:[%s12 + $0x8] sm:$0xff] %vm5415, %v5384
  %5418 = vst.msk [vmem:[%s12 + $0x10] sm:$0xff] %vm5415, %v5385
  %5419 = vst.msk [vmem:[%s12 + $0x18] sm:$0xff] %vm5415, %v5386
  %5420 = vst.msk [vmem:[%s12 + $0x20] sm:$0xff] %vm5415, %v5387
  %5421 = vst.msk [vmem:[%s12 + $0x28] sm:$0xff] %vm5415, %v5388
  %5422 = vst.msk [vmem:[%s12 + $0x30] sm:$0xff] %vm5415, %v5389
  %5423 = vst.msk [vmem:[%s12 + $0x38] sm:$0xff] %vm5415, %v5390
  %5424 = vst.msk [vmem:[%s12 + $0x40] sm:$0xff] %vm5415, %v5391
  %5425 = vst.msk [vmem:[%s12 + $0x48] sm:$0xff] %vm5415, %v5392
  %5426 = vst.msk [vmem:[%s12 + $0x50] sm:$0xff] %vm5415, %v5393
  %5427 = vst.msk [vmem:[%s12 + $0x58] sm:$0xff] %vm5415, %v5394
  %5428 = vst.msk [vmem:[%s12 + $0x60] sm:$0xff] %vm5415, %v5395
  %5429 = vst.msk [vmem:[%s12 + $0x68] sm:$0xff] %vm5415, %v5396
  %5430 = vst.msk [vmem:[%s12 + $0x70] sm:$0xff] %vm5415, %v5397
  %5431 = vst.msk [vmem:[%s12 + $0x78] sm:$0xff] %vm5415, %v5398
  %5432 = vst.msk [vmem:[%s12 + $0x80] sm:$0xff] %vm5415, %v5399
  %5433 = vst.msk [vmem:[%s12 + $0x88] sm:$0xff] %vm5415, %v5400
  %5434 = vst.msk [vmem:[%s12 + $0x90] sm:$0xff] %vm5415, %v5401
  %5435 = vst.msk [vmem:[%s12 + $0x98] sm:$0xff] %vm5415, %v5402
  %5436 = vst.msk [vmem:[%s12 + $0xa0] sm:$0xff] %vm5415, %v5403
  %5437 = vst.msk [vmem:[%s12 + $0xa8] sm:$0xff] %vm5415, %v5404
  %5438 = vst.msk [vmem:[%s12 + $0xb0] sm:$0xff] %vm5415, %v5405
  %5439 = vst.msk [vmem:[%s12 + $0xb8] sm:$0xff] %vm5415, %v5406
  %5440 = vst.msk [vmem:[%s12 + $0xc0] sm:$0xff] %vm5415, %v5407
  %5441 = vst.msk [vmem:[%s12 + $0xc8] sm:$0xff] %vm5415, %v5408
  %5442 = vst.msk [vmem:[%s12 + $0xd0] sm:$0xff] %vm5415, %v5409
  %5443 = vst.msk [vmem:[%s12 + $0xd8] sm:$0xff] %vm5415, %v5410
  %5444 = vst.msk [vmem:[%s12 + $0xe0] sm:$0xff] %vm5415, %v5411
  %5445 = vst.msk [vmem:[%s12 + $0xe8] sm:$0xff] %vm5415, %v5412
  %5446 = vst.msk [vmem:[%s12 + $0xf0] sm:$0xff] %vm5415, %v5413
  %5447 = vst.msk [vmem:[%s12 + $0xf8] sm:$0xff] %vm5415, %v5414
  // Predicated region
  $region50: #{tpu_custom_call.1} parent=0 // pred_check
    _
  $region51: #{tpu_custom_call.1} parent=0 // pred_check_branch
    %5449 = sbr.rel (0) target = $region53
  $region52: #{tpu_custom_call.1} parent=0 // pred_region
    _
  $region53: #{tpu_custom_call.1} parent=0 // pred_fallthru
    _
  // Predicated region
  $region54: #{tpu_custom_call.1} parent=0 // pred_check
    _
  $region55: #{tpu_custom_call.1} parent=0 // pred_check_branch
    %5451 = sbr.rel (0) target = $region57
  $region56: #{tpu_custom_call.1} parent=0 // pred_region
    _
  $region57: #{tpu_custom_call.1} parent=0 // pred_fallthru
    _

</llo_original>
